<compile_context>
chip_gen: v7x
topology: tpu7x:2x2x1
jax: 0.10.0
libtpu: 0.0.40
codegen_flags: <defaults>
</compile_context>

<pallas_src>
import math

import jax
import jax.numpy as jnp
from jax import lax
from jax.experimental import pallas as pl
from jax.experimental.pallas import tpu as pltpu


# ----------------------------------------------------------------------------
# Fused decoder kernel factory.
# Ref layout (inputs..., outputs...):
#   x        : (T*B, D_in)   time-major rows (row = t*B + b)
#   h0, c0   : (L, B, H)
#   enc      : (B, S, H)
#   per layer: wih (D_in_l, 4H), whh (H, 4H), b (1, 4H)   gate order i, f, g, o
#   wa       : (H, H)        bilinear attention matrix
#   w1a, w1b : (H, H)        linear rows multiplying context / hidden
#   b1       : (1, H)
#   w2       : (H, O), b2 : (1, O)
#   out      : (B, L, O)
#   hT, cT   : (L, B, H)
# ----------------------------------------------------------------------------
def _make_fused_decoder_kernel(num_layers, T, B, H, O):
    L = num_layers
    f32 = jnp.float32

    def kernel(*refs):
        it = iter(refs)
        x_ref = next(it)
        h0_ref = next(it)
        c0_ref = next(it)
        enc_ref = next(it)
        lstm_w = [(next(it), next(it), next(it)) for _ in range(L)]
        wa_ref = next(it)
        w1a_ref = next(it)
        w1b_ref = next(it)
        b1_ref = next(it)
        w2_ref = next(it)
        b2_ref = next(it)
        out_ref = next(it)
        hT_ref = next(it)
        cT_ref = next(it)

        # ------------------- hoist all weight / bias loads -------------------
        wih = [lw[0][...] for lw in lstm_w]
        whh = [lw[1][...] for lw in lstm_w]
        b_raw = [lw[2][...] for lw in lstm_w]                       # (1, 4H)
        # pre-broadcast biases used per-step (layers > 0) once, outside loops
        bias_bc = [None] + [jnp.broadcast_to(b_raw[l], (B, 4 * H))
                            for l in range(1, L)]

        # Layer-0 input projection + bias for ALL timesteps: one well-shaped
        # matmul, pre-split into per-timestep registers before the recurrence.
        xp0 = jnp.dot(x_ref[...], wih[0], preferred_element_type=f32) + b_raw[0]
        xp0_t = [xp0[t * B:(t + 1) * B, :] for t in range(T)]       # T x (B, 4H)

        # g-gate lane mask (tanh lanes), hoisted out of the loop.
        lane = lax.broadcasted_iota(jnp.int32, (B, 4 * H), 1)
        g_lane = (lane >= 2 * H) & (lane < 3 * H)

        h = [h0_ref[l] for l in range(L)]                            # (B, H) each
        c = [c0_ref[l] for l in range(L)]

        def lstm_update(l, gates):
            # full-width activations: one sigmoid + one tanh push, VPU select.
            act = jnp.where(g_lane, jnp.tanh(gates), jax.nn.sigmoid(gates))
            gi = act[:, 0 * H:1 * H]
            gf = act[:, 1 * H:2 * H]
            gg = act[:, 2 * H:3 * H]
            go = act[:, 3 * H:4 * H]
            c[l] = gf * c[l] + gi * gg
            h[l] = go * jnp.tanh(c[l])

        # ------------------- (layer, time) wavefront recurrence ---------------
        # wavefront wv = l + t;  serial chain length L + T - 1 instead of L*T.
        for wv in range(L + T - 1):
            lo = max(0, wv - (T - 1))
            hi = min(wv, L - 1)
            gates = {}
            # phase 1: gate pre-activations for all active layers (independent
            # matmuls -> pipelined on the MXU; reads only wavefront-(wv-1) state)
            for l in range(lo, hi + 1):
                t = wv - l
                if l == 0:
                    gates[l] = xp0_t[t] + jnp.dot(
                        h[0], whh[0], preferred_element_type=f32)
                else:
                    gates[l] = (jnp.dot(h[l - 1], wih[l], preferred_element_type=f32)
                                + jnp.dot(h[l], whh[l], preferred_element_type=f32)
                                + bias_bc[l])
            # phase 2: elementwise gate math + state update
            for l in range(lo, hi + 1):
                lstm_update(l, gates[l])

        # single dense stores of the final LSTM state
        hT_ref[...] = jnp.stack(h, axis=0)                           # (L, B, H)
        cT_ref[...] = jnp.stack(c, axis=0)

        # ------- bilinear attention + cat-linear + tanh + fc_out, batched -------
        ha3 = jnp.stack(h, axis=1)                                   # (B, L, H)
        ha2 = ha3.reshape(B * L, H)                                  # (B*L, H)
        enc = enc_ref[...]                                           # (B, S, H)

        q3 = jnp.dot(ha2, wa_ref[...],
                     preferred_element_type=f32).reshape(B, L, H)
        # scores: contract H against enc with a batched dot_general (no enc.T)
        sc = lax.dot_general(q3, enc, (((2,), (2,)), ((0,), (0,))),
                             preferred_element_type=f32)             # (B, L, S)
        m = jnp.max(sc, axis=-1, keepdims=True)
        e = jnp.exp(sc - m)
        wgt = e * pl.reciprocal(jnp.sum(e, axis=-1, keepdims=True), approx=True)
        ctx = lax.dot_general(wgt, enc, (((2,), (1,)), ((0,), (0,))),
                              preferred_element_type=f32)            # (B, L, H)

        # cat((ctx, ha), -1) @ W1 + b1 == ctx @ W1a + ha @ W1b + b1, batched over B*L
        lin = (jnp.dot(ctx.reshape(B * L, H), w1a_ref[...], preferred_element_type=f32)
               + jnp.dot(ha2, w1b_ref[...], preferred_element_type=f32)
               + b1_ref[...])
        luong = jnp.tanh(lin)                                        # (B*L, H)
        out2 = jnp.dot(luong, w2_ref[...], preferred_element_type=f32) + b2_ref[...]
        out_ref[...] = out2.reshape(B, L, O).astype(out_ref.dtype)   # one store

    return kernel


# ----------------------------------------------------------------------------
# Decoder forward: one fused pallas_call (everything whole-array in VMEM).
# ----------------------------------------------------------------------------
def decoder_forward(x, hidden, cell, outputs_encoder, params):
    B, T, D_in = x.shape
    L, _, H = hidden.shape
    O = params["w2"].shape[-1]

    # Flatten x to time-major 2-D (row = t*B + b) so the hoisted input
    # projection is a single matmul inside the kernel.
    x2d = jnp.transpose(x, (1, 0, 2)).reshape(T * B, D_in)

    w1 = params["w1"]
    args = [x2d, hidden, cell, outputs_encoder]
    for l in range(L):
        args.extend(params["lstm"][l])
    args.extend([params["wa"], w1[:H, :], w1[H:, :], params["b1"],
                 params["w2"], params["b2"]])

    vmem = pl.BlockSpec(memory_space=pltpu.MemorySpace.VMEM)
    out, hT, cT = pl.pallas_call(
        _make_fused_decoder_kernel(L, T, B, H, O),
        out_shape=(
            jax.ShapeDtypeStruct((B, L, O), jnp.float32),
            jax.ShapeDtypeStruct((L, B, H), jnp.float32),
            jax.ShapeDtypeStruct((L, B, H), jnp.float32),
        ),
        in_specs=[vmem] * len(args),
        out_specs=(vmem, vmem, vmem),
    )(*args)
    return out, (hT, cT)


# ----------------------------------------------------------------------------
# Deterministic parameter init (PyTorch-style uniform ranges).
# ----------------------------------------------------------------------------
def init_params(key, input_dim, hidden_dim, output_dim, num_layers):
    H = hidden_dim
    bound = 1.0 / math.sqrt(H)
    keys = jax.random.split(key, 4 * num_layers + 6)
    ki = iter(range(len(keys)))

    lstm = []
    for l in range(num_layers):
        d_in = input_dim if l == 0 else H
        wih = jax.random.uniform(keys[next(ki)], (d_in, 4 * H), jnp.float32, -bound, bound)
        whh = jax.random.uniform(keys[next(ki)], (H, 4 * H), jnp.float32, -bound, bound)
        b_ih = jax.random.uniform(keys[next(ki)], (1, 4 * H), jnp.float32, -bound, bound)
        b_hh = jax.random.uniform(keys[next(ki)], (1, 4 * H), jnp.float32, -bound, bound)
        lstm.append((wih, whh, b_ih + b_hh))

    wa = jax.random.uniform(keys[next(ki)], (H, H), jnp.float32, -bound, bound)
    b_lin = 1.0 / math.sqrt(2 * H)
    w1 = jax.random.uniform(keys[next(ki)], (2 * H, H), jnp.float32, -b_lin, b_lin)
    b1 = jax.random.uniform(keys[next(ki)], (1, H), jnp.float32, -b_lin, b_lin)
    w2 = jax.random.uniform(keys[next(ki)], (H, output_dim), jnp.float32, -bound, bound)
    b2 = jax.random.uniform(keys[next(ki)], (1, output_dim), jnp.float32, -bound, bound)
    return {"lstm": lstm, "wa": wa, "w1": w1, "b1": b1, "w2": w2, "b2": b2}


# ----------------------------------------------------------------------------
# Pure-JAX reference for the correctness check.
# ----------------------------------------------------------------------------
def decoder_reference(x, hidden, cell, enc, params):
    B, T, _ = x.shape
    L, _, H = hidden.shape
    inp = x
    hs, cs = [], []
    for l in range(L):
        wih, whh, b = params["lstm"][l]
        h, c = hidden[l], cell[l]
        ys = []
        for t in range(T):
            g = inp[:, t, :] @ wih + h @ whh + b
            i = jax.nn.sigmoid(g[:, :H])
            f = jax.nn.sigmoid(g[:, H:2 * H])
            gg = jnp.tanh(g[:, 2 * H:3 * H])
            o = jax.nn.sigmoid(g[:, 3 * H:])
            c = f * c + i * gg
            h = o * jnp.tanh(c)
            ys.append(h)
        inp = jnp.stack(ys, axis=1)
        hs.append(h)
        cs.append(c)
    new_hidden = jnp.stack(hs, 0)
    new_cell = jnp.stack(cs, 0)

    ha = jnp.transpose(new_hidden, (1, 0, 2))                       # (B, L, H)
    scores = jnp.einsum("blh,he,bse->bls", ha, params["wa"], enc)
    w = jax.nn.softmax(scores, axis=-1)
    ctx = jnp.einsum("bls,bsh->blh", w, enc)
    cat = jnp.concatenate([ctx, ha], axis=-1)
    luong = jnp.tanh(cat @ params["w1"] + params["b1"])
    out = luong @ params["w2"] + params["b2"]
    return out, new_hidden, new_cell


if __name__ == "__main__":
    B, T, S = 2, 8, 8
    input_dim, hidden_dim, output_dim, num_layers = 16, 32, 16, 2

    key = jax.random.PRNGKey(0)
    kx, kh, kc, ke, kp = jax.random.split(key, 5)
    x = jax.random.normal(kx, (B, T, input_dim), jnp.float32)
    hidden = jax.random.normal(kh, (num_layers, B, hidden_dim), jnp.float32)
    cell = jax.random.normal(kc, (num_layers, B, hidden_dim), jnp.float32)
    outputs_encoder = jax.random.normal(ke, (B, S, hidden_dim), jnp.float32)
    params = init_params(kp, input_dim, hidden_dim, output_dim, num_layers)

    fwd = jax.jit(decoder_forward)
    out, (new_h, new_c) = fwd(x, hidden, cell, outputs_encoder, params)
    jax.block_until_ready((out, new_h, new_c))

    ref_out, ref_h, ref_c = decoder_reference(x, hidden, cell, outputs_encoder, params)
    assert out.shape == (B, num_layers, output_dim)
    assert new_h.shape == (num_layers, B, hidden_dim)
    assert new_c.shape == (num_layers, B, hidden_dim)
    assert jnp.allclose(out, ref_out, atol=2e-3, rtol=2e-3)
    assert jnp.allclose(new_h, ref_h, atol=2e-3, rtol=2e-3)
    assert jnp.allclose(new_c, ref_c, atol=2e-3, rtol=2e-3)

    print("KERNEL_OK")
</pallas_src>

<mosaic_0001>
module attributes {stable_mosaic.version = 11 : i64} {
  func.func @kernel(%arg0: memref<16x16xf32, #tpu.memory_space<vmem>>, %arg1: memref<2x2x32xf32, #tpu.memory_space<vmem>>, %arg2: memref<2x2x32xf32, #tpu.memory_space<vmem>>, %arg3: memref<2x8x32xf32, #tpu.memory_space<vmem>>, %arg4: memref<16x128xf32, #tpu.memory_space<vmem>>, %arg5: memref<32x128xf32, #tpu.memory_space<vmem>>, %arg6: memref<1x128xf32, #tpu.memory_space<vmem>>, %arg7: memref<32x128xf32, #tpu.memory_space<vmem>>, %arg8: memref<32x128xf32, #tpu.memory_space<vmem>>, %arg9: memref<1x128xf32, #tpu.memory_space<vmem>>, %arg10: memref<32x32xf32, #tpu.memory_space<vmem>>, %arg11: memref<32x32xf32, #tpu.memory_space<vmem>>, %arg12: memref<32x32xf32, #tpu.memory_space<vmem>>, %arg13: memref<1x32xf32, #tpu.memory_space<vmem>>, %arg14: memref<32x16xf32, #tpu.memory_space<vmem>>, %arg15: memref<1x16xf32, #tpu.memory_space<vmem>>, %arg16: memref<2x2x16xf32, #tpu.memory_space<vmem>>, %arg17: memref<2x2x32xf32, #tpu.memory_space<vmem>>, %arg18: memref<2x2x32xf32, #tpu.memory_space<vmem>>) attributes {dimension_semantics = [], scalar_prefetch = 0 : i64, scratch_operands = 0 : i64, tpu.core_type = #tpu.core_type<tc>} {
    %c0 = arith.constant 0 : index
    %c0_0 = arith.constant 0 : index
    %0 = vector.load %arg4[%c0, %c0_0] : memref<16x128xf32, #tpu.memory_space<vmem>>, vector<16x128xf32>
    %c0_1 = arith.constant 0 : index
    %c0_2 = arith.constant 0 : index
    %1 = vector.load %arg7[%c0_1, %c0_2] : memref<32x128xf32, #tpu.memory_space<vmem>>, vector<32x128xf32>
    %c0_3 = arith.constant 0 : index
    %c0_4 = arith.constant 0 : index
    %2 = vector.load %arg5[%c0_3, %c0_4] : memref<32x128xf32, #tpu.memory_space<vmem>>, vector<32x128xf32>
    %c0_5 = arith.constant 0 : index
    %c0_6 = arith.constant 0 : index
    %3 = vector.load %arg8[%c0_5, %c0_6] : memref<32x128xf32, #tpu.memory_space<vmem>>, vector<32x128xf32>
    %c0_7 = arith.constant 0 : index
    %c0_8 = arith.constant 0 : index
    %4 = vector.load %arg6[%c0_7, %c0_8] : memref<1x128xf32, #tpu.memory_space<vmem>>, vector<1x128xf32>
    %c0_9 = arith.constant 0 : index
    %c0_10 = arith.constant 0 : index
    %5 = vector.load %arg9[%c0_9, %c0_10] : memref<1x128xf32, #tpu.memory_space<vmem>>, vector<1x128xf32>
    %6 = vector.shape_cast %5 : vector<1x128xf32> to vector<1x128xf32>
    %7 = vector.broadcast %6 : vector<1x128xf32> to vector<2x128xf32>
    %c0_11 = arith.constant 0 : index
    %c0_12 = arith.constant 0 : index
    %8 = vector.load %arg0[%c0_11, %c0_12] : memref<16x16xf32, #tpu.memory_space<vmem>>, vector<16x16xf32>
    %cst = arith.constant dense<0.000000e+00> : vector<16x128xf32>
    %9 = tpu.matmul %8, %0, %cst {dimension_numbers = #tpu.dot_dimension_numbers<[1], [0], [0], [1], [0, 0, 1, 1], [], []>} : vector<16x16xf32>, vector<16x128xf32>, vector<16x128xf32> -> vector<16x128xf32>
    %10 = vector.broadcast %4 : vector<1x128xf32> to vector<16x128xf32>
    %11 = arith.addf %9, %10 : vector<16x128xf32>
    %12 = vector.extract_strided_slice %11 {offsets = [0, 0], sizes = [2, 128], strides = [1, 1]} : vector<16x128xf32> to vector<2x128xf32>
    %13 = vector.extract_strided_slice %11 {offsets = [2, 0], sizes = [2, 128], strides = [1, 1]} : vector<16x128xf32> to vector<2x128xf32>
    %14 = vector.extract_strided_slice %11 {offsets = [4, 0], sizes = [2, 128], strides = [1, 1]} : vector<16x128xf32> to vector<2x128xf32>
    %15 = vector.extract_strided_slice %11 {offsets = [6, 0], sizes = [2, 128], strides = [1, 1]} : vector<16x128xf32> to vector<2x128xf32>
    %16 = vector.extract_strided_slice %11 {offsets = [8, 0], sizes = [2, 128], strides = [1, 1]} : vector<16x128xf32> to vector<2x128xf32>
    %17 = vector.extract_strided_slice %11 {offsets = [10, 0], sizes = [2, 128], strides = [1, 1]} : vector<16x128xf32> to vector<2x128xf32>
    %18 = vector.extract_strided_slice %11 {offsets = [12, 0], sizes = [2, 128], strides = [1, 1]} : vector<16x128xf32> to vector<2x128xf32>
    %19 = vector.extract_strided_slice %11 {offsets = [14, 0], sizes = [2, 128], strides = [1, 1]} : vector<16x128xf32> to vector<2x128xf32>
    %20 = tpu.iota {dimensions = array<i32: 1>} : vector<2x128xi32>
    %c64_i32 = arith.constant 64 : i32
    %21 = vector.broadcast %c64_i32 : i32 to vector<2x128xi32>
    %22 = arith.cmpi sge, %20, %21 : vector<2x128xi32>
    %c96_i32 = arith.constant 96 : i32
    %23 = vector.broadcast %c96_i32 : i32 to vector<2x128xi32>
    %24 = arith.cmpi slt, %20, %23 : vector<2x128xi32>
    %25 = arith.andi %22, %24 : vector<2x128xi1>
    %c0_13 = arith.constant 0 : index
    %c0_14 = arith.constant 0 : index
    %c0_15 = arith.constant 0 : index
    %26 = vector.load %arg1[%c0_13, %c0_14, %c0_15] : memref<2x2x32xf32, #tpu.memory_space<vmem>>, vector<1x2x32xf32>
    %27 = vector.shape_cast %26 : vector<1x2x32xf32> to vector<2x32xf32>
    %c1 = arith.constant 1 : index
    %c0_16 = arith.constant 0 : index
    %c0_17 = arith.constant 0 : index
    %28 = vector.load %arg1[%c1, %c0_16, %c0_17] : memref<2x2x32xf32, #tpu.memory_space<vmem>>, vector<1x2x32xf32>
    %29 = vector.shape_cast %28 : vector<1x2x32xf32> to vector<2x32xf32>
    %c0_18 = arith.constant 0 : index
    %c0_19 = arith.constant 0 : index
    %c0_20 = arith.constant 0 : index
    %30 = vector.load %arg2[%c0_18, %c0_19, %c0_20] : memref<2x2x32xf32, #tpu.memory_space<vmem>>, vector<1x2x32xf32>
    %31 = vector.shape_cast %30 : vector<1x2x32xf32> to vector<2x32xf32>
    %c1_21 = arith.constant 1 : index
    %c0_22 = arith.constant 0 : index
    %c0_23 = arith.constant 0 : index
    %32 = vector.load %arg2[%c1_21, %c0_22, %c0_23] : memref<2x2x32xf32, #tpu.memory_space<vmem>>, vector<1x2x32xf32>
    %33 = vector.shape_cast %32 : vector<1x2x32xf32> to vector<2x32xf32>
    %cst_24 = arith.constant dense<0.000000e+00> : vector<2x128xf32>
    %34 = tpu.matmul %27, %2, %cst_24 {dimension_numbers = #tpu.dot_dimension_numbers<[1], [0], [0], [1], [0, 0, 1, 1], [], []>} : vector<2x32xf32>, vector<32x128xf32>, vector<2x128xf32> -> vector<2x128xf32>
    %35 = arith.addf %12, %34 : vector<2x128xf32>
    %36 = math.tanh %35 : vector<2x128xf32>
    %37 = arith.negf %35 : vector<2x128xf32>
    %38 = math.exp %37 : vector<2x128xf32>
    %cst_25 = arith.constant 1.000000e+00 : f32
    %39 = vector.broadcast %cst_25 : f32 to vector<2x128xf32>
    %40 = arith.addf %39, %38 : vector<2x128xf32>
    %41 = arith.divf %39, %40 : vector<2x128xf32>
    %42 = arith.select %25, %36, %41 : vector<2x128xi1>, vector<2x128xf32>
    %43 = vector.extract_strided_slice %42 {offsets = [0, 0], sizes = [2, 32], strides = [1, 1]} : vector<2x128xf32> to vector<2x32xf32>
    %44 = vector.extract_strided_slice %42 {offsets = [0, 32], sizes = [2, 32], strides = [1, 1]} : vector<2x128xf32> to vector<2x32xf32>
    %45 = vector.extract_strided_slice %42 {offsets = [0, 64], sizes = [2, 32], strides = [1, 1]} : vector<2x128xf32> to vector<2x32xf32>
    %46 = vector.extract_strided_slice %42 {offsets = [0, 96], sizes = [2, 32], strides = [1, 1]} : vector<2x128xf32> to vector<2x32xf32>
    %47 = arith.mulf %44, %31 : vector<2x32xf32>
    %48 = arith.mulf %43, %45 : vector<2x32xf32>
    %49 = arith.addf %47, %48 : vector<2x32xf32>
    %50 = math.tanh %49 : vector<2x32xf32>
    %51 = arith.mulf %46, %50 : vector<2x32xf32>
    %cst_26 = arith.constant dense<0.000000e+00> : vector<2x128xf32>
    %52 = tpu.matmul %51, %2, %cst_26 {dimension_numbers = #tpu.dot_dimension_numbers<[1], [0], [0], [1], [0, 0, 1, 1], [], []>} : vector<2x32xf32>, vector<32x128xf32>, vector<2x128xf32> -> vector<2x128xf32>
    %53 = arith.addf %13, %52 : vector<2x128xf32>
    %cst_27 = arith.constant dense<0.000000e+00> : vector<2x128xf32>
    %54 = tpu.matmul %51, %1, %cst_27 {dimension_numbers = #tpu.dot_dimension_numbers<[1], [0], [0], [1], [0, 0, 1, 1], [], []>} : vector<2x32xf32>, vector<32x128xf32>, vector<2x128xf32> -> vector<2x128xf32>
    %cst_28 = arith.constant dense<0.000000e+00> : vector<2x128xf32>
    %55 = tpu.matmul %29, %3, %cst_28 {dimension_numbers = #tpu.dot_dimension_numbers<[1], [0], [0], [1], [0, 0, 1, 1], [], []>} : vector<2x32xf32>, vector<32x128xf32>, vector<2x128xf32> -> vector<2x128xf32>
    %56 = arith.addf %54, %55 : vector<2x128xf32>
    %57 = arith.addf %56, %7 : vector<2x128xf32>
    %58 = math.tanh %53 : vector<2x128xf32>
    %59 = arith.negf %53 : vector<2x128xf32>
    %60 = math.exp %59 : vector<2x128xf32>
    %cst_29 = arith.constant 1.000000e+00 : f32
    %61 = vector.broadcast %cst_29 : f32 to vector<2x128xf32>
    %62 = arith.addf %61, %60 : vector<2x128xf32>
    %63 = arith.divf %61, %62 : vector<2x128xf32>
    %64 = arith.select %25, %58, %63 : vector<2x128xi1>, vector<2x128xf32>
    %65 = vector.extract_strided_slice %64 {offsets = [0, 0], sizes = [2, 32], strides = [1, 1]} : vector<2x128xf32> to vector<2x32xf32>
    %66 = vector.extract_strided_slice %64 {offsets = [0, 32], sizes = [2, 32], strides = [1, 1]} : vector<2x128xf32> to vector<2x32xf32>
    %67 = vector.extract_strided_slice %64 {offsets = [0, 64], sizes = [2, 32], strides = [1, 1]} : vector<2x128xf32> to vector<2x32xf32>
    %68 = vector.extract_strided_slice %64 {offsets = [0, 96], sizes = [2, 32], strides = [1, 1]} : vector<2x128xf32> to vector<2x32xf32>
    %69 = arith.mulf %66, %49 : vector<2x32xf32>
    %70 = arith.mulf %65, %67 : vector<2x32xf32>
    %71 = arith.addf %69, %70 : vector<2x32xf32>
    %72 = math.tanh %71 : vector<2x32xf32>
    %73 = arith.mulf %68, %72 : vector<2x32xf32>
    %74 = math.tanh %57 : vector<2x128xf32>
    %75 = arith.negf %57 : vector<2x128xf32>
    %76 = math.exp %75 : vector<2x128xf32>
    %cst_30 = arith.constant 1.000000e+00 : f32
    %77 = vector.broadcast %cst_30 : f32 to vector<2x128xf32>
    %78 = arith.addf %77, %76 : vector<2x128xf32>
    %79 = arith.divf %77, %78 : vector<2x128xf32>
    %80 = arith.select %25, %74, %79 : vector<2x128xi1>, vector<2x128xf32>
    %81 = vector.extract_strided_slice %80 {offsets = [0, 0], sizes = [2, 32], strides = [1, 1]} : vector<2x128xf32> to vector<2x32xf32>
    %82 = vector.extract_strided_slice %80 {offsets = [0, 32], sizes = [2, 32], strides = [1, 1]} : vector<2x128xf32> to vector<2x32xf32>
    %83 = vector.extract_strided_slice %80 {offsets = [0, 64], sizes = [2, 32], strides = [1, 1]} : vector<2x128xf32> to vector<2x32xf32>
    %84 = vector.extract_strided_slice %80 {offsets = [0, 96], sizes = [2, 32], strides = [1, 1]} : vector<2x128xf32> to vector<2x32xf32>
    %85 = arith.mulf %82, %33 : vector<2x32xf32>
    %86 = arith.mulf %81, %83 : vector<2x32xf32>
    %87 = arith.addf %85, %86 : vector<2x32xf32>
    %88 = math.tanh %87 : vector<2x32xf32>
    %89 = arith.mulf %84, %88 : vector<2x32xf32>
    %cst_31 = arith.constant dense<0.000000e+00> : vector<2x128xf32>
    %90 = tpu.matmul %73, %2, %cst_31 {dimension_numbers = #tpu.dot_dimension_numbers<[1], [0], [0], [1], [0, 0, 1, 1], [], []>} : vector<2x32xf32>, vector<32x128xf32>, vector<2x128xf32> -> vector<2x128xf32>
    %91 = arith.addf %14, %90 : vector<2x128xf32>
    %cst_32 = arith.constant dense<0.000000e+00> : vector<2x128xf32>
    %92 = tpu.matmul %73, %1, %cst_32 {dimension_numbers = #tpu.dot_dimension_numbers<[1], [0], [0], [1], [0, 0, 1, 1], [], []>} : vector<2x32xf32>, vector<32x128xf32>, vector<2x128xf32> -> vector<2x128xf32>
    %cst_33 = arith.constant dense<0.000000e+00> : vector<2x128xf32>
    %93 = tpu.matmul %89, %3, %cst_33 {dimension_numbers = #tpu.dot_dimension_numbers<[1], [0], [0], [1], [0, 0, 1, 1], [], []>} : vector<2x32xf32>, vector<32x128xf32>, vector<2x128xf32> -> vector<2x128xf32>
    %94 = arith.addf %92, %93 : vector<2x128xf32>
    %95 = arith.addf %94, %7 : vector<2x128xf32>
    %96 = math.tanh %91 : vector<2x128xf32>
    %97 = arith.negf %91 : vector<2x128xf32>
    %98 = math.exp %97 : vector<2x128xf32>
    %cst_34 = arith.constant 1.000000e+00 : f32
    %99 = vector.broadcast %cst_34 : f32 to vector<2x128xf32>
    %100 = arith.addf %99, %98 : vector<2x128xf32>
    %101 = arith.divf %99, %100 : vector<2x128xf32>
    %102 = arith.select %25, %96, %101 : vector<2x128xi1>, vector<2x128xf32>
    %103 = vector.extract_strided_slice %102 {offsets = [0, 0], sizes = [2, 32], strides = [1, 1]} : vector<2x128xf32> to vector<2x32xf32>
    %104 = vector.extract_strided_slice %102 {offsets = [0, 32], sizes = [2, 32], strides = [1, 1]} : vector<2x128xf32> to vector<2x32xf32>
    %105 = vector.extract_strided_slice %102 {offsets = [0, 64], sizes = [2, 32], strides = [1, 1]} : vector<2x128xf32> to vector<2x32xf32>
    %106 = vector.extract_strided_slice %102 {offsets = [0, 96], sizes = [2, 32], strides = [1, 1]} : vector<2x128xf32> to vector<2x32xf32>
    %107 = arith.mulf %104, %71 : vector<2x32xf32>
    %108 = arith.mulf %103, %105 : vector<2x32xf32>
    %109 = arith.addf %107, %108 : vector<2x32xf32>
    %110 = math.tanh %109 : vector<2x32xf32>
    %111 = arith.mulf %106, %110 : vector<2x32xf32>
    %112 = math.tanh %95 : vector<2x128xf32>
    %113 = arith.negf %95 : vector<2x128xf32>
    %114 = math.exp %113 : vector<2x128xf32>
    %cst_35 = arith.constant 1.000000e+00 : f32
    %115 = vector.broadcast %cst_35 : f32 to vector<2x128xf32>
    %116 = arith.addf %115, %114 : vector<2x128xf32>
    %117 = arith.divf %115, %116 : vector<2x128xf32>
    %118 = arith.select %25, %112, %117 : vector<2x128xi1>, vector<2x128xf32>
    %119 = vector.extract_strided_slice %118 {offsets = [0, 0], sizes = [2, 32], strides = [1, 1]} : vector<2x128xf32> to vector<2x32xf32>
    %120 = vector.extract_strided_slice %118 {offsets = [0, 32], sizes = [2, 32], strides = [1, 1]} : vector<2x128xf32> to vector<2x32xf32>
    %121 = vector.extract_strided_slice %118 {offsets = [0, 64], sizes = [2, 32], strides = [1, 1]} : vector<2x128xf32> to vector<2x32xf32>
    %122 = vector.extract_strided_slice %118 {offsets = [0, 96], sizes = [2, 32], strides = [1, 1]} : vector<2x128xf32> to vector<2x32xf32>
    %123 = arith.mulf %120, %87 : vector<2x32xf32>
    %124 = arith.mulf %119, %121 : vector<2x32xf32>
    %125 = arith.addf %123, %124 : vector<2x32xf32>
    %126 = math.tanh %125 : vector<2x32xf32>
    %127 = arith.mulf %122, %126 : vector<2x32xf32>
    %cst_36 = arith.constant dense<0.000000e+00> : vector<2x128xf32>
    %128 = tpu.matmul %111, %2, %cst_36 {dimension_numbers = #tpu.dot_dimension_numbers<[1], [0], [0], [1], [0, 0, 1, 1], [], []>} : vector<2x32xf32>, vector<32x128xf32>, vector<2x128xf32> -> vector<2x128xf32>
    %129 = arith.addf %15, %128 : vector<2x128xf32>
    %cst_37 = arith.constant dense<0.000000e+00> : vector<2x128xf32>
    %130 = tpu.matmul %111, %1, %cst_37 {dimension_numbers = #tpu.dot_dimension_numbers<[1], [0], [0], [1], [0, 0, 1, 1], [], []>} : vector<2x32xf32>, vector<32x128xf32>, vector<2x128xf32> -> vector<2x128xf32>
    %cst_38 = arith.constant dense<0.000000e+00> : vector<2x128xf32>
    %131 = tpu.matmul %127, %3, %cst_38 {dimension_numbers = #tpu.dot_dimension_numbers<[1], [0], [0], [1], [0, 0, 1, 1], [], []>} : vector<2x32xf32>, vector<32x128xf32>, vector<2x128xf32> -> vector<2x128xf32>
    %132 = arith.addf %130, %131 : vector<2x128xf32>
    %133 = arith.addf %132, %7 : vector<2x128xf32>
    %134 = math.tanh %129 : vector<2x128xf32>
    %135 = arith.negf %129 : vector<2x128xf32>
    %136 = math.exp %135 : vector<2x128xf32>
    %cst_39 = arith.constant 1.000000e+00 : f32
    %137 = vector.broadcast %cst_39 : f32 to vector<2x128xf32>
    %138 = arith.addf %137, %136 : vector<2x128xf32>
    %139 = arith.divf %137, %138 : vector<2x128xf32>
    %140 = arith.select %25, %134, %139 : vector<2x128xi1>, vector<2x128xf32>
    %141 = vector.extract_strided_slice %140 {offsets = [0, 0], sizes = [2, 32], strides = [1, 1]} : vector<2x128xf32> to vector<2x32xf32>
    %142 = vector.extract_strided_slice %140 {offsets = [0, 32], sizes = [2, 32], strides = [1, 1]} : vector<2x128xf32> to vector<2x32xf32>
    %143 = vector.extract_strided_slice %140 {offsets = [0, 64], sizes = [2, 32], strides = [1, 1]} : vector<2x128xf32> to vector<2x32xf32>
    %144 = vector.extract_strided_slice %140 {offsets = [0, 96], sizes = [2, 32], strides = [1, 1]} : vector<2x128xf32> to vector<2x32xf32>
    %145 = arith.mulf %142, %109 : vector<2x32xf32>
    %146 = arith.mulf %141, %143 : vector<2x32xf32>
    %147 = arith.addf %145, %146 : vector<2x32xf32>
    %148 = math.tanh %147 : vector<2x32xf32>
    %149 = arith.mulf %144, %148 : vector<2x32xf32>
    %150 = math.tanh %133 : vector<2x128xf32>
    %151 = arith.negf %133 : vector<2x128xf32>
    %152 = math.exp %151 : vector<2x128xf32>
    %cst_40 = arith.constant 1.000000e+00 : f32
    %153 = vector.broadcast %cst_40 : f32 to vector<2x128xf32>
    %154 = arith.addf %153, %152 : vector<2x128xf32>
    %155 = arith.divf %153, %154 : vector<2x128xf32>
    %156 = arith.select %25, %150, %155 : vector<2x128xi1>, vector<2x128xf32>
    %157 = vector.extract_strided_slice %156 {offsets = [0, 0], sizes = [2, 32], strides = [1, 1]} : vector<2x128xf32> to vector<2x32xf32>
    %158 = vector.extract_strided_slice %156 {offsets = [0, 32], sizes = [2, 32], strides = [1, 1]} : vector<2x128xf32> to vector<2x32xf32>
    %159 = vector.extract_strided_slice %156 {offsets = [0, 64], sizes = [2, 32], strides = [1, 1]} : vector<2x128xf32> to vector<2x32xf32>
    %160 = vector.extract_strided_slice %156 {offsets = [0, 96], sizes = [2, 32], strides = [1, 1]} : vector<2x128xf32> to vector<2x32xf32>
    %161 = arith.mulf %158, %125 : vector<2x32xf32>
    %162 = arith.mulf %157, %159 : vector<2x32xf32>
    %163 = arith.addf %161, %162 : vector<2x32xf32>
    %164 = math.tanh %163 : vector<2x32xf32>
    %165 = arith.mulf %160, %164 : vector<2x32xf32>
    %cst_41 = arith.constant dense<0.000000e+00> : vector<2x128xf32>
    %166 = tpu.matmul %149, %2, %cst_41 {dimension_numbers = #tpu.dot_dimension_numbers<[1], [0], [0], [1], [0, 0, 1, 1], [], []>} : vector<2x32xf32>, vector<32x128xf32>, vector<2x128xf32> -> vector<2x128xf32>
    %167 = arith.addf %16, %166 : vector<2x128xf32>
    %cst_42 = arith.constant dense<0.000000e+00> : vector<2x128xf32>
    %168 = tpu.matmul %149, %1, %cst_42 {dimension_numbers = #tpu.dot_dimension_numbers<[1], [0], [0], [1], [0, 0, 1, 1], [], []>} : vector<2x32xf32>, vector<32x128xf32>, vector<2x128xf32> -> vector<2x128xf32>
    %cst_43 = arith.constant dense<0.000000e+00> : vector<2x128xf32>
    %169 = tpu.matmul %165, %3, %cst_43 {dimension_numbers = #tpu.dot_dimension_numbers<[1], [0], [0], [1], [0, 0, 1, 1], [], []>} : vector<2x32xf32>, vector<32x128xf32>, vector<2x128xf32> -> vector<2x128xf32>
    %170 = arith.addf %168, %169 : vector<2x128xf32>
    %171 = arith.addf %170, %7 : vector<2x128xf32>
    %172 = math.tanh %167 : vector<2x128xf32>
    %173 = arith.negf %167 : vector<2x128xf32>
    %174 = math.exp %173 : vector<2x128xf32>
    %cst_44 = arith.constant 1.000000e+00 : f32
    %175 = vector.broadcast %cst_44 : f32 to vector<2x128xf32>
    %176 = arith.addf %175, %174 : vector<2x128xf32>
    %177 = arith.divf %175, %176 : vector<2x128xf32>
    %178 = arith.select %25, %172, %177 : vector<2x128xi1>, vector<2x128xf32>
    %179 = vector.extract_strided_slice %178 {offsets = [0, 0], sizes = [2, 32], strides = [1, 1]} : vector<2x128xf32> to vector<2x32xf32>
    %180 = vector.extract_strided_slice %178 {offsets = [0, 32], sizes = [2, 32], strides = [1, 1]} : vector<2x128xf32> to vector<2x32xf32>
    %181 = vector.extract_strided_slice %178 {offsets = [0, 64], sizes = [2, 32], strides = [1, 1]} : vector<2x128xf32> to vector<2x32xf32>
    %182 = vector.extract_strided_slice %178 {offsets = [0, 96], sizes = [2, 32], strides = [1, 1]} : vector<2x128xf32> to vector<2x32xf32>
    %183 = arith.mulf %180, %147 : vector<2x32xf32>
    %184 = arith.mulf %179, %181 : vector<2x32xf32>
    %185 = arith.addf %183, %184 : vector<2x32xf32>
    %186 = math.tanh %185 : vector<2x32xf32>
    %187 = arith.mulf %182, %186 : vector<2x32xf32>
    %188 = math.tanh %171 : vector<2x128xf32>
    %189 = arith.negf %171 : vector<2x128xf32>
    %190 = math.exp %189 : vector<2x128xf32>
    %cst_45 = arith.constant 1.000000e+00 : f32
    %191 = vector.broadcast %cst_45 : f32 to vector<2x128xf32>
    %192 = arith.addf %191, %190 : vector<2x128xf32>
    %193 = arith.divf %191, %192 : vector<2x128xf32>
    %194 = arith.select %25, %188, %193 : vector<2x128xi1>, vector<2x128xf32>
    %195 = vector.extract_strided_slice %194 {offsets = [0, 0], sizes = [2, 32], strides = [1, 1]} : vector<2x128xf32> to vector<2x32xf32>
    %196 = vector.extract_strided_slice %194 {offsets = [0, 32], sizes = [2, 32], strides = [1, 1]} : vector<2x128xf32> to vector<2x32xf32>
    %197 = vector.extract_strided_slice %194 {offsets = [0, 64], sizes = [2, 32], strides = [1, 1]} : vector<2x128xf32> to vector<2x32xf32>
    %198 = vector.extract_strided_slice %194 {offsets = [0, 96], sizes = [2, 32], strides = [1, 1]} : vector<2x128xf32> to vector<2x32xf32>
    %199 = arith.mulf %196, %163 : vector<2x32xf32>
    %200 = arith.mulf %195, %197 : vector<2x32xf32>
    %201 = arith.addf %199, %200 : vector<2x32xf32>
    %202 = math.tanh %201 : vector<2x32xf32>
    %203 = arith.mulf %198, %202 : vector<2x32xf32>
    %cst_46 = arith.constant dense<0.000000e+00> : vector<2x128xf32>
    %204 = tpu.matmul %187, %2, %cst_46 {dimension_numbers = #tpu.dot_dimension_numbers<[1], [0], [0], [1], [0, 0, 1, 1], [], []>} : vector<2x32xf32>, vector<32x128xf32>, vector<2x128xf32> -> vector<2x128xf32>
    %205 = arith.addf %17, %204 : vector<2x128xf32>
    %cst_47 = arith.constant dense<0.000000e+00> : vector<2x128xf32>
    %206 = tpu.matmul %187, %1, %cst_47 {dimension_numbers = #tpu.dot_dimension_numbers<[1], [0], [0], [1], [0, 0, 1, 1], [], []>} : vector<2x32xf32>, vector<32x128xf32>, vector<2x128xf32> -> vector<2x128xf32>
    %cst_48 = arith.constant dense<0.000000e+00> : vector<2x128xf32>
    %207 = tpu.matmul %203, %3, %cst_48 {dimension_numbers = #tpu.dot_dimension_numbers<[1], [0], [0], [1], [0, 0, 1, 1], [], []>} : vector<2x32xf32>, vector<32x128xf32>, vector<2x128xf32> -> vector<2x128xf32>
    %208 = arith.addf %206, %207 : vector<2x128xf32>
    %209 = arith.addf %208, %7 : vector<2x128xf32>
    %210 = math.tanh %205 : vector<2x128xf32>
    %211 = arith.negf %205 : vector<2x128xf32>
    %212 = math.exp %211 : vector<2x128xf32>
    %cst_49 = arith.constant 1.000000e+00 : f32
    %213 = vector.broadcast %cst_49 : f32 to vector<2x128xf32>
    %214 = arith.addf %213, %212 : vector<2x128xf32>
    %215 = arith.divf %213, %214 : vector<2x128xf32>
    %216 = arith.select %25, %210, %215 : vector<2x128xi1>, vector<2x128xf32>
    %217 = vector.extract_strided_slice %216 {offsets = [0, 0], sizes = [2, 32], strides = [1, 1]} : vector<2x128xf32> to vector<2x32xf32>
    %218 = vector.extract_strided_slice %216 {offsets = [0, 32], sizes = [2, 32], strides = [1, 1]} : vector<2x128xf32> to vector<2x32xf32>
    %219 = vector.extract_strided_slice %216 {offsets = [0, 64], sizes = [2, 32], strides = [1, 1]} : vector<2x128xf32> to vector<2x32xf32>
    %220 = vector.extract_strided_slice %216 {offsets = [0, 96], sizes = [2, 32], strides = [1, 1]} : vector<2x128xf32> to vector<2x32xf32>
    %221 = arith.mulf %218, %185 : vector<2x32xf32>
    %222 = arith.mulf %217, %219 : vector<2x32xf32>
    %223 = arith.addf %221, %222 : vector<2x32xf32>
    %224 = math.tanh %223 : vector<2x32xf32>
    %225 = arith.mulf %220, %224 : vector<2x32xf32>
    %226 = math.tanh %209 : vector<2x128xf32>
    %227 = arith.negf %209 : vector<2x128xf32>
    %228 = math.exp %227 : vector<2x128xf32>
    %cst_50 = arith.constant 1.000000e+00 : f32
    %229 = vector.broadcast %cst_50 : f32 to vector<2x128xf32>
    %230 = arith.addf %229, %228 : vector<2x128xf32>
    %231 = arith.divf %229, %230 : vector<2x128xf32>
    %232 = arith.select %25, %226, %231 : vector<2x128xi1>, vector<2x128xf32>
    %233 = vector.extract_strided_slice %232 {offsets = [0, 0], sizes = [2, 32], strides = [1, 1]} : vector<2x128xf32> to vector<2x32xf32>
    %234 = vector.extract_strided_slice %232 {offsets = [0, 32], sizes = [2, 32], strides = [1, 1]} : vector<2x128xf32> to vector<2x32xf32>
    %235 = vector.extract_strided_slice %232 {offsets = [0, 64], sizes = [2, 32], strides = [1, 1]} : vector<2x128xf32> to vector<2x32xf32>
    %236 = vector.extract_strided_slice %232 {offsets = [0, 96], sizes = [2, 32], strides = [1, 1]} : vector<2x128xf32> to vector<2x32xf32>
    %237 = arith.mulf %234, %201 : vector<2x32xf32>
    %238 = arith.mulf %233, %235 : vector<2x32xf32>
    %239 = arith.addf %237, %238 : vector<2x32xf32>
    %240 = math.tanh %239 : vector<2x32xf32>
    %241 = arith.mulf %236, %240 : vector<2x32xf32>
    %cst_51 = arith.constant dense<0.000000e+00> : vector<2x128xf32>
    %242 = tpu.matmul %225, %2, %cst_51 {dimension_numbers = #tpu.dot_dimension_numbers<[1], [0], [0], [1], [0, 0, 1, 1], [], []>} : vector<2x32xf32>, vector<32x128xf32>, vector<2x128xf32> -> vector<2x128xf32>
    %243 = arith.addf %18, %242 : vector<2x128xf32>
    %cst_52 = arith.constant dense<0.000000e+00> : vector<2x128xf32>
    %244 = tpu.matmul %225, %1, %cst_52 {dimension_numbers = #tpu.dot_dimension_numbers<[1], [0], [0], [1], [0, 0, 1, 1], [], []>} : vector<2x32xf32>, vector<32x128xf32>, vector<2x128xf32> -> vector<2x128xf32>
    %cst_53 = arith.constant dense<0.000000e+00> : vector<2x128xf32>
    %245 = tpu.matmul %241, %3, %cst_53 {dimension_numbers = #tpu.dot_dimension_numbers<[1], [0], [0], [1], [0, 0, 1, 1], [], []>} : vector<2x32xf32>, vector<32x128xf32>, vector<2x128xf32> -> vector<2x128xf32>
    %246 = arith.addf %244, %245 : vector<2x128xf32>
    %247 = arith.addf %246, %7 : vector<2x128xf32>
    %248 = math.tanh %243 : vector<2x128xf32>
    %249 = arith.negf %243 : vector<2x128xf32>
    %250 = math.exp %249 : vector<2x128xf32>
    %cst_54 = arith.constant 1.000000e+00 : f32
    %251 = vector.broadcast %cst_54 : f32 to vector<2x128xf32>
    %252 = arith.addf %251, %250 : vector<2x128xf32>
    %253 = arith.divf %251, %252 : vector<2x128xf32>
    %254 = arith.select %25, %248, %253 : vector<2x128xi1>, vector<2x128xf32>
    %255 = vector.extract_strided_slice %254 {offsets = [0, 0], sizes = [2, 32], strides = [1, 1]} : vector<2x128xf32> to vector<2x32xf32>
    %256 = vector.extract_strided_slice %254 {offsets = [0, 32], sizes = [2, 32], strides = [1, 1]} : vector<2x128xf32> to vector<2x32xf32>
    %257 = vector.extract_strided_slice %254 {offsets = [0, 64], sizes = [2, 32], strides = [1, 1]} : vector<2x128xf32> to vector<2x32xf32>
    %258 = vector.extract_strided_slice %254 {offsets = [0, 96], sizes = [2, 32], strides = [1, 1]} : vector<2x128xf32> to vector<2x32xf32>
    %259 = arith.mulf %256, %223 : vector<2x32xf32>
    %260 = arith.mulf %255, %257 : vector<2x32xf32>
    %261 = arith.addf %259, %260 : vector<2x32xf32>
    %262 = math.tanh %261 : vector<2x32xf32>
    %263 = arith.mulf %258, %262 : vector<2x32xf32>
    %264 = math.tanh %247 : vector<2x128xf32>
    %265 = arith.negf %247 : vector<2x128xf32>
    %266 = math.exp %265 : vector<2x128xf32>
    %cst_55 = arith.constant 1.000000e+00 : f32
    %267 = vector.broadcast %cst_55 : f32 to vector<2x128xf32>
    %268 = arith.addf %267, %266 : vector<2x128xf32>
    %269 = arith.divf %267, %268 : vector<2x128xf32>
    %270 = arith.select %25, %264, %269 : vector<2x128xi1>, vector<2x128xf32>
    %271 = vector.extract_strided_slice %270 {offsets = [0, 0], sizes = [2, 32], strides = [1, 1]} : vector<2x128xf32> to vector<2x32xf32>
    %272 = vector.extract_strided_slice %270 {offsets = [0, 32], sizes = [2, 32], strides = [1, 1]} : vector<2x128xf32> to vector<2x32xf32>
    %273 = vector.extract_strided_slice %270 {offsets = [0, 64], sizes = [2, 32], strides = [1, 1]} : vector<2x128xf32> to vector<2x32xf32>
    %274 = vector.extract_strided_slice %270 {offsets = [0, 96], sizes = [2, 32], strides = [1, 1]} : vector<2x128xf32> to vector<2x32xf32>
    %275 = arith.mulf %272, %239 : vector<2x32xf32>
    %276 = arith.mulf %271, %273 : vector<2x32xf32>
    %277 = arith.addf %275, %276 : vector<2x32xf32>
    %278 = math.tanh %277 : vector<2x32xf32>
    %279 = arith.mulf %274, %278 : vector<2x32xf32>
    %cst_56 = arith.constant dense<0.000000e+00> : vector<2x128xf32>
    %280 = tpu.matmul %263, %2, %cst_56 {dimension_numbers = #tpu.dot_dimension_numbers<[1], [0], [0], [1], [0, 0, 1, 1], [], []>} : vector<2x32xf32>, vector<32x128xf32>, vector<2x128xf32> -> vector<2x128xf32>
    %281 = arith.addf %19, %280 : vector<2x128xf32>
    %cst_57 = arith.constant dense<0.000000e+00> : vector<2x128xf32>
    %282 = tpu.matmul %263, %1, %cst_57 {dimension_numbers = #tpu.dot_dimension_numbers<[1], [0], [0], [1], [0, 0, 1, 1], [], []>} : vector<2x32xf32>, vector<32x128xf32>, vector<2x128xf32> -> vector<2x128xf32>
    %cst_58 = arith.constant dense<0.000000e+00> : vector<2x128xf32>
    %283 = tpu.matmul %279, %3, %cst_58 {dimension_numbers = #tpu.dot_dimension_numbers<[1], [0], [0], [1], [0, 0, 1, 1], [], []>} : vector<2x32xf32>, vector<32x128xf32>, vector<2x128xf32> -> vector<2x128xf32>
    %284 = arith.addf %282, %283 : vector<2x128xf32>
    %285 = arith.addf %284, %7 : vector<2x128xf32>
    %286 = math.tanh %281 : vector<2x128xf32>
    %287 = arith.negf %281 : vector<2x128xf32>
    %288 = math.exp %287 : vector<2x128xf32>
    %cst_59 = arith.constant 1.000000e+00 : f32
    %289 = vector.broadcast %cst_59 : f32 to vector<2x128xf32>
    %290 = arith.addf %289, %288 : vector<2x128xf32>
    %291 = arith.divf %289, %290 : vector<2x128xf32>
    %292 = arith.select %25, %286, %291 : vector<2x128xi1>, vector<2x128xf32>
    %293 = vector.extract_strided_slice %292 {offsets = [0, 0], sizes = [2, 32], strides = [1, 1]} : vector<2x128xf32> to vector<2x32xf32>
    %294 = vector.extract_strided_slice %292 {offsets = [0, 32], sizes = [2, 32], strides = [1, 1]} : vector<2x128xf32> to vector<2x32xf32>
    %295 = vector.extract_strided_slice %292 {offsets = [0, 64], sizes = [2, 32], strides = [1, 1]} : vector<2x128xf32> to vector<2x32xf32>
    %296 = vector.extract_strided_slice %292 {offsets = [0, 96], sizes = [2, 32], strides = [1, 1]} : vector<2x128xf32> to vector<2x32xf32>
    %297 = arith.mulf %294, %261 : vector<2x32xf32>
    %298 = arith.mulf %293, %295 : vector<2x32xf32>
    %299 = arith.addf %297, %298 : vector<2x32xf32>
    %300 = math.tanh %299 : vector<2x32xf32>
    %301 = arith.mulf %296, %300 : vector<2x32xf32>
    %302 = math.tanh %285 : vector<2x128xf32>
    %303 = arith.negf %285 : vector<2x128xf32>
    %304 = math.exp %303 : vector<2x128xf32>
    %cst_60 = arith.constant 1.000000e+00 : f32
    %305 = vector.broadcast %cst_60 : f32 to vector<2x128xf32>
    %306 = arith.addf %305, %304 : vector<2x128xf32>
    %307 = arith.divf %305, %306 : vector<2x128xf32>
    %308 = arith.select %25, %302, %307 : vector<2x128xi1>, vector<2x128xf32>
    %309 = vector.extract_strided_slice %308 {offsets = [0, 0], sizes = [2, 32], strides = [1, 1]} : vector<2x128xf32> to vector<2x32xf32>
    %310 = vector.extract_strided_slice %308 {offsets = [0, 32], sizes = [2, 32], strides = [1, 1]} : vector<2x128xf32> to vector<2x32xf32>
    %311 = vector.extract_strided_slice %308 {offsets = [0, 64], sizes = [2, 32], strides = [1, 1]} : vector<2x128xf32> to vector<2x32xf32>
    %312 = vector.extract_strided_slice %308 {offsets = [0, 96], sizes = [2, 32], strides = [1, 1]} : vector<2x128xf32> to vector<2x32xf32>
    %313 = arith.mulf %310, %277 : vector<2x32xf32>
    %314 = arith.mulf %309, %311 : vector<2x32xf32>
    %315 = arith.addf %313, %314 : vector<2x32xf32>
    %316 = math.tanh %315 : vector<2x32xf32>
    %317 = arith.mulf %312, %316 : vector<2x32xf32>
    %cst_61 = arith.constant dense<0.000000e+00> : vector<2x128xf32>
    %318 = tpu.matmul %301, %1, %cst_61 {dimension_numbers = #tpu.dot_dimension_numbers<[1], [0], [0], [1], [0, 0, 1, 1], [], []>} : vector<2x32xf32>, vector<32x128xf32>, vector<2x128xf32> -> vector<2x128xf32>
    %cst_62 = arith.constant dense<0.000000e+00> : vector<2x128xf32>
    %319 = tpu.matmul %317, %3, %cst_62 {dimension_numbers = #tpu.dot_dimension_numbers<[1], [0], [0], [1], [0, 0, 1, 1], [], []>} : vector<2x32xf32>, vector<32x128xf32>, vector<2x128xf32> -> vector<2x128xf32>
    %320 = arith.addf %318, %319 : vector<2x128xf32>
    %321 = arith.addf %320, %7 : vector<2x128xf32>
    %322 = math.tanh %321 : vector<2x128xf32>
    %323 = arith.negf %321 : vector<2x128xf32>
    %324 = math.exp %323 : vector<2x128xf32>
    %cst_63 = arith.constant 1.000000e+00 : f32
    %325 = vector.broadcast %cst_63 : f32 to vector<2x128xf32>
    %326 = arith.addf %325, %324 : vector<2x128xf32>
    %327 = arith.divf %325, %326 : vector<2x128xf32>
    %328 = arith.select %25, %322, %327 : vector<2x128xi1>, vector<2x128xf32>
    %329 = vector.extract_strided_slice %328 {offsets = [0, 0], sizes = [2, 32], strides = [1, 1]} : vector<2x128xf32> to vector<2x32xf32>
    %330 = vector.extract_strided_slice %328 {offsets = [0, 32], sizes = [2, 32], strides = [1, 1]} : vector<2x128xf32> to vector<2x32xf32>
    %331 = vector.extract_strided_slice %328 {offsets = [0, 64], sizes = [2, 32], strides = [1, 1]} : vector<2x128xf32> to vector<2x32xf32>
    %332 = vector.extract_strided_slice %328 {offsets = [0, 96], sizes = [2, 32], strides = [1, 1]} : vector<2x128xf32> to vector<2x32xf32>
    %333 = arith.mulf %330, %315 : vector<2x32xf32>
    %334 = arith.mulf %329, %331 : vector<2x32xf32>
    %335 = arith.addf %333, %334 : vector<2x32xf32>
    %336 = math.tanh %335 : vector<2x32xf32>
    %337 = arith.mulf %332, %336 : vector<2x32xf32>
    %338 = vector.shape_cast %301 : vector<2x32xf32> to vector<1x2x32xf32>
    %339 = vector.shape_cast %337 : vector<2x32xf32> to vector<1x2x32xf32>
    %340 = tpu.concatenate %338, %339 in 0 : vector<1x2x32xf32>, vector<1x2x32xf32> -> vector<2x2x32xf32>
    %c0_64 = arith.constant 0 : index
    %c0_65 = arith.constant 0 : index
    %c0_66 = arith.constant 0 : index
    %341 = vector.load %arg17[%c0_64, %c0_65, %c0_66] : memref<2x2x32xf32, #tpu.memory_space<vmem>>, vector<2x2x32xf32>
    tpu.vector_store %arg17[%c0_64, %c0_65, %c0_66], %340 {strides = array<i32>} : memref<2x2x32xf32, #tpu.memory_space<vmem>>, vector<2x2x32xf32>,
    %342 = vector.shape_cast %299 : vector<2x32xf32> to vector<1x2x32xf32>
    %343 = vector.shape_cast %335 : vector<2x32xf32> to vector<1x2x32xf32>
    %344 = tpu.concatenate %342, %343 in 0 : vector<1x2x32xf32>, vector<1x2x32xf32> -> vector<2x2x32xf32>
    %c0_67 = arith.constant 0 : index
    %c0_68 = arith.constant 0 : index
    %c0_69 = arith.constant 0 : index
    %345 = vector.load %arg18[%c0_67, %c0_68, %c0_69] : memref<2x2x32xf32, #tpu.memory_space<vmem>>, vector<2x2x32xf32>
    tpu.vector_store %arg18[%c0_67, %c0_68, %c0_69], %344 {strides = array<i32>} : memref<2x2x32xf32, #tpu.memory_space<vmem>>, vector<2x2x32xf32>,
    %346 = vector.shape_cast %301 : vector<2x32xf32> to vector<2x1x32xf32>
    %347 = vector.shape_cast %337 : vector<2x32xf32> to vector<2x1x32xf32>
    %348 = tpu.concatenate %346, %347 in 1 : vector<2x1x32xf32>, vector<2x1x32xf32> -> vector<2x2x32xf32>
    %349 = vector.shape_cast %348 : vector<2x2x32xf32> to vector<4x32xf32>
    %c0_70 = arith.constant 0 : index
    %c0_71 = arith.constant 0 : index
    %c0_72 = arith.constant 0 : index
    %350 = vector.load %arg3[%c0_70, %c0_71, %c0_72] : memref<2x8x32xf32, #tpu.memory_space<vmem>>, vector<2x8x32xf32>
    %c0_73 = arith.constant 0 : index
    %c0_74 = arith.constant 0 : index
    %351 = vector.load %arg10[%c0_73, %c0_74] : memref<32x32xf32, #tpu.memory_space<vmem>>, vector<32x32xf32>
    %cst_75 = arith.constant dense<0.000000e+00> : vector<4x32xf32>
    %352 = tpu.matmul %349, %351, %cst_75 {dimension_numbers = #tpu.dot_dimension_numbers<[1], [0], [0], [1], [0, 0, 1, 1], [], []>} : vector<4x32xf32>, vector<32x32xf32>, vector<4x32xf32> -> vector<4x32xf32>
    %353 = vector.shape_cast %352 : vector<4x32xf32> to vector<2x2x32xf32>
    %cst_76 = arith.constant dense<0.000000e+00> : vector<2x2x8xf32>
    %354 = tpu.matmul %353, %350, %cst_76 {dimension_numbers = #tpu.dot_dimension_numbers<[2], [2], [1], [1], [0, 0, 0, 1, 1, 1], [0], [0]>} : vector<2x2x32xf32>, vector<2x8x32xf32>, vector<2x2x8xf32> -> vector<2x2x8xf32>
    %cst_77 = arith.constant dense<0xFF800000> : vector<2x2xf32>
    %355 = vector.multi_reduction <maximumf>, %354, %cst_77 [2] : vector<2x2x8xf32> to vector<2x2xf32>
    %356 = vector.shape_cast %355 : vector<2x2xf32> to vector<2x2x1xf32>
    %357 = vector.broadcast %356 : vector<2x2x1xf32> to vector<2x2x8xf32>
    %358 = arith.subf %354, %357 : vector<2x2x8xf32>
    %359 = math.exp %358 : vector<2x2x8xf32>
    %cst_78 = arith.constant dense<0.000000e+00> : vector<2x2xf32>
    %360 = vector.multi_reduction <add>, %359, %cst_78 [2] : vector<2x2x8xf32> to vector<2x2xf32>
    %361 = vector.shape_cast %360 : vector<2x2xf32> to vector<2x2x1xf32>
    %362 = tpu.reciprocal %361 {approx = true} : vector<2x2x1xf32> -> vector<2x2x1xf32>
    %363 = vector.broadcast %362 : vector<2x2x1xf32> to vector<2x2x8xf32>
    %364 = arith.mulf %359, %363 : vector<2x2x8xf32>
    %cst_79 = arith.constant dense<0.000000e+00> : vector<2x2x32xf32>
    %365 = tpu.matmul %364, %350, %cst_79 {dimension_numbers = #tpu.dot_dimension_numbers<[2], [1], [1], [2], [0, 0, 0, 1, 1, 2], [0], [0]>} : vector<2x2x8xf32>, vector<2x8x32xf32>, vector<2x2x32xf32> -> vector<2x2x32xf32>
    %366 = vector.shape_cast %365 : vector<2x2x32xf32> to vector<4x32xf32>
    %c0_80 = arith.constant 0 : index
    %c0_81 = arith.constant 0 : index
    %367 = vector.load %arg11[%c0_80, %c0_81] : memref<32x32xf32, #tpu.memory_space<vmem>>, vector<32x32xf32>
    %cst_82 = arith.constant dense<0.000000e+00> : vector<4x32xf32>
    %368 = tpu.matmul %366, %367, %cst_82 {dimension_numbers = #tpu.dot_dimension_numbers<[1], [0], [0], [1], [0, 0, 1, 1], [], []>} : vector<4x32xf32>, vector<32x32xf32>, vector<4x32xf32> -> vector<4x32xf32>
    %c0_83 = arith.constant 0 : index
    %c0_84 = arith.constant 0 : index
    %369 = vector.load %arg12[%c0_83, %c0_84] : memref<32x32xf32, #tpu.memory_space<vmem>>, vector<32x32xf32>
    %cst_85 = arith.constant dense<0.000000e+00> : vector<4x32xf32>
    %370 = tpu.matmul %349, %369, %cst_85 {dimension_numbers = #tpu.dot_dimension_numbers<[1], [0], [0], [1], [0, 0, 1, 1], [], []>} : vector<4x32xf32>, vector<32x32xf32>, vector<4x32xf32> -> vector<4x32xf32>
    %371 = arith.addf %368, %370 : vector<4x32xf32>
    %c0_86 = arith.constant 0 : index
    %c0_87 = arith.constant 0 : index
    %372 = vector.load %arg13[%c0_86, %c0_87] : memref<1x32xf32, #tpu.memory_space<vmem>>, vector<1x32xf32>
    %373 = vector.broadcast %372 : vector<1x32xf32> to vector<4x32xf32>
    %374 = arith.addf %371, %373 : vector<4x32xf32>
    %375 = math.tanh %374 : vector<4x32xf32>
    %c0_88 = arith.constant 0 : index
    %c0_89 = arith.constant 0 : index
    %376 = vector.load %arg14[%c0_88, %c0_89] : memref<32x16xf32, #tpu.memory_space<vmem>>, vector<32x16xf32>
    %cst_90 = arith.constant dense<0.000000e+00> : vector<4x16xf32>
    %377 = tpu.matmul %375, %376, %cst_90 {dimension_numbers = #tpu.dot_dimension_numbers<[1], [0], [0], [1], [0, 0, 1, 1], [], []>} : vector<4x32xf32>, vector<32x16xf32>, vector<4x16xf32> -> vector<4x16xf32>
    %c0_91 = arith.constant 0 : index
    %c0_92 = arith.constant 0 : index
    %378 = vector.load %arg15[%c0_91, %c0_92] : memref<1x16xf32, #tpu.memory_space<vmem>>, vector<1x16xf32>
    %379 = vector.broadcast %378 : vector<1x16xf32> to vector<4x16xf32>
    %380 = arith.addf %377, %379 : vector<4x16xf32>
    %381 = vector.shape_cast %380 : vector<4x16xf32> to vector<2x2x16xf32>
    %c0_93 = arith.constant 0 : index
    %c0_94 = arith.constant 0 : index
    %c0_95 = arith.constant 0 : index
    %382 = vector.load %arg16[%c0_93, %c0_94, %c0_95] : memref<2x2x16xf32, #tpu.memory_space<vmem>>, vector<2x2x16xf32>
    tpu.vector_store %arg16[%c0_93, %c0_94, %c0_95], %381 {strides = array<i32>} : memref<2x2x16xf32, #tpu.memory_space<vmem>>, vector<2x2x16xf32>,
    return
  }
}

</mosaic_0001>

<llo_original>
// kernel: decoder_forward.1
$region0: #{decoder_forward.1}
  #allocation0 [shape = 'u32[]', space=smem, size = 0x4, offset = 0x4, fixed_abs, tag = 'smem constant byte address 0x4 - core index']
  #allocation1 [shape = 'u32[144,128]{1,0:T(1,128)}', space=vmem, size = 0x12000, scoped, tag = 'internal scratch']
  %s0 = inlined_call_operand.vmem [shape: f32[16,16], index: 0, kind: input, shape index: {}]
  %s1 = inlined_call_operand.vmem [shape: f32[2,2,32], index: 1, kind: input, shape index: {}]
  %s2 = inlined_call_operand.vmem [shape: f32[2,2,32], index: 2, kind: input, shape index: {}]
  %s3 = inlined_call_operand.vmem [shape: f32[2,8,32], index: 3, kind: input, shape index: {}]
  %s4 = inlined_call_operand.vmem [shape: f32[16,128], index: 4, kind: input, shape index: {}]
  %s5 = inlined_call_operand.vmem [shape: f32[32,128], index: 5, kind: input, shape index: {}]
  %s6 = inlined_call_operand.vmem [shape: f32[1,128], index: 6, kind: input, shape index: {}]
  %s7 = inlined_call_operand.vmem [shape: f32[32,128], index: 7, kind: input, shape index: {}]
  %s8 = inlined_call_operand.vmem [shape: f32[32,128], index: 8, kind: input, shape index: {}]
  %s9 = inlined_call_operand.vmem [shape: f32[1,128], index: 9, kind: input, shape index: {}]
  %s10 = inlined_call_operand.vmem [shape: f32[32,32], index: 10, kind: input, shape index: {}]
  %s11 = inlined_call_operand.vmem [shape: f32[32,32], index: 11, kind: input, shape index: {}]
  %s12 = inlined_call_operand.vmem [shape: f32[32,32], index: 12, kind: input, shape index: {}]
  %s13 = inlined_call_operand.vmem [shape: f32[1,32], index: 13, kind: input, shape index: {}]
  %s14 = inlined_call_operand.vmem [shape: f32[32,16], index: 14, kind: input, shape index: {}]
  %s15 = inlined_call_operand.vmem [shape: f32[1,16], index: 15, kind: input, shape index: {}]
  %s16 = inlined_call_operand.hbm [shape: f32[2,2,16], index: 16, kind: output, shape index: {0}]
  %s17 = inlined_call_operand.hbm [shape: f32[2,2,32], index: 17, kind: output, shape index: {1}]
  %s18 = inlined_call_operand.hbm [shape: f32[2,2,32], index: 18, kind: output, shape index: {2}]
  %19 = xla_tuple %s16, %s17, %s18
  %s20 = sld [smem:[#allocation0]]
  $region90: #{decoder_forward.1} parent=0
    _
  %s22 = ssub.s32 1, %s20
  %s23 = scalar_select 0, %s22, %s20
  $region1: #{decoder_forward.1} parent=0
    #allocation2 [shape = 'u8[2048]{0}', space=vmem, size = 0x800, scoped, tag = 'output window, operand 0, single buffered']
    #allocation3 [shape = 's32[1]{0}', space=sflag, size = 0x4, scoped, tag = 'scoped memory for decoder_forward.1']
    #allocation4 [shape = 'u8[2048]{0}', space=vmem, size = 0x800, scoped, tag = 'output window, operand 1, single buffered']
    #allocation5 [shape = 's32[1]{0}', space=sflag, size = 0x4, scoped, tag = 'scoped memory for decoder_forward.1']
    #allocation6 [shape = 'u8[2048]{0}', space=vmem, size = 0x800, scoped, tag = 'output window, operand 2, single buffered']
    %24 = vsyncpa [#allocation3], 0
    %25 = vsyncpa [#allocation5], 0
    // Predicated region
    $region2: #{decoder_forward.1} parent=1 // pred_check
      _
    $region3: #{decoder_forward.1} parent=1 // pred_check_branch
      %27 = sbr.rel (0) target = $region5
    $region4: #{decoder_forward.1} parent=1 // pred_region
      _
    $region5: #{decoder_forward.1} parent=1 // pred_fallthru
      _
    // Predicated region
    $region6: #{decoder_forward.1} parent=1 // pred_check
      _
    $region7: #{decoder_forward.1} parent=1 // pred_check_branch
      %29 = sbr.rel (0) target = $region9
    $region8: #{decoder_forward.1} parent=1 // pred_region
      _
    $region9: #{decoder_forward.1} parent=1 // pred_fallthru
      _
    // Predicated region
    $region10: #{decoder_forward.1} parent=1 // pred_check
      _
    $region11: #{decoder_forward.1} parent=1 // pred_check_branch
      %31 = sbr.rel (0) target = $region13
    $region12: #{decoder_forward.1} parent=1 // pred_region
      _
    $region13: #{decoder_forward.1} parent=1 // pred_fallthru
      _
    // Predicated region
    $region14: #{decoder_forward.1} parent=1 // pred_check
      _
    $region15: #{decoder_forward.1} parent=1 // pred_check_branch
      %33 = sbr.rel (0) target = $region17
    $region16: #{decoder_forward.1} parent=1 // pred_region
      _
    $region17: #{decoder_forward.1} parent=1 // pred_fallthru
      _
    // Predicated region
    $region18: #{decoder_forward.1} parent=1 // pred_check
      _
    $region19: #{decoder_forward.1} parent=1 // pred_check_branch
      %35 = sbr.rel (0) target = $region21
    $region20: #{decoder_forward.1} parent=1 // pred_region
      _
    $region21: #{decoder_forward.1} parent=1 // pred_fallthru
      _
    // Predicated region
    $region22: #{decoder_forward.1} parent=1 // pred_check
      _
    $region23: #{decoder_forward.1} parent=1 // pred_check_branch
      %37 = sbr.rel (0) target = $region25
    $region24: #{decoder_forward.1} parent=1 // pred_region
      _
    $region25: #{decoder_forward.1} parent=1 // pred_fallthru
      _
    // Predicated region
    $region26: #{decoder_forward.1} parent=1 // pred_check
      _
    $region27: #{decoder_forward.1} parent=1 // pred_check_branch
      %39 = sbr.rel (0) target = $region29
    $region28: #{decoder_forward.1} parent=1 // pred_region
      _
    $region29: #{decoder_forward.1} parent=1 // pred_fallthru
      _
    // Predicated region
    $region30: #{decoder_forward.1} parent=1 // pred_check
      _
    $region31: #{decoder_forward.1} parent=1 // pred_check_branch
      %41 = sbr.rel (0) target = $region33
    $region32: #{decoder_forward.1} parent=1 // pred_region
      _
    $region33: #{decoder_forward.1} parent=1 // pred_fallthru
      _
    // Predicated region
    $region34: #{decoder_forward.1} parent=1 // pred_check
      _
    $region35: #{decoder_forward.1} parent=1 // pred_check_branch
      %43 = sbr.rel (0) target = $region37
    $region36: #{decoder_forward.1} parent=1 // pred_region
      _
    $region37: #{decoder_forward.1} parent=1 // pred_fallthru
      _
    // Predicated region
    $region38: #{decoder_forward.1} parent=1 // pred_check
      _
    $region39: #{decoder_forward.1} parent=1 // pred_check_branch
      %45 = sbr.rel (0) target = $region41
    $region40: #{decoder_forward.1} parent=1 // pred_region
      _
    $region41: #{decoder_forward.1} parent=1 // pred_fallthru
      _
    // Predicated region
    $region42: #{decoder_forward.1} parent=1 // pred_check
      _
    $region43: #{decoder_forward.1} parent=1 // pred_check_branch
      %47 = sbr.rel (0) target = $region45
    $region44: #{decoder_forward.1} parent=1 // pred_region
      _
    $region45: #{decoder_forward.1} parent=1 // pred_fallthru
      _
    // Predicated region
    $region46: #{decoder_forward.1} parent=1 // pred_check
      _
    $region47: #{decoder_forward.1} parent=1 // pred_check_branch
      %49 = sbr.rel (0) target = $region49
    $region48: #{decoder_forward.1} parent=1 // pred_region
      _
    $region49: #{decoder_forward.1} parent=1 // pred_fallthru
      _
    // Predicated region
    $region50: #{decoder_forward.1} parent=1 // pred_check
      _
    $region51: #{decoder_forward.1} parent=1 // pred_check_branch
      %51 = sbr.rel (0) target = $region53
    $region52: #{decoder_forward.1} parent=1 // pred_region
      _
    $region53: #{decoder_forward.1} parent=1 // pred_fallthru
      _
    // Predicated region
    $region54: #{decoder_forward.1} parent=1 // pred_check
      _
    $region55: #{decoder_forward.1} parent=1 // pred_check_branch
      %53 = sbr.rel (0) target = $region57
    $region56: #{decoder_forward.1} parent=1 // pred_region
      _
    $region57: #{decoder_forward.1} parent=1 // pred_fallthru
      _
    // Predicated region
    $region58: #{decoder_forward.1} parent=1 // pred_check
      _
    $region59: #{decoder_forward.1} parent=1 // pred_check_branch
      %55 = sbr.rel (0) target = $region61
    $region60: #{decoder_forward.1} parent=1 // pred_region
      _
    $region61: #{decoder_forward.1} parent=1 // pred_fallthru
      _
    // Predicated region
    $region62: #{decoder_forward.1} parent=1 // pred_check
      _
    $region63: #{decoder_forward.1} parent=1 // pred_check_branch
      %57 = sbr.rel (0) target = $region65
    $region64: #{decoder_forward.1} parent=1 // pred_region
      _
    $region65: #{decoder_forward.1} parent=1 // pred_fallthru
      _
    %v58 = vld [vmem:[%s4] sm:$0xff]
    %v59 = vld [vmem:[%s4 + $0x8] sm:$0xff]
    %v60 = vld [vmem:[%s7] sm:$0xff]
    %v61 = vld [vmem:[%s7 + $0x8] sm:$0xff]
    %v62 = vld [vmem:[%s7 + $0x10] sm:$0xff]
    %v63 = vld [vmem:[%s7 + $0x18] sm:$0xff]
    %v64 = vld [vmem:[%s5] sm:$0xff]
    %v65 = vld [vmem:[%s5 + $0x8] sm:$0xff]
    %v66 = vld [vmem:[%s5 + $0x10] sm:$0xff]
    %v67 = vld [vmem:[%s5 + $0x18] sm:$0xff]
    %v68 = vld [vmem:[%s8] sm:$0xff]
    %v69 = vld [vmem:[%s8 + $0x8] sm:$0xff]
    %v70 = vld [vmem:[%s8 + $0x10] sm:$0xff]
    %v71 = vld [vmem:[%s8 + $0x18] sm:$0xff]
    %v72 = vld [vmem:[%s6] sm:$0x1]
    %v73 = vld [vmem:[%s9] sm:$0x1]
    %v75 = vlaneseq
    %v76 = vshrl.u32 %v75, 7
    %v77 = vsub.s32 0, %v76
    %v78 = vrot.slane %v73, %v77
    %v80 = vld [vmem:[%s0] sm:$0xff]
    %v81 = vld [vmem:[%s0 + $0x8] sm:$0xff]
    %v83 = vlaneseq
    %v84 = vshrl.u32 %v83, 7
    %v85 = vsub.s32 0, %v84
    %v86 = vrot.slane %v72, %v85
    %vm88 = vcmask 130048
    %v90 = vsel %vm88, %v80, 0
    %v93 = vsel %vm88, %v81, 0
    %95 = vmatprep.subr.mxu0 0.0
    %96 = vmatpush1.msra.mxu0 %v58
    %97 = vmatprep.subr.mxu0 0.0
    %98 = vmatpush1.msra.mxu0 %v59
    %99 = vmatprep.subr.mxu0 0.0
    %100 = vmatpush1.msra.mxu0 0.0
    %101 = vmatprep.subr.mxu0 0.0
    %102 = vmatpush1.msra.mxu0 0.0
    %103 = vmatprep.subr.mxu0 0.0
    %104 = vmatpush1.msra.mxu0 0.0
    %105 = vmatprep.subr.mxu0 0.0
    %106 = vmatpush1.msra.mxu0 0.0
    %107 = vmatprep.subr.mxu0 0.0
    %108 = vmatpush1.msra.mxu0 0.0
    %109 = vmatprep.subr.mxu0 0.0
    %110 = vmatpush1.msra.mxu0 0.0
    %111 = vmatprep.subr.mxu0 0.0
    %112 = vmatpush1.msra.mxu0 0.0
    %113 = vmatprep.subr.mxu0 0.0
    %114 = vmatpush1.msra.mxu0 0.0
    %115 = vmatprep.subr.mxu0 0.0
    %116 = vmatpush1.msra.mxu0 0.0
    %117 = vmatprep.subr.mxu0 0.0
    %118 = vmatpush1.msra.mxu0 0.0
    %119 = vmatprep.subr.mxu0 0.0
    %120 = vmatpush1.msra.mxu0 0.0
    %121 = vmatprep.subr.mxu0 0.0
    %122 = vmatpush1.msra.mxu0 0.0
    %123 = vmatprep.subr.mxu0 0.0
    %124 = vmatpush1.msra.mxu0 0.0
    %125 = vmatprep.subr.mxu0 0.0
    %126 = vmatpush1.msra.mxu0 0.0
    %127 = vmatprep.subr.mxu0 0.0
    %128 = vmatpush1.msra.mxu0 0.0
    %129 = vmatprep.subr.mxu0 0.0
    %130 = vmatpush1.msra.mxu0 0.0
    %131 = vmatprep.subr.mxu0 0.0
    %132 = vmatpush1.msra.mxu0 0.0
    %133 = vmatprep.subr.mxu0 0.0
    %134 = vmatpush1.msra.mxu0 0.0
    %135 = vmatprep.subr.mxu0 0.0
    %136 = vmatpush1.msra.mxu0 0.0
    %137 = vmatprep.subr.mxu0 0.0
    %138 = vmatpush1.msra.mxu0 0.0
    %139 = vmatprep.subr.mxu0 0.0
    %140 = vmatpush1.msra.mxu0 0.0
    %141 = vmatprep.subr.mxu0 0.0
    %142 = vmatpush1.msra.mxu0 0.0
    %143 = vmatprep.subr.mxu0 0.0
    %144 = vmatpush1.msra.mxu0 0.0
    %145 = vmatprep.subr.mxu0 0.0
    %146 = vmatpush1.msra.mxu0 0.0
    %147 = vmatprep.subr.mxu0 0.0
    %148 = vmatpush1.msra.mxu0 0.0
    %149 = vmatprep.subr.mxu0 0.0
    %150 = vmatpush1.msra.mxu0 0.0
    %151 = vmatprep.subr.mxu0 0.0
    %152 = vmatpush1.msra.mxu0 0.0
    %153 = vmatprep.subr.mxu0 0.0
    %154 = vmatpush1.msra.mxu0 0.0
    %155 = vmatprep.subr.mxu0 0.0
    %156 = vmatpush1.msra.mxu0 0.0
    %157 = vmatprep.subr.mxu0 0.0
    %158 = vmatpush1.msra.mxu0 0.0
    %159 = vmatprep.mubr.f32.mxu0 0.0
    %160 = vmatmul.mubr.f32.gmra.mrb[0].mxu0 %v90
    %v161 = vpop.f32.mrb[0].mxu0
    %v162 = vadd.f32 %v86, %v161
    %v163 = vpop.f32.mrb[0].mxu0
    %164 = vmatprep.mubr.f32.mxu0 0.0
    %165 = vmatmul.mubr.f32.gmra.mrb[0].mxu0 %v93
    %v166 = vpop.f32.mrb[0].mxu0
    %v167 = vadd.f32 %v86, %v166
    %v168 = vpop.f32.mrb[0].mxu0
    %169 = vdwg.mxu0
    %v170 = vlaneseq
    %v171 = vand.u32 %v170, 127
    %vm172 = vcmp.ge.s32.totalorder %v171, 64
    %vm173 = vcmp.lt.s32.totalorder %v171, 96
    %vm174 = vmand %vm172, %vm173
    %v175 = vld [vmem:[%s1] sm:$0x3]
    %s176 = scalar_lea.vmem %s1, 2
    %v177 = vld [vmem:[%s176] sm:$0x3]
    %v178 = vld [vmem:[%s2] sm:$0x3]
    %s179 = scalar_lea.vmem %s2, 2
    %v180 = vld [vmem:[%s179] sm:$0x3]
    %vm181 = vcmask 261120
    %v183 = vsel %vm181, %v175, 0
    %185 = vmatprep.subr.mxu0 0.0
    %186 = vmatpush1.msra.mxu0 %v64
    %187 = vmatprep.subr.mxu0 0.0
    %188 = vmatpush1.msra.mxu0 %v65
    %189 = vmatprep.subr.mxu0 0.0
    %190 = vmatpush1.msra.mxu0 %v66
    %191 = vmatprep.subr.mxu0 0.0
    %192 = vmatpush1.msra.mxu0 %v67
    %193 = vmatprep.subr.mxu0 0.0
    %194 = vmatpush1.msra.mxu0 0.0
    %195 = vmatprep.subr.mxu0 0.0
    %196 = vmatpush1.msra.mxu0 0.0
    %197 = vmatprep.subr.mxu0 0.0
    %198 = vmatpush1.msra.mxu0 0.0
    %199 = vmatprep.subr.mxu0 0.0
    %200 = vmatpush1.msra.mxu0 0.0
    %201 = vmatprep.subr.mxu0 0.0
    %202 = vmatpush1.msra.mxu0 0.0
    %203 = vmatprep.subr.mxu0 0.0
    %204 = vmatpush1.msra.mxu0 0.0
    %205 = vmatprep.subr.mxu0 0.0
    %206 = vmatpush1.msra.mxu0 0.0
    %207 = vmatprep.subr.mxu0 0.0
    %208 = vmatpush1.msra.mxu0 0.0
    %209 = vmatprep.subr.mxu0 0.0
    %210 = vmatpush1.msra.mxu0 0.0
    %211 = vmatprep.subr.mxu0 0.0
    %212 = vmatpush1.msra.mxu0 0.0
    %213 = vmatprep.subr.mxu0 0.0
    %214 = vmatpush1.msra.mxu0 0.0
    %215 = vmatprep.subr.mxu0 0.0
    %216 = vmatpush1.msra.mxu0 0.0
    %217 = vmatprep.subr.mxu0 0.0
    %218 = vmatpush1.msra.mxu0 0.0
    %219 = vmatprep.subr.mxu0 0.0
    %220 = vmatpush1.msra.mxu0 0.0
    %221 = vmatprep.subr.mxu0 0.0
    %222 = vmatpush1.msra.mxu0 0.0
    %223 = vmatprep.subr.mxu0 0.0
    %224 = vmatpush1.msra.mxu0 0.0
    %225 = vmatprep.subr.mxu0 0.0
    %226 = vmatpush1.msra.mxu0 0.0
    %227 = vmatprep.subr.mxu0 0.0
    %228 = vmatpush1.msra.mxu0 0.0
    %229 = vmatprep.subr.mxu0 0.0
    %230 = vmatpush1.msra.mxu0 0.0
    %231 = vmatprep.subr.mxu0 0.0
    %232 = vmatpush1.msra.mxu0 0.0
    %233 = vmatprep.subr.mxu0 0.0
    %234 = vmatpush1.msra.mxu0 0.0
    %235 = vmatprep.subr.mxu0 0.0
    %236 = vmatpush1.msra.mxu0 0.0
    %237 = vmatprep.subr.mxu0 0.0
    %238 = vmatpush1.msra.mxu0 0.0
    %239 = vmatprep.subr.mxu0 0.0
    %240 = vmatpush1.msra.mxu0 0.0
    %241 = vmatprep.subr.mxu0 0.0
    %242 = vmatpush1.msra.mxu0 0.0
    %243 = vmatprep.subr.mxu0 0.0
    %244 = vmatpush1.msra.mxu0 0.0
    %245 = vmatprep.subr.mxu0 0.0
    %246 = vmatpush1.msra.mxu0 0.0
    %247 = vmatprep.subr.mxu0 0.0
    %248 = vmatpush1.msra.mxu0 0.0
    %249 = vmatprep.mubr.f32.mxu0 0.0
    %250 = vmatmul.mubr.f32.gmra.mrb[0].mxu0 %v183
    %v251 = vpop.f32.mrb[0].mxu0
    %v252 = vadd.f32 0.0, %v251
    %v253 = vpop.f32.mrb[0].mxu0
    %254 = vdwg.mxu0
    %v255 = vadd.f32 %v162, %v252
    %v256 = vtanh.pop %v255
    %v257 = vxor.u32 %v255, 2147483648
    %v258 = vmul.f32 %v257, 1.442695
    %v259 = vpow.pop %v258
    %v260 = vadd.f32 %v259, 1.0
    %v261 = vrcp.pop %v260
    %v262 = vmul.f32 1.0, %v261
    %v263 = vsel %vm174, %v256, %v262
    %265 = vrot.lane.b32.xlu0 %v178, 32
    %v266 = vpop.permute.xlu0 %265
    %v268 = vmul.f32 %v263, %v266
    %270 = vrot.lane.b32.xlu0 %v263, 64
    %v271 = vpop.permute.xlu0 %270
    %v273 = vmul.f32 %v263, %v271
    %275 = vrot.lane.b32.xlu0 %v273, 32
    %v276 = vpop.permute.xlu0 %275
    %v278 = vadd.f32 %v268, %v276
    %v279 = vtanh.pop %v278
    %281 = vrot.lane.b32.xlu0 %v279, 64
    %v282 = vpop.permute.xlu0 %281
    %v284 = vmul.f32 %v263, %v282
    %286 = vrot.lane.b32.xlu0 %v284, 32
    %v287 = vpop.permute.xlu0 %286
    %v288 = vsel %vm181, %v287, 0
    %290 = vmatprep.subr.mxu0 0.0
    %291 = vmatpush1.msra.mxu0 %v64
    %292 = vmatprep.subr.mxu0 0.0
    %293 = vmatpush1.msra.mxu0 %v65
    %294 = vmatprep.subr.mxu0 0.0
    %295 = vmatpush1.msra.mxu0 %v66
    %296 = vmatprep.subr.mxu0 0.0
    %297 = vmatpush1.msra.mxu0 %v67
    %298 = vmatprep.subr.mxu0 0.0
    %299 = vmatpush1.msra.mxu0 0.0
    %300 = vmatprep.subr.mxu0 0.0
    %301 = vmatpush1.msra.mxu0 0.0
    %302 = vmatprep.subr.mxu0 0.0
    %303 = vmatpush1.msra.mxu0 0.0
    %304 = vmatprep.subr.mxu0 0.0
    %305 = vmatpush1.msra.mxu0 0.0
    %306 = vmatprep.subr.mxu0 0.0
    %307 = vmatpush1.msra.mxu0 0.0
    %308 = vmatprep.subr.mxu0 0.0
    %309 = vmatpush1.msra.mxu0 0.0
    %310 = vmatprep.subr.mxu0 0.0
    %311 = vmatpush1.msra.mxu0 0.0
    %312 = vmatprep.subr.mxu0 0.0
    %313 = vmatpush1.msra.mxu0 0.0
    %314 = vmatprep.subr.mxu0 0.0
    %315 = vmatpush1.msra.mxu0 0.0
    %316 = vmatprep.subr.mxu0 0.0
    %317 = vmatpush1.msra.mxu0 0.0
    %318 = vmatprep.subr.mxu0 0.0
    %319 = vmatpush1.msra.mxu0 0.0
    %320 = vmatprep.subr.mxu0 0.0
    %321 = vmatpush1.msra.mxu0 0.0
    %322 = vmatprep.subr.mxu0 0.0
    %323 = vmatpush1.msra.mxu0 0.0
    %324 = vmatprep.subr.mxu0 0.0
    %325 = vmatpush1.msra.mxu0 0.0
    %326 = vmatprep.subr.mxu0 0.0
    %327 = vmatpush1.msra.mxu0 0.0
    %328 = vmatprep.subr.mxu0 0.0
    %329 = vmatpush1.msra.mxu0 0.0
    %330 = vmatprep.subr.mxu0 0.0
    %331 = vmatpush1.msra.mxu0 0.0
    %332 = vmatprep.subr.mxu0 0.0
    %333 = vmatpush1.msra.mxu0 0.0
    %334 = vmatprep.subr.mxu0 0.0
    %335 = vmatpush1.msra.mxu0 0.0
    %336 = vmatprep.subr.mxu0 0.0
    %337 = vmatpush1.msra.mxu0 0.0
    %338 = vmatprep.subr.mxu0 0.0
    %339 = vmatpush1.msra.mxu0 0.0
    %340 = vmatprep.subr.mxu0 0.0
    %341 = vmatpush1.msra.mxu0 0.0
    %342 = vmatprep.subr.mxu0 0.0
    %343 = vmatpush1.msra.mxu0 0.0
    %344 = vmatprep.subr.mxu0 0.0
    %345 = vmatpush1.msra.mxu0 0.0
    %346 = vmatprep.subr.mxu0 0.0
    %347 = vmatpush1.msra.mxu0 0.0
    %348 = vmatprep.subr.mxu0 0.0
    %349 = vmatpush1.msra.mxu0 0.0
    %350 = vmatprep.subr.mxu0 0.0
    %351 = vmatpush1.msra.mxu0 0.0
    %352 = vmatprep.subr.mxu0 0.0
    %353 = vmatpush1.msra.mxu0 0.0
    %354 = vmatprep.mubr.f32.mxu0 0.0
    %355 = vmatmul.mubr.f32.gmra.mrb[0].mxu0 %v288
    %v356 = vpop.f32.mrb[0].mxu0
    %v357 = vadd.f32 0.0, %v356
    %v358 = vpop.f32.mrb[0].mxu0
    %359 = vdwg.mxu0
    %v361 = vrot.slane %v357, 6
    %v363 = vadd.f32 %v162, %v361
    %v365 = vsel %vm181, %v177, 0
    %367 = vmatprep.subr.mxu0 0.0
    %368 = vmatpush1.msra.mxu0 %v68
    %369 = vmatprep.subr.mxu0 0.0
    %370 = vmatpush1.msra.mxu0 %v69
    %371 = vmatprep.subr.mxu0 0.0
    %372 = vmatpush1.msra.mxu0 %v70
    %373 = vmatprep.subr.mxu0 0.0
    %374 = vmatpush1.msra.mxu0 %v71
    %375 = vmatprep.subr.mxu0 0.0
    %376 = vmatpush1.msra.mxu0 0.0
    %377 = vmatprep.subr.mxu0 0.0
    %378 = vmatpush1.msra.mxu0 0.0
    %379 = vmatprep.subr.mxu0 0.0
    %380 = vmatpush1.msra.mxu0 0.0
    %381 = vmatprep.subr.mxu0 0.0
    %382 = vmatpush1.msra.mxu0 0.0
    %383 = vmatprep.subr.mxu0 0.0
    %384 = vmatpush1.msra.mxu0 0.0
    %385 = vmatprep.subr.mxu0 0.0
    %386 = vmatpush1.msra.mxu0 0.0
    %387 = vmatprep.subr.mxu0 0.0
    %388 = vmatpush1.msra.mxu0 0.0
    %389 = vmatprep.subr.mxu0 0.0
    %390 = vmatpush1.msra.mxu0 0.0
    %391 = vmatprep.subr.mxu0 0.0
    %392 = vmatpush1.msra.mxu0 0.0
    %393 = vmatprep.subr.mxu0 0.0
    %394 = vmatpush1.msra.mxu0 0.0
    %395 = vmatprep.subr.mxu0 0.0
    %396 = vmatpush1.msra.mxu0 0.0
    %397 = vmatprep.subr.mxu0 0.0
    %398 = vmatpush1.msra.mxu0 0.0
    %399 = vmatprep.subr.mxu0 0.0
    %400 = vmatpush1.msra.mxu0 0.0
    %401 = vmatprep.subr.mxu0 0.0
    %402 = vmatpush1.msra.mxu0 0.0
    %403 = vmatprep.subr.mxu0 0.0
    %404 = vmatpush1.msra.mxu0 0.0
    %405 = vmatprep.subr.mxu0 0.0
    %406 = vmatpush1.msra.mxu0 0.0
    %407 = vmatprep.subr.mxu0 0.0
    %408 = vmatpush1.msra.mxu0 0.0
    %409 = vmatprep.subr.mxu0 0.0
    %410 = vmatpush1.msra.mxu0 0.0
    %411 = vmatprep.subr.mxu0 0.0
    %412 = vmatpush1.msra.mxu0 0.0
    %413 = vmatprep.subr.mxu0 0.0
    %414 = vmatpush1.msra.mxu0 0.0
    %415 = vmatprep.subr.mxu0 0.0
    %416 = vmatpush1.msra.mxu0 0.0
    %417 = vmatprep.subr.mxu0 0.0
    %418 = vmatpush1.msra.mxu0 0.0
    %419 = vmatprep.subr.mxu0 0.0
    %420 = vmatpush1.msra.mxu0 0.0
    %421 = vmatprep.subr.mxu0 0.0
    %422 = vmatpush1.msra.mxu0 0.0
    %423 = vmatprep.subr.mxu0 0.0
    %424 = vmatpush1.msra.mxu0 0.0
    %425 = vmatprep.subr.mxu0 0.0
    %426 = vmatpush1.msra.mxu0 0.0
    %427 = vmatprep.subr.mxu0 0.0
    %428 = vmatpush1.msra.mxu0 0.0
    %429 = vmatprep.subr.mxu0 0.0
    %430 = vmatpush1.msra.mxu0 0.0
    %431 = vmatprep.mubr.f32.mxu0 0.0
    %432 = vmatmul.mubr.f32.gmra.mrb[0].mxu0 %v365
    %v433 = vpop.f32.mrb[0].mxu0
    %v434 = vadd.f32 0.0, %v433
    %v435 = vpop.f32.mrb[0].mxu0
    %436 = vdwg.mxu0
    %437 = vmatprep.subr.mxu0 0.0
    %438 = vmatpush1.msra.mxu0 %v60
    %439 = vmatprep.subr.mxu0 0.0
    %440 = vmatpush1.msra.mxu0 %v61
    %441 = vmatprep.subr.mxu0 0.0
    %442 = vmatpush1.msra.mxu0 %v62
    %443 = vmatprep.subr.mxu0 0.0
    %444 = vmatpush1.msra.mxu0 %v63
    %445 = vmatprep.subr.mxu0 0.0
    %446 = vmatpush1.msra.mxu0 0.0
    %447 = vmatprep.subr.mxu0 0.0
    %448 = vmatpush1.msra.mxu0 0.0
    %449 = vmatprep.subr.mxu0 0.0
    %450 = vmatpush1.msra.mxu0 0.0
    %451 = vmatprep.subr.mxu0 0.0
    %452 = vmatpush1.msra.mxu0 0.0
    %453 = vmatprep.subr.mxu0 0.0
    %454 = vmatpush1.msra.mxu0 0.0
    %455 = vmatprep.subr.mxu0 0.0
    %456 = vmatpush1.msra.mxu0 0.0
    %457 = vmatprep.subr.mxu0 0.0
    %458 = vmatpush1.msra.mxu0 0.0
    %459 = vmatprep.subr.mxu0 0.0
    %460 = vmatpush1.msra.mxu0 0.0
    %461 = vmatprep.subr.mxu0 0.0
    %462 = vmatpush1.msra.mxu0 0.0
    %463 = vmatprep.subr.mxu0 0.0
    %464 = vmatpush1.msra.mxu0 0.0
    %465 = vmatprep.subr.mxu0 0.0
    %466 = vmatpush1.msra.mxu0 0.0
    %467 = vmatprep.subr.mxu0 0.0
    %468 = vmatpush1.msra.mxu0 0.0
    %469 = vmatprep.subr.mxu0 0.0
    %470 = vmatpush1.msra.mxu0 0.0
    %471 = vmatprep.subr.mxu0 0.0
    %472 = vmatpush1.msra.mxu0 0.0
    %473 = vmatprep.subr.mxu0 0.0
    %474 = vmatpush1.msra.mxu0 0.0
    %475 = vmatprep.subr.mxu0 0.0
    %476 = vmatpush1.msra.mxu0 0.0
    %477 = vmatprep.subr.mxu0 0.0
    %478 = vmatpush1.msra.mxu0 0.0
    %479 = vmatprep.subr.mxu0 0.0
    %480 = vmatpush1.msra.mxu0 0.0
    %481 = vmatprep.subr.mxu0 0.0
    %482 = vmatpush1.msra.mxu0 0.0
    %483 = vmatprep.subr.mxu0 0.0
    %484 = vmatpush1.msra.mxu0 0.0
    %485 = vmatprep.subr.mxu0 0.0
    %486 = vmatpush1.msra.mxu0 0.0
    %487 = vmatprep.subr.mxu0 0.0
    %488 = vmatpush1.msra.mxu0 0.0
    %489 = vmatprep.subr.mxu0 0.0
    %490 = vmatpush1.msra.mxu0 0.0
    %491 = vmatprep.subr.mxu0 0.0
    %492 = vmatpush1.msra.mxu0 0.0
    %493 = vmatprep.subr.mxu0 0.0
    %494 = vmatpush1.msra.mxu0 0.0
    %495 = vmatprep.subr.mxu0 0.0
    %496 = vmatpush1.msra.mxu0 0.0
    %497 = vmatprep.subr.mxu0 0.0
    %498 = vmatpush1.msra.mxu0 0.0
    %499 = vmatprep.subr.mxu0 0.0
    %500 = vmatpush1.msra.mxu0 0.0
    %501 = vmatprep.mubr.f32.mxu0 0.0
    %502 = vmatmul.mubr.f32.gmra.mrb[0].mxu0 %v288
    %v503 = vpop.f32.mrb[0].mxu0
    %v504 = vadd.f32 %v434, %v503
    %v505 = vpop.f32.mrb[0].mxu0
    %506 = vdwg.mxu0
    %v507 = vadd.f32 %v504, %v78
    %v508 = vtanh.pop %v363
    %v509 = vxor.u32 %v363, 2147483648
    %v510 = vmul.f32 %v509, 1.442695
    %v511 = vpow.pop %v510
    %v512 = vadd.f32 %v511, 1.0
    %v513 = vrcp.pop %v512
    %v514 = vmul.f32 1.0, %v513
    %v515 = vsel %vm174, %v508, %v514
    %v517 = vrot.slane %v278, 6
    %v519 = vmul.f32 %v515, %v517
    %521 = vrot.lane.b32.xlu0 %v515, 64
    %v522 = vpop.permute.xlu0 %521
    %v524 = vmul.f32 %v515, %v522
    %526 = vrot.lane.b32.xlu0 %v524, 32
    %v527 = vpop.permute.xlu0 %526
    %v529 = vadd.f32 %v519, %v527
    %v530 = vtanh.pop %v529
    %532 = vrot.lane.b32.xlu0 %v530, 64
    %v533 = vpop.permute.xlu0 %532
    %v535 = vmul.f32 %v515, %v533
    %v536 = vtanh.pop %v507
    %v537 = vxor.u32 %v507, 2147483648
    %v538 = vmul.f32 %v537, 1.442695
    %v539 = vpow.pop %v538
    %v540 = vadd.f32 %v539, 1.0
    %v541 = vrcp.pop %v540
    %v542 = vmul.f32 1.0, %v541
    %v543 = vsel %vm174, %v536, %v542
    %545 = vrot.lane.b32.xlu0 %v180, 32
    %v546 = vpop.permute.xlu0 %545
    %v548 = vmul.f32 %v543, %v546
    %550 = vrot.lane.b32.xlu0 %v543, 64
    %v551 = vpop.permute.xlu0 %550
    %v553 = vmul.f32 %v543, %v551
    %555 = vrot.lane.b32.xlu0 %v553, 32
    %v556 = vpop.permute.xlu0 %555
    %v558 = vadd.f32 %v548, %v556
    %v559 = vtanh.pop %v558
    %561 = vrot.lane.b32.xlu0 %v559, 64
    %v562 = vpop.permute.xlu0 %561
    %v564 = vmul.f32 %v543, %v562
    %v566 = vrot.slane %v535, 2
    %567 = vrot.lane.b32.xlu0 %v566, 32
    %v568 = vpop.permute.xlu0 %567
    %v569 = vsel %vm181, %v568, 0
    %571 = vmatprep.subr.mxu0 0.0
    %572 = vmatpush1.msra.mxu0 %v64
    %573 = vmatprep.subr.mxu0 0.0
    %574 = vmatpush1.msra.mxu0 %v65
    %575 = vmatprep.subr.mxu0 0.0
    %576 = vmatpush1.msra.mxu0 %v66
    %577 = vmatprep.subr.mxu0 0.0
    %578 = vmatpush1.msra.mxu0 %v67
    %579 = vmatprep.subr.mxu0 0.0
    %580 = vmatpush1.msra.mxu0 0.0
    %581 = vmatprep.subr.mxu0 0.0
    %582 = vmatpush1.msra.mxu0 0.0
    %583 = vmatprep.subr.mxu0 0.0
    %584 = vmatpush1.msra.mxu0 0.0
    %585 = vmatprep.subr.mxu0 0.0
    %586 = vmatpush1.msra.mxu0 0.0
    %587 = vmatprep.subr.mxu0 0.0
    %588 = vmatpush1.msra.mxu0 0.0
    %589 = vmatprep.subr.mxu0 0.0
    %590 = vmatpush1.msra.mxu0 0.0
    %591 = vmatprep.subr.mxu0 0.0
    %592 = vmatpush1.msra.mxu0 0.0
    %593 = vmatprep.subr.mxu0 0.0
    %594 = vmatpush1.msra.mxu0 0.0
    %595 = vmatprep.subr.mxu0 0.0
    %596 = vmatpush1.msra.mxu0 0.0
    %597 = vmatprep.subr.mxu0 0.0
    %598 = vmatpush1.msra.mxu0 0.0
    %599 = vmatprep.subr.mxu0 0.0
    %600 = vmatpush1.msra.mxu0 0.0
    %601 = vmatprep.subr.mxu0 0.0
    %602 = vmatpush1.msra.mxu0 0.0
    %603 = vmatprep.subr.mxu0 0.0
    %604 = vmatpush1.msra.mxu0 0.0
    %605 = vmatprep.subr.mxu0 0.0
    %606 = vmatpush1.msra.mxu0 0.0
    %607 = vmatprep.subr.mxu0 0.0
    %608 = vmatpush1.msra.mxu0 0.0
    %609 = vmatprep.subr.mxu0 0.0
    %610 = vmatpush1.msra.mxu0 0.0
    %611 = vmatprep.subr.mxu0 0.0
    %612 = vmatpush1.msra.mxu0 0.0
    %613 = vmatprep.subr.mxu0 0.0
    %614 = vmatpush1.msra.mxu0 0.0
    %615 = vmatprep.subr.mxu0 0.0
    %616 = vmatpush1.msra.mxu0 0.0
    %617 = vmatprep.subr.mxu0 0.0
    %618 = vmatpush1.msra.mxu0 0.0
    %619 = vmatprep.subr.mxu0 0.0
    %620 = vmatpush1.msra.mxu0 0.0
    %621 = vmatprep.subr.mxu0 0.0
    %622 = vmatpush1.msra.mxu0 0.0
    %623 = vmatprep.subr.mxu0 0.0
    %624 = vmatpush1.msra.mxu0 0.0
    %625 = vmatprep.subr.mxu0 0.0
    %626 = vmatpush1.msra.mxu0 0.0
    %627 = vmatprep.subr.mxu0 0.0
    %628 = vmatpush1.msra.mxu0 0.0
    %629 = vmatprep.subr.mxu0 0.0
    %630 = vmatpush1.msra.mxu0 0.0
    %631 = vmatprep.subr.mxu0 0.0
    %632 = vmatpush1.msra.mxu0 0.0
    %633 = vmatprep.subr.mxu0 0.0
    %634 = vmatpush1.msra.mxu0 0.0
    %635 = vmatprep.mubr.f32.mxu0 0.0
    %636 = vmatmul.mubr.f32.gmra.mrb[0].mxu0 %v569
    %v637 = vpop.f32.mrb[0].mxu0
    %v638 = vadd.f32 0.0, %v637
    %v639 = vpop.f32.mrb[0].mxu0
    %640 = vdwg.mxu0
    %v642 = vrot.slane %v638, 4
    %v644 = vadd.f32 %v162, %v642
    %646 = vrot.lane.b32.xlu0 %v564, 32
    %v647 = vpop.permute.xlu0 %646
    %v648 = vsel %vm181, %v647, 0
    %650 = vmatprep.subr.mxu0 0.0
    %651 = vmatpush1.msra.mxu0 %v68
    %652 = vmatprep.subr.mxu0 0.0
    %653 = vmatpush1.msra.mxu0 %v69
    %654 = vmatprep.subr.mxu0 0.0
    %655 = vmatpush1.msra.mxu0 %v70
    %656 = vmatprep.subr.mxu0 0.0
    %657 = vmatpush1.msra.mxu0 %v71
    %658 = vmatprep.subr.mxu0 0.0
    %659 = vmatpush1.msra.mxu0 0.0
    %660 = vmatprep.subr.mxu0 0.0
    %661 = vmatpush1.msra.mxu0 0.0
    %662 = vmatprep.subr.mxu0 0.0
    %663 = vmatpush1.msra.mxu0 0.0
    %664 = vmatprep.subr.mxu0 0.0
    %665 = vmatpush1.msra.mxu0 0.0
    %666 = vmatprep.subr.mxu0 0.0
    %667 = vmatpush1.msra.mxu0 0.0
    %668 = vmatprep.subr.mxu0 0.0
    %669 = vmatpush1.msra.mxu0 0.0
    %670 = vmatprep.subr.mxu0 0.0
    %671 = vmatpush1.msra.mxu0 0.0
    %672 = vmatprep.subr.mxu0 0.0
    %673 = vmatpush1.msra.mxu0 0.0
    %674 = vmatprep.subr.mxu0 0.0
    %675 = vmatpush1.msra.mxu0 0.0
    %676 = vmatprep.subr.mxu0 0.0
    %677 = vmatpush1.msra.mxu0 0.0
    %678 = vmatprep.subr.mxu0 0.0
    %679 = vmatpush1.msra.mxu0 0.0
    %680 = vmatprep.subr.mxu0 0.0
    %681 = vmatpush1.msra.mxu0 0.0
    %682 = vmatprep.subr.mxu0 0.0
    %683 = vmatpush1.msra.mxu0 0.0
    %684 = vmatprep.subr.mxu0 0.0
    %685 = vmatpush1.msra.mxu0 0.0
    %686 = vmatprep.subr.mxu0 0.0
    %687 = vmatpush1.msra.mxu0 0.0
    %688 = vmatprep.subr.mxu0 0.0
    %689 = vmatpush1.msra.mxu0 0.0
    %690 = vmatprep.subr.mxu0 0.0
    %691 = vmatpush1.msra.mxu0 0.0
    %692 = vmatprep.subr.mxu0 0.0
    %693 = vmatpush1.msra.mxu0 0.0
    %694 = vmatprep.subr.mxu0 0.0
    %695 = vmatpush1.msra.mxu0 0.0
    %696 = vmatprep.subr.mxu0 0.0
    %697 = vmatpush1.msra.mxu0 0.0
    %698 = vmatprep.subr.mxu0 0.0
    %699 = vmatpush1.msra.mxu0 0.0
    %700 = vmatprep.subr.mxu0 0.0
    %701 = vmatpush1.msra.mxu0 0.0
    %702 = vmatprep.subr.mxu0 0.0
    %703 = vmatpush1.msra.mxu0 0.0
    %704 = vmatprep.subr.mxu0 0.0
    %705 = vmatpush1.msra.mxu0 0.0
    %706 = vmatprep.subr.mxu0 0.0
    %707 = vmatpush1.msra.mxu0 0.0
    %708 = vmatprep.subr.mxu0 0.0
    %709 = vmatpush1.msra.mxu0 0.0
    %710 = vmatprep.subr.mxu0 0.0
    %711 = vmatpush1.msra.mxu0 0.0
    %712 = vmatprep.subr.mxu0 0.0
    %713 = vmatpush1.msra.mxu0 0.0
    %714 = vmatprep.mubr.f32.mxu0 0.0
    %715 = vmatmul.mubr.f32.gmra.mrb[0].mxu0 %v648
    %v716 = vpop.f32.mrb[0].mxu0
    %v717 = vadd.f32 0.0, %v716
    %v718 = vpop.f32.mrb[0].mxu0
    %719 = vdwg.mxu0
    %720 = vmatprep.subr.mxu0 0.0
    %721 = vmatpush1.msra.mxu0 %v60
    %722 = vmatprep.subr.mxu0 0.0
    %723 = vmatpush1.msra.mxu0 %v61
    %724 = vmatprep.subr.mxu0 0.0
    %725 = vmatpush1.msra.mxu0 %v62
    %726 = vmatprep.subr.mxu0 0.0
    %727 = vmatpush1.msra.mxu0 %v63
    %728 = vmatprep.subr.mxu0 0.0
    %729 = vmatpush1.msra.mxu0 0.0
    %730 = vmatprep.subr.mxu0 0.0
    %731 = vmatpush1.msra.mxu0 0.0
    %732 = vmatprep.subr.mxu0 0.0
    %733 = vmatpush1.msra.mxu0 0.0
    %734 = vmatprep.subr.mxu0 0.0
    %735 = vmatpush1.msra.mxu0 0.0
    %736 = vmatprep.subr.mxu0 0.0
    %737 = vmatpush1.msra.mxu0 0.0
    %738 = vmatprep.subr.mxu0 0.0
    %739 = vmatpush1.msra.mxu0 0.0
    %740 = vmatprep.subr.mxu0 0.0
    %741 = vmatpush1.msra.mxu0 0.0
    %742 = vmatprep.subr.mxu0 0.0
    %743 = vmatpush1.msra.mxu0 0.0
    %744 = vmatprep.subr.mxu0 0.0
    %745 = vmatpush1.msra.mxu0 0.0
    %746 = vmatprep.subr.mxu0 0.0
    %747 = vmatpush1.msra.mxu0 0.0
    %748 = vmatprep.subr.mxu0 0.0
    %749 = vmatpush1.msra.mxu0 0.0
    %750 = vmatprep.subr.mxu0 0.0
    %751 = vmatpush1.msra.mxu0 0.0
    %752 = vmatprep.subr.mxu0 0.0
    %753 = vmatpush1.msra.mxu0 0.0
    %754 = vmatprep.subr.mxu0 0.0
    %755 = vmatpush1.msra.mxu0 0.0
    %756 = vmatprep.subr.mxu0 0.0
    %757 = vmatpush1.msra.mxu0 0.0
    %758 = vmatprep.subr.mxu0 0.0
    %759 = vmatpush1.msra.mxu0 0.0
    %760 = vmatprep.subr.mxu0 0.0
    %761 = vmatpush1.msra.mxu0 0.0
    %762 = vmatprep.subr.mxu0 0.0
    %763 = vmatpush1.msra.mxu0 0.0
    %764 = vmatprep.subr.mxu0 0.0
    %765 = vmatpush1.msra.mxu0 0.0
    %766 = vmatprep.subr.mxu0 0.0
    %767 = vmatpush1.msra.mxu0 0.0
    %768 = vmatprep.subr.mxu0 0.0
    %769 = vmatpush1.msra.mxu0 0.0
    %770 = vmatprep.subr.mxu0 0.0
    %771 = vmatpush1.msra.mxu0 0.0
    %772 = vmatprep.subr.mxu0 0.0
    %773 = vmatpush1.msra.mxu0 0.0
    %774 = vmatprep.subr.mxu0 0.0
    %775 = vmatpush1.msra.mxu0 0.0
    %776 = vmatprep.subr.mxu0 0.0
    %777 = vmatpush1.msra.mxu0 0.0
    %778 = vmatprep.subr.mxu0 0.0
    %779 = vmatpush1.msra.mxu0 0.0
    %780 = vmatprep.subr.mxu0 0.0
    %781 = vmatpush1.msra.mxu0 0.0
    %782 = vmatprep.subr.mxu0 0.0
    %783 = vmatpush1.msra.mxu0 0.0
    %784 = vmatprep.mubr.f32.mxu0 0.0
    %785 = vmatmul.mubr.f32.gmra.mrb[0].mxu0 %v569
    %v786 = vpop.f32.mrb[0].mxu0
    %v787 = vadd.f32 %v717, %v786
    %v788 = vpop.f32.mrb[0].mxu0
    %789 = vdwg.mxu0
    %v790 = vadd.f32 %v787, %v78
    %v791 = vtanh.pop %v644
    %v792 = vxor.u32 %v644, 2147483648
    %v793 = vmul.f32 %v792, 1.442695
    %v794 = vpow.pop %v793
    %v795 = vadd.f32 %v794, 1.0
    %v796 = vrcp.pop %v795
    %v797 = vmul.f32 1.0, %v796
    %v798 = vsel %vm174, %v791, %v797
    %v800 = vrot.slane %v529, 6
    %v802 = vmul.f32 %v798, %v800
    %804 = vrot.lane.b32.xlu0 %v798, 64
    %v805 = vpop.permute.xlu0 %804
    %v807 = vmul.f32 %v798, %v805
    %809 = vrot.lane.b32.xlu0 %v807, 32
    %v810 = vpop.permute.xlu0 %809
    %v812 = vadd.f32 %v802, %v810
    %v813 = vtanh.pop %v812
    %815 = vrot.lane.b32.xlu0 %v813, 64
    %v816 = vpop.permute.xlu0 %815
    %v818 = vmul.f32 %v798, %v816
    %v819 = vtanh.pop %v790
    %v820 = vxor.u32 %v790, 2147483648
    %v821 = vmul.f32 %v820, 1.442695
    %v822 = vpow.pop %v821
    %v823 = vadd.f32 %v822, 1.0
    %v824 = vrcp.pop %v823
    %v825 = vmul.f32 1.0, %v824
    %v826 = vsel %vm174, %v819, %v825
    %v827 = vmul.f32 %v826, %v558
    %829 = vrot.lane.b32.xlu0 %v826, 64
    %v830 = vpop.permute.xlu0 %829
    %v832 = vmul.f32 %v826, %v830
    %834 = vrot.lane.b32.xlu0 %v832, 32
    %v835 = vpop.permute.xlu0 %834
    %v837 = vadd.f32 %v827, %v835
    %v838 = vtanh.pop %v837
    %840 = vrot.lane.b32.xlu0 %v838, 64
    %v841 = vpop.permute.xlu0 %840
    %v843 = vmul.f32 %v826, %v841
    %v845 = vrot.slane %v818, 4
    %846 = vrot.lane.b32.xlu0 %v845, 32
    %v847 = vpop.permute.xlu0 %846
    %v848 = vsel %vm181, %v847, 0
    %850 = vmatprep.subr.mxu0 0.0
    %851 = vmatpush1.msra.mxu0 %v64
    %852 = vmatprep.subr.mxu0 0.0
    %853 = vmatpush1.msra.mxu0 %v65
    %854 = vmatprep.subr.mxu0 0.0
    %855 = vmatpush1.msra.mxu0 %v66
    %856 = vmatprep.subr.mxu0 0.0
    %857 = vmatpush1.msra.mxu0 %v67
    %858 = vmatprep.subr.mxu0 0.0
    %859 = vmatpush1.msra.mxu0 0.0
    %860 = vmatprep.subr.mxu0 0.0
    %861 = vmatpush1.msra.mxu0 0.0
    %862 = vmatprep.subr.mxu0 0.0
    %863 = vmatpush1.msra.mxu0 0.0
    %864 = vmatprep.subr.mxu0 0.0
    %865 = vmatpush1.msra.mxu0 0.0
    %866 = vmatprep.subr.mxu0 0.0
    %867 = vmatpush1.msra.mxu0 0.0
    %868 = vmatprep.subr.mxu0 0.0
    %869 = vmatpush1.msra.mxu0 0.0
    %870 = vmatprep.subr.mxu0 0.0
    %871 = vmatpush1.msra.mxu0 0.0
    %872 = vmatprep.subr.mxu0 0.0
    %873 = vmatpush1.msra.mxu0 0.0
    %874 = vmatprep.subr.mxu0 0.0
    %875 = vmatpush1.msra.mxu0 0.0
    %876 = vmatprep.subr.mxu0 0.0
    %877 = vmatpush1.msra.mxu0 0.0
    %878 = vmatprep.subr.mxu0 0.0
    %879 = vmatpush1.msra.mxu0 0.0
    %880 = vmatprep.subr.mxu0 0.0
    %881 = vmatpush1.msra.mxu0 0.0
    %882 = vmatprep.subr.mxu0 0.0
    %883 = vmatpush1.msra.mxu0 0.0
    %884 = vmatprep.subr.mxu0 0.0
    %885 = vmatpush1.msra.mxu0 0.0
    %886 = vmatprep.subr.mxu0 0.0
    %887 = vmatpush1.msra.mxu0 0.0
    %888 = vmatprep.subr.mxu0 0.0
    %889 = vmatpush1.msra.mxu0 0.0
    %890 = vmatprep.subr.mxu0 0.0
    %891 = vmatpush1.msra.mxu0 0.0
    %892 = vmatprep.subr.mxu0 0.0
    %893 = vmatpush1.msra.mxu0 0.0
    %894 = vmatprep.subr.mxu0 0.0
    %895 = vmatpush1.msra.mxu0 0.0
    %896 = vmatprep.subr.mxu0 0.0
    %897 = vmatpush1.msra.mxu0 0.0
    %898 = vmatprep.subr.mxu0 0.0
    %899 = vmatpush1.msra.mxu0 0.0
    %900 = vmatprep.subr.mxu0 0.0
    %901 = vmatpush1.msra.mxu0 0.0
    %902 = vmatprep.subr.mxu0 0.0
    %903 = vmatpush1.msra.mxu0 0.0
    %904 = vmatprep.subr.mxu0 0.0
    %905 = vmatpush1.msra.mxu0 0.0
    %906 = vmatprep.subr.mxu0 0.0
    %907 = vmatpush1.msra.mxu0 0.0
    %908 = vmatprep.subr.mxu0 0.0
    %909 = vmatpush1.msra.mxu0 0.0
    %910 = vmatprep.subr.mxu0 0.0
    %911 = vmatpush1.msra.mxu0 0.0
    %912 = vmatprep.subr.mxu0 0.0
    %913 = vmatpush1.msra.mxu0 0.0
    %914 = vmatprep.mubr.f32.mxu0 0.0
    %915 = vmatmul.mubr.f32.gmra.mrb[0].mxu0 %v848
    %v916 = vpop.f32.mrb[0].mxu0
    %v917 = vadd.f32 0.0, %v916
    %v918 = vpop.f32.mrb[0].mxu0
    %919 = vdwg.mxu0
    %v921 = vrot.slane %v917, 2
    %v923 = vadd.f32 %v162, %v921
    %925 = vrot.lane.b32.xlu0 %v843, 32
    %v926 = vpop.permute.xlu0 %925
    %v927 = vsel %vm181, %v926, 0
    %929 = vmatprep.subr.mxu0 0.0
    %930 = vmatpush1.msra.mxu0 %v68
    %931 = vmatprep.subr.mxu0 0.0
    %932 = vmatpush1.msra.mxu0 %v69
    %933 = vmatprep.subr.mxu0 0.0
    %934 = vmatpush1.msra.mxu0 %v70
    %935 = vmatprep.subr.mxu0 0.0
    %936 = vmatpush1.msra.mxu0 %v71
    %937 = vmatprep.subr.mxu0 0.0
    %938 = vmatpush1.msra.mxu0 0.0
    %939 = vmatprep.subr.mxu0 0.0
    %940 = vmatpush1.msra.mxu0 0.0
    %941 = vmatprep.subr.mxu0 0.0
    %942 = vmatpush1.msra.mxu0 0.0
    %943 = vmatprep.subr.mxu0 0.0
    %944 = vmatpush1.msra.mxu0 0.0
    %945 = vmatprep.subr.mxu0 0.0
    %946 = vmatpush1.msra.mxu0 0.0
    %947 = vmatprep.subr.mxu0 0.0
    %948 = vmatpush1.msra.mxu0 0.0
    %949 = vmatprep.subr.mxu0 0.0
    %950 = vmatpush1.msra.mxu0 0.0
    %951 = vmatprep.subr.mxu0 0.0
    %952 = vmatpush1.msra.mxu0 0.0
    %953 = vmatprep.subr.mxu0 0.0
    %954 = vmatpush1.msra.mxu0 0.0
    %955 = vmatprep.subr.mxu0 0.0
    %956 = vmatpush1.msra.mxu0 0.0
    %957 = vmatprep.subr.mxu0 0.0
    %958 = vmatpush1.msra.mxu0 0.0
    %959 = vmatprep.subr.mxu0 0.0
    %960 = vmatpush1.msra.mxu0 0.0
    %961 = vmatprep.subr.mxu0 0.0
    %962 = vmatpush1.msra.mxu0 0.0
    %963 = vmatprep.subr.mxu0 0.0
    %964 = vmatpush1.msra.mxu0 0.0
    %965 = vmatprep.subr.mxu0 0.0
    %966 = vmatpush1.msra.mxu0 0.0
    %967 = vmatprep.subr.mxu0 0.0
    %968 = vmatpush1.msra.mxu0 0.0
    %969 = vmatprep.subr.mxu0 0.0
    %970 = vmatpush1.msra.mxu0 0.0
    %971 = vmatprep.subr.mxu0 0.0
    %972 = vmatpush1.msra.mxu0 0.0
    %973 = vmatprep.subr.mxu0 0.0
    %974 = vmatpush1.msra.mxu0 0.0
    %975 = vmatprep.subr.mxu0 0.0
    %976 = vmatpush1.msra.mxu0 0.0
    %977 = vmatprep.subr.mxu0 0.0
    %978 = vmatpush1.msra.mxu0 0.0
    %979 = vmatprep.subr.mxu0 0.0
    %980 = vmatpush1.msra.mxu0 0.0
    %981 = vmatprep.subr.mxu0 0.0
    %982 = vmatpush1.msra.mxu0 0.0
    %983 = vmatprep.subr.mxu0 0.0
    %984 = vmatpush1.msra.mxu0 0.0
    %985 = vmatprep.subr.mxu0 0.0
    %986 = vmatpush1.msra.mxu0 0.0
    %987 = vmatprep.subr.mxu0 0.0
    %988 = vmatpush1.msra.mxu0 0.0
    %989 = vmatprep.subr.mxu0 0.0
    %990 = vmatpush1.msra.mxu0 0.0
    %991 = vmatprep.subr.mxu0 0.0
    %992 = vmatpush1.msra.mxu0 0.0
    %993 = vmatprep.mubr.f32.mxu0 0.0
    %994 = vmatmul.mubr.f32.gmra.mrb[0].mxu0 %v927
    %v995 = vpop.f32.mrb[0].mxu0
    %v996 = vadd.f32 0.0, %v995
    %v997 = vpop.f32.mrb[0].mxu0
    %998 = vdwg.mxu0
    %999 = vmatprep.subr.mxu0 0.0
    %1000 = vmatpush1.msra.mxu0 %v60
    %1001 = vmatprep.subr.mxu0 0.0
    %1002 = vmatpush1.msra.mxu0 %v61
    %1003 = vmatprep.subr.mxu0 0.0
    %1004 = vmatpush1.msra.mxu0 %v62
    %1005 = vmatprep.subr.mxu0 0.0
    %1006 = vmatpush1.msra.mxu0 %v63
    %1007 = vmatprep.subr.mxu0 0.0
    %1008 = vmatpush1.msra.mxu0 0.0
    %1009 = vmatprep.subr.mxu0 0.0
    %1010 = vmatpush1.msra.mxu0 0.0
    %1011 = vmatprep.subr.mxu0 0.0
    %1012 = vmatpush1.msra.mxu0 0.0
    %1013 = vmatprep.subr.mxu0 0.0
    %1014 = vmatpush1.msra.mxu0 0.0
    %1015 = vmatprep.subr.mxu0 0.0
    %1016 = vmatpush1.msra.mxu0 0.0
    %1017 = vmatprep.subr.mxu0 0.0
    %1018 = vmatpush1.msra.mxu0 0.0
    %1019 = vmatprep.subr.mxu0 0.0
    %1020 = vmatpush1.msra.mxu0 0.0
    %1021 = vmatprep.subr.mxu0 0.0
    %1022 = vmatpush1.msra.mxu0 0.0
    %1023 = vmatprep.subr.mxu0 0.0
    %1024 = vmatpush1.msra.mxu0 0.0
    %1025 = vmatprep.subr.mxu0 0.0
    %1026 = vmatpush1.msra.mxu0 0.0
    %1027 = vmatprep.subr.mxu0 0.0
    %1028 = vmatpush1.msra.mxu0 0.0
    %1029 = vmatprep.subr.mxu0 0.0
    %1030 = vmatpush1.msra.mxu0 0.0
    %1031 = vmatprep.subr.mxu0 0.0
    %1032 = vmatpush1.msra.mxu0 0.0
    %1033 = vmatprep.subr.mxu0 0.0
    %1034 = vmatpush1.msra.mxu0 0.0
    %1035 = vmatprep.subr.mxu0 0.0
    %1036 = vmatpush1.msra.mxu0 0.0
    %1037 = vmatprep.subr.mxu0 0.0
    %1038 = vmatpush1.msra.mxu0 0.0
    %1039 = vmatprep.subr.mxu0 0.0
    %1040 = vmatpush1.msra.mxu0 0.0
    %1041 = vmatprep.subr.mxu0 0.0
    %1042 = vmatpush1.msra.mxu0 0.0
    %1043 = vmatprep.subr.mxu0 0.0
    %1044 = vmatpush1.msra.mxu0 0.0
    %1045 = vmatprep.subr.mxu0 0.0
    %1046 = vmatpush1.msra.mxu0 0.0
    %1047 = vmatprep.subr.mxu0 0.0
    %1048 = vmatpush1.msra.mxu0 0.0
    %1049 = vmatprep.subr.mxu0 0.0
    %1050 = vmatpush1.msra.mxu0 0.0
    %1051 = vmatprep.subr.mxu0 0.0
    %1052 = vmatpush1.msra.mxu0 0.0
    %1053 = vmatprep.subr.mxu0 0.0
    %1054 = vmatpush1.msra.mxu0 0.0
    %1055 = vmatprep.subr.mxu0 0.0
    %1056 = vmatpush1.msra.mxu0 0.0
    %1057 = vmatprep.subr.mxu0 0.0
    %1058 = vmatpush1.msra.mxu0 0.0
    %1059 = vmatprep.subr.mxu0 0.0
    %1060 = vmatpush1.msra.mxu0 0.0
    %1061 = vmatprep.subr.mxu0 0.0
    %1062 = vmatpush1.msra.mxu0 0.0
    %1063 = vmatprep.mubr.f32.mxu0 0.0
    %1064 = vmatmul.mubr.f32.gmra.mrb[0].mxu0 %v848
    %v1065 = vpop.f32.mrb[0].mxu0
    %v1066 = vadd.f32 %v996, %v1065
    %v1067 = vpop.f32.mrb[0].mxu0
    %1068 = vdwg.mxu0
    %v1069 = vadd.f32 %v1066, %v78
    %v1070 = vtanh.pop %v923
    %v1071 = vxor.u32 %v923, 2147483648
    %v1072 = vmul.f32 %v1071, 1.442695
    %v1073 = vpow.pop %v1072
    %v1074 = vadd.f32 %v1073, 1.0
    %v1075 = vrcp.pop %v1074
    %v1076 = vmul.f32 1.0, %v1075
    %v1077 = vsel %vm174, %v1070, %v1076
    %v1079 = vrot.slane %v812, 6
    %v1081 = vmul.f32 %v1077, %v1079
    %1083 = vrot.lane.b32.xlu0 %v1077, 64
    %v1084 = vpop.permute.xlu0 %1083
    %v1086 = vmul.f32 %v1077, %v1084
    %1088 = vrot.lane.b32.xlu0 %v1086, 32
    %v1089 = vpop.permute.xlu0 %1088
    %v1091 = vadd.f32 %v1081, %v1089
    %v1092 = vtanh.pop %v1091
    %1094 = vrot.lane.b32.xlu0 %v1092, 64
    %v1095 = vpop.permute.xlu0 %1094
    %v1097 = vmul.f32 %v1077, %v1095
    %v1098 = vtanh.pop %v1069
    %v1099 = vxor.u32 %v1069, 2147483648
    %v1100 = vmul.f32 %v1099, 1.442695
    %v1101 = vpow.pop %v1100
    %v1102 = vadd.f32 %v1101, 1.0
    %v1103 = vrcp.pop %v1102
    %v1104 = vmul.f32 1.0, %v1103
    %v1105 = vsel %vm174, %v1098, %v1104
    %v1106 = vmul.f32 %v1105, %v837
    %1108 = vrot.lane.b32.xlu0 %v1105, 64
    %v1109 = vpop.permute.xlu0 %1108
    %v1111 = vmul.f32 %v1105, %v1109
    %1113 = vrot.lane.b32.xlu0 %v1111, 32
    %v1114 = vpop.permute.xlu0 %1113
    %v1116 = vadd.f32 %v1106, %v1114
    %v1117 = vtanh.pop %v1116
    %1119 = vrot.lane.b32.xlu0 %v1117, 64
    %v1120 = vpop.permute.xlu0 %1119
    %v1122 = vmul.f32 %v1105, %v1120
    %v1124 = vrot.slane %v1097, 6
    %1125 = vrot.lane.b32.xlu0 %v1124, 32
    %v1126 = vpop.permute.xlu0 %1125
    %v1127 = vsel %vm181, %v1126, 0
    %1129 = vmatprep.subr.mxu0 0.0
    %1130 = vmatpush1.msra.mxu0 %v64
    %1131 = vmatprep.subr.mxu0 0.0
    %1132 = vmatpush1.msra.mxu0 %v65
    %1133 = vmatprep.subr.mxu0 0.0
    %1134 = vmatpush1.msra.mxu0 %v66
    %1135 = vmatprep.subr.mxu0 0.0
    %1136 = vmatpush1.msra.mxu0 %v67
    %1137 = vmatprep.subr.mxu0 0.0
    %1138 = vmatpush1.msra.mxu0 0.0
    %1139 = vmatprep.subr.mxu0 0.0
    %1140 = vmatpush1.msra.mxu0 0.0
    %1141 = vmatprep.subr.mxu0 0.0
    %1142 = vmatpush1.msra.mxu0 0.0
    %1143 = vmatprep.subr.mxu0 0.0
    %1144 = vmatpush1.msra.mxu0 0.0
    %1145 = vmatprep.subr.mxu0 0.0
    %1146 = vmatpush1.msra.mxu0 0.0
    %1147 = vmatprep.subr.mxu0 0.0
    %1148 = vmatpush1.msra.mxu0 0.0
    %1149 = vmatprep.subr.mxu0 0.0
    %1150 = vmatpush1.msra.mxu0 0.0
    %1151 = vmatprep.subr.mxu0 0.0
    %1152 = vmatpush1.msra.mxu0 0.0
    %1153 = vmatprep.subr.mxu0 0.0
    %1154 = vmatpush1.msra.mxu0 0.0
    %1155 = vmatprep.subr.mxu0 0.0
    %1156 = vmatpush1.msra.mxu0 0.0
    %1157 = vmatprep.subr.mxu0 0.0
    %1158 = vmatpush1.msra.mxu0 0.0
    %1159 = vmatprep.subr.mxu0 0.0
    %1160 = vmatpush1.msra.mxu0 0.0
    %1161 = vmatprep.subr.mxu0 0.0
    %1162 = vmatpush1.msra.mxu0 0.0
    %1163 = vmatprep.subr.mxu0 0.0
    %1164 = vmatpush1.msra.mxu0 0.0
    %1165 = vmatprep.subr.mxu0 0.0
    %1166 = vmatpush1.msra.mxu0 0.0
    %1167 = vmatprep.subr.mxu0 0.0
    %1168 = vmatpush1.msra.mxu0 0.0
    %1169 = vmatprep.subr.mxu0 0.0
    %1170 = vmatpush1.msra.mxu0 0.0
    %1171 = vmatprep.subr.mxu0 0.0
    %1172 = vmatpush1.msra.mxu0 0.0
    %1173 = vmatprep.subr.mxu0 0.0
    %1174 = vmatpush1.msra.mxu0 0.0
    %1175 = vmatprep.subr.mxu0 0.0
    %1176 = vmatpush1.msra.mxu0 0.0
    %1177 = vmatprep.subr.mxu0 0.0
    %1178 = vmatpush1.msra.mxu0 0.0
    %1179 = vmatprep.subr.mxu0 0.0
    %1180 = vmatpush1.msra.mxu0 0.0
    %1181 = vmatprep.subr.mxu0 0.0
    %1182 = vmatpush1.msra.mxu0 0.0
    %1183 = vmatprep.subr.mxu0 0.0
    %1184 = vmatpush1.msra.mxu0 0.0
    %1185 = vmatprep.subr.mxu0 0.0
    %1186 = vmatpush1.msra.mxu0 0.0
    %1187 = vmatprep.subr.mxu0 0.0
    %1188 = vmatpush1.msra.mxu0 0.0
    %1189 = vmatprep.subr.mxu0 0.0
    %1190 = vmatpush1.msra.mxu0 0.0
    %1191 = vmatprep.subr.mxu0 0.0
    %1192 = vmatpush1.msra.mxu0 0.0
    %1193 = vmatprep.mubr.f32.mxu0 0.0
    %1194 = vmatmul.mubr.f32.gmra.mrb[0].mxu0 %v1127
    %v1195 = vpop.f32.mrb[0].mxu0
    %v1196 = vadd.f32 0.0, %v1195
    %v1197 = vpop.f32.mrb[0].mxu0
    %1198 = vdwg.mxu0
    %v1199 = vadd.f32 %v167, %v1196
    %1201 = vrot.lane.b32.xlu0 %v1122, 32
    %v1202 = vpop.permute.xlu0 %1201
    %v1203 = vsel %vm181, %v1202, 0
    %1205 = vmatprep.subr.mxu0 0.0
    %1206 = vmatpush1.msra.mxu0 %v68
    %1207 = vmatprep.subr.mxu0 0.0
    %1208 = vmatpush1.msra.mxu0 %v69
    %1209 = vmatprep.subr.mxu0 0.0
    %1210 = vmatpush1.msra.mxu0 %v70
    %1211 = vmatprep.subr.mxu0 0.0
    %1212 = vmatpush1.msra.mxu0 %v71
    %1213 = vmatprep.subr.mxu0 0.0
    %1214 = vmatpush1.msra.mxu0 0.0
    %1215 = vmatprep.subr.mxu0 0.0
    %1216 = vmatpush1.msra.mxu0 0.0
    %1217 = vmatprep.subr.mxu0 0.0
    %1218 = vmatpush1.msra.mxu0 0.0
    %1219 = vmatprep.subr.mxu0 0.0
    %1220 = vmatpush1.msra.mxu0 0.0
    %1221 = vmatprep.subr.mxu0 0.0
    %1222 = vmatpush1.msra.mxu0 0.0
    %1223 = vmatprep.subr.mxu0 0.0
    %1224 = vmatpush1.msra.mxu0 0.0
    %1225 = vmatprep.subr.mxu0 0.0
    %1226 = vmatpush1.msra.mxu0 0.0
    %1227 = vmatprep.subr.mxu0 0.0
    %1228 = vmatpush1.msra.mxu0 0.0
    %1229 = vmatprep.subr.mxu0 0.0
    %1230 = vmatpush1.msra.mxu0 0.0
    %1231 = vmatprep.subr.mxu0 0.0
    %1232 = vmatpush1.msra.mxu0 0.0
    %1233 = vmatprep.subr.mxu0 0.0
    %1234 = vmatpush1.msra.mxu0 0.0
    %1235 = vmatprep.subr.mxu0 0.0
    %1236 = vmatpush1.msra.mxu0 0.0
    %1237 = vmatprep.subr.mxu0 0.0
    %1238 = vmatpush1.msra.mxu0 0.0
    %1239 = vmatprep.subr.mxu0 0.0
    %1240 = vmatpush1.msra.mxu0 0.0
    %1241 = vmatprep.subr.mxu0 0.0
    %1242 = vmatpush1.msra.mxu0 0.0
    %1243 = vmatprep.subr.mxu0 0.0
    %1244 = vmatpush1.msra.mxu0 0.0
    %1245 = vmatprep.subr.mxu0 0.0
    %1246 = vmatpush1.msra.mxu0 0.0
    %1247 = vmatprep.subr.mxu0 0.0
    %1248 = vmatpush1.msra.mxu0 0.0
    %1249 = vmatprep.subr.mxu0 0.0
    %1250 = vmatpush1.msra.mxu0 0.0
    %1251 = vmatprep.subr.mxu0 0.0
    %1252 = vmatpush1.msra.mxu0 0.0
    %1253 = vmatprep.subr.mxu0 0.0
    %1254 = vmatpush1.msra.mxu0 0.0
    %1255 = vmatprep.subr.mxu0 0.0
    %1256 = vmatpush1.msra.mxu0 0.0
    %1257 = vmatprep.subr.mxu0 0.0
    %1258 = vmatpush1.msra.mxu0 0.0
    %1259 = vmatprep.subr.mxu0 0.0
    %1260 = vmatpush1.msra.mxu0 0.0
    %1261 = vmatprep.subr.mxu0 0.0
    %1262 = vmatpush1.msra.mxu0 0.0
    %1263 = vmatprep.subr.mxu0 0.0
    %1264 = vmatpush1.msra.mxu0 0.0
    %1265 = vmatprep.subr.mxu0 0.0
    %1266 = vmatpush1.msra.mxu0 0.0
    %1267 = vmatprep.subr.mxu0 0.0
    %1268 = vmatpush1.msra.mxu0 0.0
    %1269 = vmatprep.mubr.f32.mxu0 0.0
    %1270 = vmatmul.mubr.f32.gmra.mrb[0].mxu0 %v1203
    %v1271 = vpop.f32.mrb[0].mxu0
    %v1272 = vadd.f32 0.0, %v1271
    %v1273 = vpop.f32.mrb[0].mxu0
    %1274 = vdwg.mxu0
    %1275 = vmatprep.subr.mxu0 0.0
    %1276 = vmatpush1.msra.mxu0 %v60
    %1277 = vmatprep.subr.mxu0 0.0
    %1278 = vmatpush1.msra.mxu0 %v61
    %1279 = vmatprep.subr.mxu0 0.0
    %1280 = vmatpush1.msra.mxu0 %v62
    %1281 = vmatprep.subr.mxu0 0.0
    %1282 = vmatpush1.msra.mxu0 %v63
    %1283 = vmatprep.subr.mxu0 0.0
    %1284 = vmatpush1.msra.mxu0 0.0
    %1285 = vmatprep.subr.mxu0 0.0
    %1286 = vmatpush1.msra.mxu0 0.0
    %1287 = vmatprep.subr.mxu0 0.0
    %1288 = vmatpush1.msra.mxu0 0.0
    %1289 = vmatprep.subr.mxu0 0.0
    %1290 = vmatpush1.msra.mxu0 0.0
    %1291 = vmatprep.subr.mxu0 0.0
    %1292 = vmatpush1.msra.mxu0 0.0
    %1293 = vmatprep.subr.mxu0 0.0
    %1294 = vmatpush1.msra.mxu0 0.0
    %1295 = vmatprep.subr.mxu0 0.0
    %1296 = vmatpush1.msra.mxu0 0.0
    %1297 = vmatprep.subr.mxu0 0.0
    %1298 = vmatpush1.msra.mxu0 0.0
    %1299 = vmatprep.subr.mxu0 0.0
    %1300 = vmatpush1.msra.mxu0 0.0
    %1301 = vmatprep.subr.mxu0 0.0
    %1302 = vmatpush1.msra.mxu0 0.0
    %1303 = vmatprep.subr.mxu0 0.0
    %1304 = vmatpush1.msra.mxu0 0.0
    %1305 = vmatprep.subr.mxu0 0.0
    %1306 = vmatpush1.msra.mxu0 0.0
    %1307 = vmatprep.subr.mxu0 0.0
    %1308 = vmatpush1.msra.mxu0 0.0
    %1309 = vmatprep.subr.mxu0 0.0
    %1310 = vmatpush1.msra.mxu0 0.0
    %1311 = vmatprep.subr.mxu0 0.0
    %1312 = vmatpush1.msra.mxu0 0.0
    %1313 = vmatprep.subr.mxu0 0.0
    %1314 = vmatpush1.msra.mxu0 0.0
    %1315 = vmatprep.subr.mxu0 0.0
    %1316 = vmatpush1.msra.mxu0 0.0
    %1317 = vmatprep.subr.mxu0 0.0
    %1318 = vmatpush1.msra.mxu0 0.0
    %1319 = vmatprep.subr.mxu0 0.0
    %1320 = vmatpush1.msra.mxu0 0.0
    %1321 = vmatprep.subr.mxu0 0.0
    %1322 = vmatpush1.msra.mxu0 0.0
    %1323 = vmatprep.subr.mxu0 0.0
    %1324 = vmatpush1.msra.mxu0 0.0
    %1325 = vmatprep.subr.mxu0 0.0
    %1326 = vmatpush1.msra.mxu0 0.0
    %1327 = vmatprep.subr.mxu0 0.0
    %1328 = vmatpush1.msra.mxu0 0.0
    %1329 = vmatprep.subr.mxu0 0.0
    %1330 = vmatpush1.msra.mxu0 0.0
    %1331 = vmatprep.subr.mxu0 0.0
    %1332 = vmatpush1.msra.mxu0 0.0
    %1333 = vmatprep.subr.mxu0 0.0
    %1334 = vmatpush1.msra.mxu0 0.0
    %1335 = vmatprep.subr.mxu0 0.0
    %1336 = vmatpush1.msra.mxu0 0.0
    %1337 = vmatprep.subr.mxu0 0.0
    %1338 = vmatpush1.msra.mxu0 0.0
    %1339 = vmatprep.mubr.f32.mxu0 0.0
    %1340 = vmatmul.mubr.f32.gmra.mrb[0].mxu0 %v1127
    %v1341 = vpop.f32.mrb[0].mxu0
    %v1342 = vadd.f32 %v1272, %v1341
    %v1343 = vpop.f32.mrb[0].mxu0
    %1344 = vdwg.mxu0
    %v1345 = vadd.f32 %v1342, %v78
    %v1346 = vtanh.pop %v1199
    %v1347 = vxor.u32 %v1199, 2147483648
    %v1348 = vmul.f32 %v1347, 1.442695
    %v1349 = vpow.pop %v1348
    %v1350 = vadd.f32 %v1349, 1.0
    %v1351 = vrcp.pop %v1350
    %v1352 = vmul.f32 1.0, %v1351
    %v1353 = vsel %vm174, %v1346, %v1352
    %v1355 = vrot.slane %v1091, 6
    %v1357 = vmul.f32 %v1353, %v1355
    %1359 = vrot.lane.b32.xlu0 %v1353, 64
    %v1360 = vpop.permute.xlu0 %1359
    %v1362 = vmul.f32 %v1353, %v1360
    %1364 = vrot.lane.b32.xlu0 %v1362, 32
    %v1365 = vpop.permute.xlu0 %1364
    %v1367 = vadd.f32 %v1357, %v1365
    %v1368 = vtanh.pop %v1367
    %1370 = vrot.lane.b32.xlu0 %v1368, 64
    %v1371 = vpop.permute.xlu0 %1370
    %v1373 = vmul.f32 %v1353, %v1371
    %v1374 = vtanh.pop %v1345
    %v1375 = vxor.u32 %v1345, 2147483648
    %v1376 = vmul.f32 %v1375, 1.442695
    %v1377 = vpow.pop %v1376
    %v1378 = vadd.f32 %v1377, 1.0
    %v1379 = vrcp.pop %v1378
    %v1380 = vmul.f32 1.0, %v1379
    %v1381 = vsel %vm174, %v1374, %v1380
    %v1382 = vmul.f32 %v1381, %v1116
    %1384 = vrot.lane.b32.xlu0 %v1381, 64
    %v1385 = vpop.permute.xlu0 %1384
    %v1387 = vmul.f32 %v1381, %v1385
    %1389 = vrot.lane.b32.xlu0 %v1387, 32
    %v1390 = vpop.permute.xlu0 %1389
    %v1392 = vadd.f32 %v1382, %v1390
    %v1393 = vtanh.pop %v1392
    %1395 = vrot.lane.b32.xlu0 %v1393, 64
    %v1396 = vpop.permute.xlu0 %1395
    %v1398 = vmul.f32 %v1381, %v1396
    %1400 = vrot.lane.b32.xlu0 %v1373, 32
    %v1401 = vpop.permute.xlu0 %1400
    %v1402 = vsel %vm181, %v1401, 0
    %1404 = vmatprep.subr.mxu0 0.0
    %1405 = vmatpush1.msra.mxu0 %v64
    %1406 = vmatprep.subr.mxu0 0.0
    %1407 = vmatpush1.msra.mxu0 %v65
    %1408 = vmatprep.subr.mxu0 0.0
    %1409 = vmatpush1.msra.mxu0 %v66
    %1410 = vmatprep.subr.mxu0 0.0
    %1411 = vmatpush1.msra.mxu0 %v67
    %1412 = vmatprep.subr.mxu0 0.0
    %1413 = vmatpush1.msra.mxu0 0.0
    %1414 = vmatprep.subr.mxu0 0.0
    %1415 = vmatpush1.msra.mxu0 0.0
    %1416 = vmatprep.subr.mxu0 0.0
    %1417 = vmatpush1.msra.mxu0 0.0
    %1418 = vmatprep.subr.mxu0 0.0
    %1419 = vmatpush1.msra.mxu0 0.0
    %1420 = vmatprep.subr.mxu0 0.0
    %1421 = vmatpush1.msra.mxu0 0.0
    %1422 = vmatprep.subr.mxu0 0.0
    %1423 = vmatpush1.msra.mxu0 0.0
    %1424 = vmatprep.subr.mxu0 0.0
    %1425 = vmatpush1.msra.mxu0 0.0
    %1426 = vmatprep.subr.mxu0 0.0
    %1427 = vmatpush1.msra.mxu0 0.0
    %1428 = vmatprep.subr.mxu0 0.0
    %1429 = vmatpush1.msra.mxu0 0.0
    %1430 = vmatprep.subr.mxu0 0.0
    %1431 = vmatpush1.msra.mxu0 0.0
    %1432 = vmatprep.subr.mxu0 0.0
    %1433 = vmatpush1.msra.mxu0 0.0
    %1434 = vmatprep.subr.mxu0 0.0
    %1435 = vmatpush1.msra.mxu0 0.0
    %1436 = vmatprep.subr.mxu0 0.0
    %1437 = vmatpush1.msra.mxu0 0.0
    %1438 = vmatprep.subr.mxu0 0.0
    %1439 = vmatpush1.msra.mxu0 0.0
    %1440 = vmatprep.subr.mxu0 0.0
    %1441 = vmatpush1.msra.mxu0 0.0
    %1442 = vmatprep.subr.mxu0 0.0
    %1443 = vmatpush1.msra.mxu0 0.0
    %1444 = vmatprep.subr.mxu0 0.0
    %1445 = vmatpush1.msra.mxu0 0.0
    %1446 = vmatprep.subr.mxu0 0.0
    %1447 = vmatpush1.msra.mxu0 0.0
    %1448 = vmatprep.subr.mxu0 0.0
    %1449 = vmatpush1.msra.mxu0 0.0
    %1450 = vmatprep.subr.mxu0 0.0
    %1451 = vmatpush1.msra.mxu0 0.0
    %1452 = vmatprep.subr.mxu0 0.0
    %1453 = vmatpush1.msra.mxu0 0.0
    %1454 = vmatprep.subr.mxu0 0.0
    %1455 = vmatpush1.msra.mxu0 0.0
    %1456 = vmatprep.subr.mxu0 0.0
    %1457 = vmatpush1.msra.mxu0 0.0
    %1458 = vmatprep.subr.mxu0 0.0
    %1459 = vmatpush1.msra.mxu0 0.0
    %1460 = vmatprep.subr.mxu0 0.0
    %1461 = vmatpush1.msra.mxu0 0.0
    %1462 = vmatprep.subr.mxu0 0.0
    %1463 = vmatpush1.msra.mxu0 0.0
    %1464 = vmatprep.subr.mxu0 0.0
    %1465 = vmatpush1.msra.mxu0 0.0
    %1466 = vmatprep.subr.mxu0 0.0
    %1467 = vmatpush1.msra.mxu0 0.0
    %1468 = vmatprep.mubr.f32.mxu0 0.0
    %1469 = vmatmul.mubr.f32.gmra.mrb[0].mxu0 %v1402
    %v1470 = vpop.f32.mrb[0].mxu0
    %v1471 = vadd.f32 0.0, %v1470
    %v1472 = vpop.f32.mrb[0].mxu0
    %1473 = vdwg.mxu0
    %v1475 = vrot.slane %v1471, 6
    %v1477 = vadd.f32 %v167, %v1475
    %1479 = vrot.lane.b32.xlu0 %v1398, 32
    %v1480 = vpop.permute.xlu0 %1479
    %v1481 = vsel %vm181, %v1480, 0
    %1483 = vmatprep.subr.mxu0 0.0
    %1484 = vmatpush1.msra.mxu0 %v68
    %1485 = vmatprep.subr.mxu0 0.0
    %1486 = vmatpush1.msra.mxu0 %v69
    %1487 = vmatprep.subr.mxu0 0.0
    %1488 = vmatpush1.msra.mxu0 %v70
    %1489 = vmatprep.subr.mxu0 0.0
    %1490 = vmatpush1.msra.mxu0 %v71
    %1491 = vmatprep.subr.mxu0 0.0
    %1492 = vmatpush1.msra.mxu0 0.0
    %1493 = vmatprep.subr.mxu0 0.0
    %1494 = vmatpush1.msra.mxu0 0.0
    %1495 = vmatprep.subr.mxu0 0.0
    %1496 = vmatpush1.msra.mxu0 0.0
    %1497 = vmatprep.subr.mxu0 0.0
    %1498 = vmatpush1.msra.mxu0 0.0
    %1499 = vmatprep.subr.mxu0 0.0
    %1500 = vmatpush1.msra.mxu0 0.0
    %1501 = vmatprep.subr.mxu0 0.0
    %1502 = vmatpush1.msra.mxu0 0.0
    %1503 = vmatprep.subr.mxu0 0.0
    %1504 = vmatpush1.msra.mxu0 0.0
    %1505 = vmatprep.subr.mxu0 0.0
    %1506 = vmatpush1.msra.mxu0 0.0
    %1507 = vmatprep.subr.mxu0 0.0
    %1508 = vmatpush1.msra.mxu0 0.0
    %1509 = vmatprep.subr.mxu0 0.0
    %1510 = vmatpush1.msra.mxu0 0.0
    %1511 = vmatprep.subr.mxu0 0.0
    %1512 = vmatpush1.msra.mxu0 0.0
    %1513 = vmatprep.subr.mxu0 0.0
    %1514 = vmatpush1.msra.mxu0 0.0
    %1515 = vmatprep.subr.mxu0 0.0
    %1516 = vmatpush1.msra.mxu0 0.0
    %1517 = vmatprep.subr.mxu0 0.0
    %1518 = vmatpush1.msra.mxu0 0.0
    %1519 = vmatprep.subr.mxu0 0.0
    %1520 = vmatpush1.msra.mxu0 0.0
    %1521 = vmatprep.subr.mxu0 0.0
    %1522 = vmatpush1.msra.mxu0 0.0
    %1523 = vmatprep.subr.mxu0 0.0
    %1524 = vmatpush1.msra.mxu0 0.0
    %1525 = vmatprep.subr.mxu0 0.0
    %1526 = vmatpush1.msra.mxu0 0.0
    %1527 = vmatprep.subr.mxu0 0.0
    %1528 = vmatpush1.msra.mxu0 0.0
    %1529 = vmatprep.subr.mxu0 0.0
    %1530 = vmatpush1.msra.mxu0 0.0
    %1531 = vmatprep.subr.mxu0 0.0
    %1532 = vmatpush1.msra.mxu0 0.0
    %1533 = vmatprep.subr.mxu0 0.0
    %1534 = vmatpush1.msra.mxu0 0.0
    %1535 = vmatprep.subr.mxu0 0.0
    %1536 = vmatpush1.msra.mxu0 0.0
    %1537 = vmatprep.subr.mxu0 0.0
    %1538 = vmatpush1.msra.mxu0 0.0
    %1539 = vmatprep.subr.mxu0 0.0
    %1540 = vmatpush1.msra.mxu0 0.0
    %1541 = vmatprep.subr.mxu0 0.0
    %1542 = vmatpush1.msra.mxu0 0.0
    %1543 = vmatprep.subr.mxu0 0.0
    %1544 = vmatpush1.msra.mxu0 0.0
    %1545 = vmatprep.subr.mxu0 0.0
    %1546 = vmatpush1.msra.mxu0 0.0
    %1547 = vmatprep.mubr.f32.mxu0 0.0
    %1548 = vmatmul.mubr.f32.gmra.mrb[0].mxu0 %v1481
    %v1549 = vpop.f32.mrb[0].mxu0
    %v1550 = vadd.f32 0.0, %v1549
    %v1551 = vpop.f32.mrb[0].mxu0
    %1552 = vdwg.mxu0
    %1553 = vmatprep.subr.mxu0 0.0
    %1554 = vmatpush1.msra.mxu0 %v60
    %1555 = vmatprep.subr.mxu0 0.0
    %1556 = vmatpush1.msra.mxu0 %v61
    %1557 = vmatprep.subr.mxu0 0.0
    %1558 = vmatpush1.msra.mxu0 %v62
    %1559 = vmatprep.subr.mxu0 0.0
    %1560 = vmatpush1.msra.mxu0 %v63
    %1561 = vmatprep.subr.mxu0 0.0
    %1562 = vmatpush1.msra.mxu0 0.0
    %1563 = vmatprep.subr.mxu0 0.0
    %1564 = vmatpush1.msra.mxu0 0.0
    %1565 = vmatprep.subr.mxu0 0.0
    %1566 = vmatpush1.msra.mxu0 0.0
    %1567 = vmatprep.subr.mxu0 0.0
    %1568 = vmatpush1.msra.mxu0 0.0
    %1569 = vmatprep.subr.mxu0 0.0
    %1570 = vmatpush1.msra.mxu0 0.0
    %1571 = vmatprep.subr.mxu0 0.0
    %1572 = vmatpush1.msra.mxu0 0.0
    %1573 = vmatprep.subr.mxu0 0.0
    %1574 = vmatpush1.msra.mxu0 0.0
    %1575 = vmatprep.subr.mxu0 0.0
    %1576 = vmatpush1.msra.mxu0 0.0
    %1577 = vmatprep.subr.mxu0 0.0
    %1578 = vmatpush1.msra.mxu0 0.0
    %1579 = vmatprep.subr.mxu0 0.0
    %1580 = vmatpush1.msra.mxu0 0.0
    %1581 = vmatprep.subr.mxu0 0.0
    %1582 = vmatpush1.msra.mxu0 0.0
    %1583 = vmatprep.subr.mxu0 0.0
    %1584 = vmatpush1.msra.mxu0 0.0
    %1585 = vmatprep.subr.mxu0 0.0
    %1586 = vmatpush1.msra.mxu0 0.0
    %1587 = vmatprep.subr.mxu0 0.0
    %1588 = vmatpush1.msra.mxu0 0.0
    %1589 = vmatprep.subr.mxu0 0.0
    %1590 = vmatpush1.msra.mxu0 0.0
    %1591 = vmatprep.subr.mxu0 0.0
    %1592 = vmatpush1.msra.mxu0 0.0
    %1593 = vmatprep.subr.mxu0 0.0
    %1594 = vmatpush1.msra.mxu0 0.0
    %1595 = vmatprep.subr.mxu0 0.0
    %1596 = vmatpush1.msra.mxu0 0.0
    %1597 = vmatprep.subr.mxu0 0.0
    %1598 = vmatpush1.msra.mxu0 0.0
    %1599 = vmatprep.subr.mxu0 0.0
    %1600 = vmatpush1.msra.mxu0 0.0
    %1601 = vmatprep.subr.mxu0 0.0
    %1602 = vmatpush1.msra.mxu0 0.0
    %1603 = vmatprep.subr.mxu0 0.0
    %1604 = vmatpush1.msra.mxu0 0.0
    %1605 = vmatprep.subr.mxu0 0.0
    %1606 = vmatpush1.msra.mxu0 0.0
    %1607 = vmatprep.subr.mxu0 0.0
    %1608 = vmatpush1.msra.mxu0 0.0
    %1609 = vmatprep.subr.mxu0 0.0
    %1610 = vmatpush1.msra.mxu0 0.0
    %1611 = vmatprep.subr.mxu0 0.0
    %1612 = vmatpush1.msra.mxu0 0.0
    %1613 = vmatprep.subr.mxu0 0.0
    %1614 = vmatpush1.msra.mxu0 0.0
    %1615 = vmatprep.subr.mxu0 0.0
    %1616 = vmatpush1.msra.mxu0 0.0
    %1617 = vmatprep.mubr.f32.mxu0 0.0
    %1618 = vmatmul.mubr.f32.gmra.mrb[0].mxu0 %v1402
    %v1619 = vpop.f32.mrb[0].mxu0
    %v1620 = vadd.f32 %v1550, %v1619
    %v1621 = vpop.f32.mrb[0].mxu0
    %1622 = vdwg.mxu0
    %v1623 = vadd.f32 %v1620, %v78
    %v1624 = vtanh.pop %v1477
    %v1625 = vxor.u32 %v1477, 2147483648
    %v1626 = vmul.f32 %v1625, 1.442695
    %v1627 = vpow.pop %v1626
    %v1628 = vadd.f32 %v1627, 1.0
    %v1629 = vrcp.pop %v1628
    %v1630 = vmul.f32 1.0, %v1629
    %v1631 = vsel %vm174, %v1624, %v1630
    %v1633 = vrot.slane %v1367, 6
    %v1635 = vmul.f32 %v1631, %v1633
    %1637 = vrot.lane.b32.xlu0 %v1631, 64
    %v1638 = vpop.permute.xlu0 %1637
    %v1640 = vmul.f32 %v1631, %v1638
    %1642 = vrot.lane.b32.xlu0 %v1640, 32
    %v1643 = vpop.permute.xlu0 %1642
    %v1645 = vadd.f32 %v1635, %v1643
    %v1646 = vtanh.pop %v1645
    %1648 = vrot.lane.b32.xlu0 %v1646, 64
    %v1649 = vpop.permute.xlu0 %1648
    %v1651 = vmul.f32 %v1631, %v1649
    %v1652 = vtanh.pop %v1623
    %v1653 = vxor.u32 %v1623, 2147483648
    %v1654 = vmul.f32 %v1653, 1.442695
    %v1655 = vpow.pop %v1654
    %v1656 = vadd.f32 %v1655, 1.0
    %v1657 = vrcp.pop %v1656
    %v1658 = vmul.f32 1.0, %v1657
    %v1659 = vsel %vm174, %v1652, %v1658
    %v1660 = vmul.f32 %v1659, %v1392
    %1662 = vrot.lane.b32.xlu0 %v1659, 64
    %v1663 = vpop.permute.xlu0 %1662
    %v1665 = vmul.f32 %v1659, %v1663
    %1667 = vrot.lane.b32.xlu0 %v1665, 32
    %v1668 = vpop.permute.xlu0 %1667
    %v1670 = vadd.f32 %v1660, %v1668
    %v1671 = vtanh.pop %v1670
    %1673 = vrot.lane.b32.xlu0 %v1671, 64
    %v1674 = vpop.permute.xlu0 %1673
    %v1676 = vmul.f32 %v1659, %v1674
    %v1678 = vrot.slane %v1651, 2
    %1679 = vrot.lane.b32.xlu0 %v1678, 32
    %v1680 = vpop.permute.xlu0 %1679
    %v1681 = vsel %vm181, %v1680, 0
    %1683 = vmatprep.subr.mxu0 0.0
    %1684 = vmatpush1.msra.mxu0 %v64
    %1685 = vmatprep.subr.mxu0 0.0
    %1686 = vmatpush1.msra.mxu0 %v65
    %1687 = vmatprep.subr.mxu0 0.0
    %1688 = vmatpush1.msra.mxu0 %v66
    %1689 = vmatprep.subr.mxu0 0.0
    %1690 = vmatpush1.msra.mxu0 %v67
    %1691 = vmatprep.subr.mxu0 0.0
    %1692 = vmatpush1.msra.mxu0 0.0
    %1693 = vmatprep.subr.mxu0 0.0
    %1694 = vmatpush1.msra.mxu0 0.0
    %1695 = vmatprep.subr.mxu0 0.0
    %1696 = vmatpush1.msra.mxu0 0.0
    %1697 = vmatprep.subr.mxu0 0.0
    %1698 = vmatpush1.msra.mxu0 0.0
    %1699 = vmatprep.subr.mxu0 0.0
    %1700 = vmatpush1.msra.mxu0 0.0
    %1701 = vmatprep.subr.mxu0 0.0
    %1702 = vmatpush1.msra.mxu0 0.0
    %1703 = vmatprep.subr.mxu0 0.0
    %1704 = vmatpush1.msra.mxu0 0.0
    %1705 = vmatprep.subr.mxu0 0.0
    %1706 = vmatpush1.msra.mxu0 0.0
    %1707 = vmatprep.subr.mxu0 0.0
    %1708 = vmatpush1.msra.mxu0 0.0
    %1709 = vmatprep.subr.mxu0 0.0
    %1710 = vmatpush1.msra.mxu0 0.0
    %1711 = vmatprep.subr.mxu0 0.0
    %1712 = vmatpush1.msra.mxu0 0.0
    %1713 = vmatprep.subr.mxu0 0.0
    %1714 = vmatpush1.msra.mxu0 0.0
    %1715 = vmatprep.subr.mxu0 0.0
    %1716 = vmatpush1.msra.mxu0 0.0
    %1717 = vmatprep.subr.mxu0 0.0
    %1718 = vmatpush1.msra.mxu0 0.0
    %1719 = vmatprep.subr.mxu0 0.0
    %1720 = vmatpush1.msra.mxu0 0.0
    %1721 = vmatprep.subr.mxu0 0.0
    %1722 = vmatpush1.msra.mxu0 0.0
    %1723 = vmatprep.subr.mxu0 0.0
    %1724 = vmatpush1.msra.mxu0 0.0
    %1725 = vmatprep.subr.mxu0 0.0
    %1726 = vmatpush1.msra.mxu0 0.0
    %1727 = vmatprep.subr.mxu0 0.0
    %1728 = vmatpush1.msra.mxu0 0.0
    %1729 = vmatprep.subr.mxu0 0.0
    %1730 = vmatpush1.msra.mxu0 0.0
    %1731 = vmatprep.subr.mxu0 0.0
    %1732 = vmatpush1.msra.mxu0 0.0
    %1733 = vmatprep.subr.mxu0 0.0
    %1734 = vmatpush1.msra.mxu0 0.0
    %1735 = vmatprep.subr.mxu0 0.0
    %1736 = vmatpush1.msra.mxu0 0.0
    %1737 = vmatprep.subr.mxu0 0.0
    %1738 = vmatpush1.msra.mxu0 0.0
    %1739 = vmatprep.subr.mxu0 0.0
    %1740 = vmatpush1.msra.mxu0 0.0
    %1741 = vmatprep.subr.mxu0 0.0
    %1742 = vmatpush1.msra.mxu0 0.0
    %1743 = vmatprep.subr.mxu0 0.0
    %1744 = vmatpush1.msra.mxu0 0.0
    %1745 = vmatprep.subr.mxu0 0.0
    %1746 = vmatpush1.msra.mxu0 0.0
    %1747 = vmatprep.mubr.f32.mxu0 0.0
    %1748 = vmatmul.mubr.f32.gmra.mrb[0].mxu0 %v1681
    %v1749 = vpop.f32.mrb[0].mxu0
    %v1750 = vadd.f32 0.0, %v1749
    %v1751 = vpop.f32.mrb[0].mxu0
    %1752 = vdwg.mxu0
    %v1754 = vrot.slane %v1750, 4
    %v1756 = vadd.f32 %v167, %v1754
    %1758 = vrot.lane.b32.xlu0 %v1676, 32
    %v1759 = vpop.permute.xlu0 %1758
    %v1760 = vsel %vm181, %v1759, 0
    %1762 = vmatprep.subr.mxu0 0.0
    %1763 = vmatpush1.msra.mxu0 %v68
    %1764 = vmatprep.subr.mxu0 0.0
    %1765 = vmatpush1.msra.mxu0 %v69
    %1766 = vmatprep.subr.mxu0 0.0
    %1767 = vmatpush1.msra.mxu0 %v70
    %1768 = vmatprep.subr.mxu0 0.0
    %1769 = vmatpush1.msra.mxu0 %v71
    %1770 = vmatprep.subr.mxu0 0.0
    %1771 = vmatpush1.msra.mxu0 0.0
    %1772 = vmatprep.subr.mxu0 0.0
    %1773 = vmatpush1.msra.mxu0 0.0
    %1774 = vmatprep.subr.mxu0 0.0
    %1775 = vmatpush1.msra.mxu0 0.0
    %1776 = vmatprep.subr.mxu0 0.0
    %1777 = vmatpush1.msra.mxu0 0.0
    %1778 = vmatprep.subr.mxu0 0.0
    %1779 = vmatpush1.msra.mxu0 0.0
    %1780 = vmatprep.subr.mxu0 0.0
    %1781 = vmatpush1.msra.mxu0 0.0
    %1782 = vmatprep.subr.mxu0 0.0
    %1783 = vmatpush1.msra.mxu0 0.0
    %1784 = vmatprep.subr.mxu0 0.0
    %1785 = vmatpush1.msra.mxu0 0.0
    %1786 = vmatprep.subr.mxu0 0.0
    %1787 = vmatpush1.msra.mxu0 0.0
    %1788 = vmatprep.subr.mxu0 0.0
    %1789 = vmatpush1.msra.mxu0 0.0
    %1790 = vmatprep.subr.mxu0 0.0
    %1791 = vmatpush1.msra.mxu0 0.0
    %1792 = vmatprep.subr.mxu0 0.0
    %1793 = vmatpush1.msra.mxu0 0.0
    %1794 = vmatprep.subr.mxu0 0.0
    %1795 = vmatpush1.msra.mxu0 0.0
    %1796 = vmatprep.subr.mxu0 0.0
    %1797 = vmatpush1.msra.mxu0 0.0
    %1798 = vmatprep.subr.mxu0 0.0
    %1799 = vmatpush1.msra.mxu0 0.0
    %1800 = vmatprep.subr.mxu0 0.0
    %1801 = vmatpush1.msra.mxu0 0.0
    %1802 = vmatprep.subr.mxu0 0.0
    %1803 = vmatpush1.msra.mxu0 0.0
    %1804 = vmatprep.subr.mxu0 0.0
    %1805 = vmatpush1.msra.mxu0 0.0
    %1806 = vmatprep.subr.mxu0 0.0
    %1807 = vmatpush1.msra.mxu0 0.0
    %1808 = vmatprep.subr.mxu0 0.0
    %1809 = vmatpush1.msra.mxu0 0.0
    %1810 = vmatprep.subr.mxu0 0.0
    %1811 = vmatpush1.msra.mxu0 0.0
    %1812 = vmatprep.subr.mxu0 0.0
    %1813 = vmatpush1.msra.mxu0 0.0
    %1814 = vmatprep.subr.mxu0 0.0
    %1815 = vmatpush1.msra.mxu0 0.0
    %1816 = vmatprep.subr.mxu0 0.0
    %1817 = vmatpush1.msra.mxu0 0.0
    %1818 = vmatprep.subr.mxu0 0.0
    %1819 = vmatpush1.msra.mxu0 0.0
    %1820 = vmatprep.subr.mxu0 0.0
    %1821 = vmatpush1.msra.mxu0 0.0
    %1822 = vmatprep.subr.mxu0 0.0
    %1823 = vmatpush1.msra.mxu0 0.0
    %1824 = vmatprep.subr.mxu0 0.0
    %1825 = vmatpush1.msra.mxu0 0.0
    %1826 = vmatprep.mubr.f32.mxu0 0.0
    %1827 = vmatmul.mubr.f32.gmra.mrb[0].mxu0 %v1760
    %v1828 = vpop.f32.mrb[0].mxu0
    %v1829 = vadd.f32 0.0, %v1828
    %v1830 = vpop.f32.mrb[0].mxu0
    %1831 = vdwg.mxu0
    %1832 = vmatprep.subr.mxu0 0.0
    %1833 = vmatpush1.msra.mxu0 %v60
    %1834 = vmatprep.subr.mxu0 0.0
    %1835 = vmatpush1.msra.mxu0 %v61
    %1836 = vmatprep.subr.mxu0 0.0
    %1837 = vmatpush1.msra.mxu0 %v62
    %1838 = vmatprep.subr.mxu0 0.0
    %1839 = vmatpush1.msra.mxu0 %v63
    %1840 = vmatprep.subr.mxu0 0.0
    %1841 = vmatpush1.msra.mxu0 0.0
    %1842 = vmatprep.subr.mxu0 0.0
    %1843 = vmatpush1.msra.mxu0 0.0
    %1844 = vmatprep.subr.mxu0 0.0
    %1845 = vmatpush1.msra.mxu0 0.0
    %1846 = vmatprep.subr.mxu0 0.0
    %1847 = vmatpush1.msra.mxu0 0.0
    %1848 = vmatprep.subr.mxu0 0.0
    %1849 = vmatpush1.msra.mxu0 0.0
    %1850 = vmatprep.subr.mxu0 0.0
    %1851 = vmatpush1.msra.mxu0 0.0
    %1852 = vmatprep.subr.mxu0 0.0
    %1853 = vmatpush1.msra.mxu0 0.0
    %1854 = vmatprep.subr.mxu0 0.0
    %1855 = vmatpush1.msra.mxu0 0.0
    %1856 = vmatprep.subr.mxu0 0.0
    %1857 = vmatpush1.msra.mxu0 0.0
    %1858 = vmatprep.subr.mxu0 0.0
    %1859 = vmatpush1.msra.mxu0 0.0
    %1860 = vmatprep.subr.mxu0 0.0
    %1861 = vmatpush1.msra.mxu0 0.0
    %1862 = vmatprep.subr.mxu0 0.0
    %1863 = vmatpush1.msra.mxu0 0.0
    %1864 = vmatprep.subr.mxu0 0.0
    %1865 = vmatpush1.msra.mxu0 0.0
    %1866 = vmatprep.subr.mxu0 0.0
    %1867 = vmatpush1.msra.mxu0 0.0
    %1868 = vmatprep.subr.mxu0 0.0
    %1869 = vmatpush1.msra.mxu0 0.0
    %1870 = vmatprep.subr.mxu0 0.0
    %1871 = vmatpush1.msra.mxu0 0.0
    %1872 = vmatprep.subr.mxu0 0.0
    %1873 = vmatpush1.msra.mxu0 0.0
    %1874 = vmatprep.subr.mxu0 0.0
    %1875 = vmatpush1.msra.mxu0 0.0
    %1876 = vmatprep.subr.mxu0 0.0
    %1877 = vmatpush1.msra.mxu0 0.0
    %1878 = vmatprep.subr.mxu0 0.0
    %1879 = vmatpush1.msra.mxu0 0.0
    %1880 = vmatprep.subr.mxu0 0.0
    %1881 = vmatpush1.msra.mxu0 0.0
    %1882 = vmatprep.subr.mxu0 0.0
    %1883 = vmatpush1.msra.mxu0 0.0
    %1884 = vmatprep.subr.mxu0 0.0
    %1885 = vmatpush1.msra.mxu0 0.0
    %1886 = vmatprep.subr.mxu0 0.0
    %1887 = vmatpush1.msra.mxu0 0.0
    %1888 = vmatprep.subr.mxu0 0.0
    %1889 = vmatpush1.msra.mxu0 0.0
    %1890 = vmatprep.subr.mxu0 0.0
    %1891 = vmatpush1.msra.mxu0 0.0
    %1892 = vmatprep.subr.mxu0 0.0
    %1893 = vmatpush1.msra.mxu0 0.0
    %1894 = vmatprep.subr.mxu0 0.0
    %1895 = vmatpush1.msra.mxu0 0.0
    %1896 = vmatprep.mubr.f32.mxu0 0.0
    %1897 = vmatmul.mubr.f32.gmra.mrb[0].mxu0 %v1681
    %v1898 = vpop.f32.mrb[0].mxu0
    %v1899 = vadd.f32 %v1829, %v1898
    %v1900 = vpop.f32.mrb[0].mxu0
    %1901 = vdwg.mxu0
    %v1902 = vadd.f32 %v1899, %v78
    %v1903 = vtanh.pop %v1756
    %v1904 = vxor.u32 %v1756, 2147483648
    %v1905 = vmul.f32 %v1904, 1.442695
    %v1906 = vpow.pop %v1905
    %v1907 = vadd.f32 %v1906, 1.0
    %v1908 = vrcp.pop %v1907
    %v1909 = vmul.f32 1.0, %v1908
    %v1910 = vsel %vm174, %v1903, %v1909
    %v1912 = vrot.slane %v1645, 6
    %v1914 = vmul.f32 %v1910, %v1912
    %1916 = vrot.lane.b32.xlu0 %v1910, 64
    %v1917 = vpop.permute.xlu0 %1916
    %v1919 = vmul.f32 %v1910, %v1917
    %1921 = vrot.lane.b32.xlu0 %v1919, 32
    %v1922 = vpop.permute.xlu0 %1921
    %v1924 = vadd.f32 %v1914, %v1922
    %v1925 = vtanh.pop %v1924
    %1927 = vrot.lane.b32.xlu0 %v1925, 64
    %v1928 = vpop.permute.xlu0 %1927
    %v1930 = vmul.f32 %v1910, %v1928
    %v1931 = vtanh.pop %v1902
    %v1932 = vxor.u32 %v1902, 2147483648
    %v1933 = vmul.f32 %v1932, 1.442695
    %v1934 = vpow.pop %v1933
    %v1935 = vadd.f32 %v1934, 1.0
    %v1936 = vrcp.pop %v1935
    %v1937 = vmul.f32 1.0, %v1936
    %v1938 = vsel %vm174, %v1931, %v1937
    %v1939 = vmul.f32 %v1938, %v1670
    %1941 = vrot.lane.b32.xlu0 %v1938, 64
    %v1942 = vpop.permute.xlu0 %1941
    %v1944 = vmul.f32 %v1938, %v1942
    %1946 = vrot.lane.b32.xlu0 %v1944, 32
    %v1947 = vpop.permute.xlu0 %1946
    %v1949 = vadd.f32 %v1939, %v1947
    %v1950 = vtanh.pop %v1949
    %1952 = vrot.lane.b32.xlu0 %v1950, 64
    %v1953 = vpop.permute.xlu0 %1952
    %v1955 = vmul.f32 %v1938, %v1953
    %v1957 = vrot.slane %v1930, 4
    %1958 = vrot.lane.b32.xlu0 %v1957, 32
    %v1959 = vpop.permute.xlu0 %1958
    %v1960 = vsel %vm181, %v1959, 0
    %1962 = vmatprep.subr.mxu0 0.0
    %1963 = vmatpush1.msra.mxu0 %v64
    %1964 = vmatprep.subr.mxu0 0.0
    %1965 = vmatpush1.msra.mxu0 %v65
    %1966 = vmatprep.subr.mxu0 0.0
    %1967 = vmatpush1.msra.mxu0 %v66
    %1968 = vmatprep.subr.mxu0 0.0
    %1969 = vmatpush1.msra.mxu0 %v67
    %1970 = vmatprep.subr.mxu0 0.0
    %1971 = vmatpush1.msra.mxu0 0.0
    %1972 = vmatprep.subr.mxu0 0.0
    %1973 = vmatpush1.msra.mxu0 0.0
    %1974 = vmatprep.subr.mxu0 0.0
    %1975 = vmatpush1.msra.mxu0 0.0
    %1976 = vmatprep.subr.mxu0 0.0
    %1977 = vmatpush1.msra.mxu0 0.0
    %1978 = vmatprep.subr.mxu0 0.0
    %1979 = vmatpush1.msra.mxu0 0.0
    %1980 = vmatprep.subr.mxu0 0.0
    %1981 = vmatpush1.msra.mxu0 0.0
    %1982 = vmatprep.subr.mxu0 0.0
    %1983 = vmatpush1.msra.mxu0 0.0
    %1984 = vmatprep.subr.mxu0 0.0
    %1985 = vmatpush1.msra.mxu0 0.0
    %1986 = vmatprep.subr.mxu0 0.0
    %1987 = vmatpush1.msra.mxu0 0.0
    %1988 = vmatprep.subr.mxu0 0.0
    %1989 = vmatpush1.msra.mxu0 0.0
    %1990 = vmatprep.subr.mxu0 0.0
    %1991 = vmatpush1.msra.mxu0 0.0
    %1992 = vmatprep.subr.mxu0 0.0
    %1993 = vmatpush1.msra.mxu0 0.0
    %1994 = vmatprep.subr.mxu0 0.0
    %1995 = vmatpush1.msra.mxu0 0.0
    %1996 = vmatprep.subr.mxu0 0.0
    %1997 = vmatpush1.msra.mxu0 0.0
    %1998 = vmatprep.subr.mxu0 0.0
    %1999 = vmatpush1.msra.mxu0 0.0
    %2000 = vmatprep.subr.mxu0 0.0
    %2001 = vmatpush1.msra.mxu0 0.0
    %2002 = vmatprep.subr.mxu0 0.0
    %2003 = vmatpush1.msra.mxu0 0.0
    %2004 = vmatprep.subr.mxu0 0.0
    %2005 = vmatpush1.msra.mxu0 0.0
    %2006 = vmatprep.subr.mxu0 0.0
    %2007 = vmatpush1.msra.mxu0 0.0
    %2008 = vmatprep.subr.mxu0 0.0
    %2009 = vmatpush1.msra.mxu0 0.0
    %2010 = vmatprep.subr.mxu0 0.0
    %2011 = vmatpush1.msra.mxu0 0.0
    %2012 = vmatprep.subr.mxu0 0.0
    %2013 = vmatpush1.msra.mxu0 0.0
    %2014 = vmatprep.subr.mxu0 0.0
    %2015 = vmatpush1.msra.mxu0 0.0
    %2016 = vmatprep.subr.mxu0 0.0
    %2017 = vmatpush1.msra.mxu0 0.0
    %2018 = vmatprep.subr.mxu0 0.0
    %2019 = vmatpush1.msra.mxu0 0.0
    %2020 = vmatprep.subr.mxu0 0.0
    %2021 = vmatpush1.msra.mxu0 0.0
    %2022 = vmatprep.subr.mxu0 0.0
    %2023 = vmatpush1.msra.mxu0 0.0
    %2024 = vmatprep.subr.mxu0 0.0
    %2025 = vmatpush1.msra.mxu0 0.0
    %2026 = vmatprep.mubr.f32.mxu0 0.0
    %2027 = vmatmul.mubr.f32.gmra.mrb[0].mxu0 %v1960
    %v2028 = vpop.f32.mrb[0].mxu0
    %v2029 = vadd.f32 0.0, %v2028
    %v2030 = vpop.f32.mrb[0].mxu0
    %2031 = vdwg.mxu0
    %v2033 = vrot.slane %v2029, 2
    %v2035 = vadd.f32 %v167, %v2033
    %2037 = vrot.lane.b32.xlu0 %v1955, 32
    %v2038 = vpop.permute.xlu0 %2037
    %v2039 = vsel %vm181, %v2038, 0
    %2041 = vmatprep.subr.mxu0 0.0
    %2042 = vmatpush1.msra.mxu0 %v68
    %2043 = vmatprep.subr.mxu0 0.0
    %2044 = vmatpush1.msra.mxu0 %v69
    %2045 = vmatprep.subr.mxu0 0.0
    %2046 = vmatpush1.msra.mxu0 %v70
    %2047 = vmatprep.subr.mxu0 0.0
    %2048 = vmatpush1.msra.mxu0 %v71
    %2049 = vmatprep.subr.mxu0 0.0
    %2050 = vmatpush1.msra.mxu0 0.0
    %2051 = vmatprep.subr.mxu0 0.0
    %2052 = vmatpush1.msra.mxu0 0.0
    %2053 = vmatprep.subr.mxu0 0.0
    %2054 = vmatpush1.msra.mxu0 0.0
    %2055 = vmatprep.subr.mxu0 0.0
    %2056 = vmatpush1.msra.mxu0 0.0
    %2057 = vmatprep.subr.mxu0 0.0
    %2058 = vmatpush1.msra.mxu0 0.0
    %2059 = vmatprep.subr.mxu0 0.0
    %2060 = vmatpush1.msra.mxu0 0.0
    %2061 = vmatprep.subr.mxu0 0.0
    %2062 = vmatpush1.msra.mxu0 0.0
    %2063 = vmatprep.subr.mxu0 0.0
    %2064 = vmatpush1.msra.mxu0 0.0
    %2065 = vmatprep.subr.mxu0 0.0
    %2066 = vmatpush1.msra.mxu0 0.0
    %2067 = vmatprep.subr.mxu0 0.0
    %2068 = vmatpush1.msra.mxu0 0.0
    %2069 = vmatprep.subr.mxu0 0.0
    %2070 = vmatpush1.msra.mxu0 0.0
    %2071 = vmatprep.subr.mxu0 0.0
    %2072 = vmatpush1.msra.mxu0 0.0
    %2073 = vmatprep.subr.mxu0 0.0
    %2074 = vmatpush1.msra.mxu0 0.0
    %2075 = vmatprep.subr.mxu0 0.0
    %2076 = vmatpush1.msra.mxu0 0.0
    %2077 = vmatprep.subr.mxu0 0.0
    %2078 = vmatpush1.msra.mxu0 0.0
    %2079 = vmatprep.subr.mxu0 0.0
    %2080 = vmatpush1.msra.mxu0 0.0
    %2081 = vmatprep.subr.mxu0 0.0
    %2082 = vmatpush1.msra.mxu0 0.0
    %2083 = vmatprep.subr.mxu0 0.0
    %2084 = vmatpush1.msra.mxu0 0.0
    %2085 = vmatprep.subr.mxu0 0.0
    %2086 = vmatpush1.msra.mxu0 0.0
    %2087 = vmatprep.subr.mxu0 0.0
    %2088 = vmatpush1.msra.mxu0 0.0
    %2089 = vmatprep.subr.mxu0 0.0
    %2090 = vmatpush1.msra.mxu0 0.0
    %2091 = vmatprep.subr.mxu0 0.0
    %2092 = vmatpush1.msra.mxu0 0.0
    %2093 = vmatprep.subr.mxu0 0.0
    %2094 = vmatpush1.msra.mxu0 0.0
    %2095 = vmatprep.subr.mxu0 0.0
    %2096 = vmatpush1.msra.mxu0 0.0
    %2097 = vmatprep.subr.mxu0 0.0
    %2098 = vmatpush1.msra.mxu0 0.0
    %2099 = vmatprep.subr.mxu0 0.0
    %2100 = vmatpush1.msra.mxu0 0.0
    %2101 = vmatprep.subr.mxu0 0.0
    %2102 = vmatpush1.msra.mxu0 0.0
    %2103 = vmatprep.subr.mxu0 0.0
    %2104 = vmatpush1.msra.mxu0 0.0
    %2105 = vmatprep.mubr.f32.mxu0 0.0
    %2106 = vmatmul.mubr.f32.gmra.mrb[0].mxu0 %v2039
    %v2107 = vpop.f32.mrb[0].mxu0
    %v2108 = vadd.f32 0.0, %v2107
    %v2109 = vpop.f32.mrb[0].mxu0
    %2110 = vdwg.mxu0
    %2111 = vmatprep.subr.mxu0 0.0
    %2112 = vmatpush1.msra.mxu0 %v60
    %2113 = vmatprep.subr.mxu0 0.0
    %2114 = vmatpush1.msra.mxu0 %v61
    %2115 = vmatprep.subr.mxu0 0.0
    %2116 = vmatpush1.msra.mxu0 %v62
    %2117 = vmatprep.subr.mxu0 0.0
    %2118 = vmatpush1.msra.mxu0 %v63
    %2119 = vmatprep.subr.mxu0 0.0
    %2120 = vmatpush1.msra.mxu0 0.0
    %2121 = vmatprep.subr.mxu0 0.0
    %2122 = vmatpush1.msra.mxu0 0.0
    %2123 = vmatprep.subr.mxu0 0.0
    %2124 = vmatpush1.msra.mxu0 0.0
    %2125 = vmatprep.subr.mxu0 0.0
    %2126 = vmatpush1.msra.mxu0 0.0
    %2127 = vmatprep.subr.mxu0 0.0
    %2128 = vmatpush1.msra.mxu0 0.0
    %2129 = vmatprep.subr.mxu0 0.0
    %2130 = vmatpush1.msra.mxu0 0.0
    %2131 = vmatprep.subr.mxu0 0.0
    %2132 = vmatpush1.msra.mxu0 0.0
    %2133 = vmatprep.subr.mxu0 0.0
    %2134 = vmatpush1.msra.mxu0 0.0
    %2135 = vmatprep.subr.mxu0 0.0
    %2136 = vmatpush1.msra.mxu0 0.0
    %2137 = vmatprep.subr.mxu0 0.0
    %2138 = vmatpush1.msra.mxu0 0.0
    %2139 = vmatprep.subr.mxu0 0.0
    %2140 = vmatpush1.msra.mxu0 0.0
    %2141 = vmatprep.subr.mxu0 0.0
    %2142 = vmatpush1.msra.mxu0 0.0
    %2143 = vmatprep.subr.mxu0 0.0
    %2144 = vmatpush1.msra.mxu0 0.0
    %2145 = vmatprep.subr.mxu0 0.0
    %2146 = vmatpush1.msra.mxu0 0.0
    %2147 = vmatprep.subr.mxu0 0.0
    %2148 = vmatpush1.msra.mxu0 0.0
    %2149 = vmatprep.subr.mxu0 0.0
    %2150 = vmatpush1.msra.mxu0 0.0
    %2151 = vmatprep.subr.mxu0 0.0
    %2152 = vmatpush1.msra.mxu0 0.0
    %2153 = vmatprep.subr.mxu0 0.0
    %2154 = vmatpush1.msra.mxu0 0.0
    %2155 = vmatprep.subr.mxu0 0.0
    %2156 = vmatpush1.msra.mxu0 0.0
    %2157 = vmatprep.subr.mxu0 0.0
    %2158 = vmatpush1.msra.mxu0 0.0
    %2159 = vmatprep.subr.mxu0 0.0
    %2160 = vmatpush1.msra.mxu0 0.0
    %2161 = vmatprep.subr.mxu0 0.0
    %2162 = vmatpush1.msra.mxu0 0.0
    %2163 = vmatprep.subr.mxu0 0.0
    %2164 = vmatpush1.msra.mxu0 0.0
    %2165 = vmatprep.subr.mxu0 0.0
    %2166 = vmatpush1.msra.mxu0 0.0
    %2167 = vmatprep.subr.mxu0 0.0
    %2168 = vmatpush1.msra.mxu0 0.0
    %2169 = vmatprep.subr.mxu0 0.0
    %2170 = vmatpush1.msra.mxu0 0.0
    %2171 = vmatprep.subr.mxu0 0.0
    %2172 = vmatpush1.msra.mxu0 0.0
    %2173 = vmatprep.subr.mxu0 0.0
    %2174 = vmatpush1.msra.mxu0 0.0
    %2175 = vmatprep.mubr.f32.mxu0 0.0
    %2176 = vmatmul.mubr.f32.gmra.mrb[0].mxu0 %v1960
    %v2177 = vpop.f32.mrb[0].mxu0
    %v2178 = vadd.f32 %v2108, %v2177
    %v2179 = vpop.f32.mrb[0].mxu0
    %2180 = vdwg.mxu0
    %v2181 = vadd.f32 %v2178, %v78
    %v2182 = vtanh.pop %v2035
    %v2183 = vxor.u32 %v2035, 2147483648
    %v2184 = vmul.f32 %v2183, 1.442695
    %v2185 = vpow.pop %v2184
    %v2186 = vadd.f32 %v2185, 1.0
    %v2187 = vrcp.pop %v2186
    %v2188 = vmul.f32 1.0, %v2187
    %v2189 = vsel %vm174, %v2182, %v2188
    %v2191 = vrot.slane %v1924, 6
    %v2193 = vmul.f32 %v2189, %v2191
    %2195 = vrot.lane.b32.xlu0 %v2189, 64
    %v2196 = vpop.permute.xlu0 %2195
    %v2198 = vmul.f32 %v2189, %v2196
    %2200 = vrot.lane.b32.xlu0 %v2198, 32
    %v2201 = vpop.permute.xlu0 %2200
    %v2203 = vadd.f32 %v2193, %v2201
    %v2204 = vtanh.pop %v2203
    %2206 = vrot.lane.b32.xlu0 %v2204, 64
    %v2207 = vpop.permute.xlu0 %2206
    %v2209 = vmul.f32 %v2189, %v2207
    %v2210 = vtanh.pop %v2181
    %v2211 = vxor.u32 %v2181, 2147483648
    %v2212 = vmul.f32 %v2211, 1.442695
    %v2213 = vpow.pop %v2212
    %v2214 = vadd.f32 %v2213, 1.0
    %v2215 = vrcp.pop %v2214
    %v2216 = vmul.f32 1.0, %v2215
    %v2217 = vsel %vm174, %v2210, %v2216
    %v2218 = vmul.f32 %v2217, %v1949
    %2220 = vrot.lane.b32.xlu0 %v2217, 64
    %v2221 = vpop.permute.xlu0 %2220
    %v2223 = vmul.f32 %v2217, %v2221
    %2225 = vrot.lane.b32.xlu0 %v2223, 32
    %v2226 = vpop.permute.xlu0 %2225
    %v2228 = vadd.f32 %v2218, %v2226
    %v2229 = vtanh.pop %v2228
    %2231 = vrot.lane.b32.xlu0 %v2229, 64
    %v2232 = vpop.permute.xlu0 %2231
    %v2234 = vmul.f32 %v2217, %v2232
    %2236 = vrot.lane.b32.xlu0 %v2234, 32
    %v2237 = vpop.permute.xlu0 %2236
    %v2238 = vsel %vm181, %v2237, 0
    %2240 = vmatprep.subr.mxu0 0.0
    %2241 = vmatpush1.msra.mxu0 %v68
    %2242 = vmatprep.subr.mxu0 0.0
    %2243 = vmatpush1.msra.mxu0 %v69
    %2244 = vmatprep.subr.mxu0 0.0
    %2245 = vmatpush1.msra.mxu0 %v70
    %2246 = vmatprep.subr.mxu0 0.0
    %2247 = vmatpush1.msra.mxu0 %v71
    %2248 = vmatprep.subr.mxu0 0.0
    %2249 = vmatpush1.msra.mxu0 0.0
    %2250 = vmatprep.subr.mxu0 0.0
    %2251 = vmatpush1.msra.mxu0 0.0
    %2252 = vmatprep.subr.mxu0 0.0
    %2253 = vmatpush1.msra.mxu0 0.0
    %2254 = vmatprep.subr.mxu0 0.0
    %2255 = vmatpush1.msra.mxu0 0.0
    %2256 = vmatprep.subr.mxu0 0.0
    %2257 = vmatpush1.msra.mxu0 0.0
    %2258 = vmatprep.subr.mxu0 0.0
    %2259 = vmatpush1.msra.mxu0 0.0
    %2260 = vmatprep.subr.mxu0 0.0
    %2261 = vmatpush1.msra.mxu0 0.0
    %2262 = vmatprep.subr.mxu0 0.0
    %2263 = vmatpush1.msra.mxu0 0.0
    %2264 = vmatprep.subr.mxu0 0.0
    %2265 = vmatpush1.msra.mxu0 0.0
    %2266 = vmatprep.subr.mxu0 0.0
    %2267 = vmatpush1.msra.mxu0 0.0
    %2268 = vmatprep.subr.mxu0 0.0
    %2269 = vmatpush1.msra.mxu0 0.0
    %2270 = vmatprep.subr.mxu0 0.0
    %2271 = vmatpush1.msra.mxu0 0.0
    %2272 = vmatprep.subr.mxu0 0.0
    %2273 = vmatpush1.msra.mxu0 0.0
    %2274 = vmatprep.subr.mxu0 0.0
    %2275 = vmatpush1.msra.mxu0 0.0
    %2276 = vmatprep.subr.mxu0 0.0
    %2277 = vmatpush1.msra.mxu0 0.0
    %2278 = vmatprep.subr.mxu0 0.0
    %2279 = vmatpush1.msra.mxu0 0.0
    %2280 = vmatprep.subr.mxu0 0.0
    %2281 = vmatpush1.msra.mxu0 0.0
    %2282 = vmatprep.subr.mxu0 0.0
    %2283 = vmatpush1.msra.mxu0 0.0
    %2284 = vmatprep.subr.mxu0 0.0
    %2285 = vmatpush1.msra.mxu0 0.0
    %2286 = vmatprep.subr.mxu0 0.0
    %2287 = vmatpush1.msra.mxu0 0.0
    %2288 = vmatprep.subr.mxu0 0.0
    %2289 = vmatpush1.msra.mxu0 0.0
    %2290 = vmatprep.subr.mxu0 0.0
    %2291 = vmatpush1.msra.mxu0 0.0
    %2292 = vmatprep.subr.mxu0 0.0
    %2293 = vmatpush1.msra.mxu0 0.0
    %2294 = vmatprep.subr.mxu0 0.0
    %2295 = vmatpush1.msra.mxu0 0.0
    %2296 = vmatprep.subr.mxu0 0.0
    %2297 = vmatpush1.msra.mxu0 0.0
    %2298 = vmatprep.subr.mxu0 0.0
    %2299 = vmatpush1.msra.mxu0 0.0
    %2300 = vmatprep.subr.mxu0 0.0
    %2301 = vmatpush1.msra.mxu0 0.0
    %2302 = vmatprep.subr.mxu0 0.0
    %2303 = vmatpush1.msra.mxu0 0.0
    %2304 = vmatprep.mubr.f32.mxu0 0.0
    %2305 = vmatmul.mubr.f32.gmra.mrb[0].mxu0 %v2238
    %v2306 = vpop.f32.mrb[0].mxu0
    %v2307 = vadd.f32 0.0, %v2306
    %v2308 = vpop.f32.mrb[0].mxu0
    %2309 = vdwg.mxu0
    %v2311 = vrot.slane %v2209, 6
    %2312 = vrot.lane.b32.xlu0 %v2311, 32
    %v2313 = vpop.permute.xlu0 %2312
    %v2314 = vsel %vm181, %v2313, 0
    %2316 = vmatprep.subr.mxu0 0.0
    %2317 = vmatpush1.msra.mxu0 %v60
    %2318 = vmatprep.subr.mxu0 0.0
    %2319 = vmatpush1.msra.mxu0 %v61
    %2320 = vmatprep.subr.mxu0 0.0
    %2321 = vmatpush1.msra.mxu0 %v62
    %2322 = vmatprep.subr.mxu0 0.0
    %2323 = vmatpush1.msra.mxu0 %v63
    %2324 = vmatprep.subr.mxu0 0.0
    %2325 = vmatpush1.msra.mxu0 0.0
    %2326 = vmatprep.subr.mxu0 0.0
    %2327 = vmatpush1.msra.mxu0 0.0
    %2328 = vmatprep.subr.mxu0 0.0
    %2329 = vmatpush1.msra.mxu0 0.0
    %2330 = vmatprep.subr.mxu0 0.0
    %2331 = vmatpush1.msra.mxu0 0.0
    %2332 = vmatprep.subr.mxu0 0.0
    %2333 = vmatpush1.msra.mxu0 0.0
    %2334 = vmatprep.subr.mxu0 0.0
    %2335 = vmatpush1.msra.mxu0 0.0
    %2336 = vmatprep.subr.mxu0 0.0
    %2337 = vmatpush1.msra.mxu0 0.0
    %2338 = vmatprep.subr.mxu0 0.0
    %2339 = vmatpush1.msra.mxu0 0.0
    %2340 = vmatprep.subr.mxu0 0.0
    %2341 = vmatpush1.msra.mxu0 0.0
    %2342 = vmatprep.subr.mxu0 0.0
    %2343 = vmatpush1.msra.mxu0 0.0
    %2344 = vmatprep.subr.mxu0 0.0
    %2345 = vmatpush1.msra.mxu0 0.0
    %2346 = vmatprep.subr.mxu0 0.0
    %2347 = vmatpush1.msra.mxu0 0.0
    %2348 = vmatprep.subr.mxu0 0.0
    %2349 = vmatpush1.msra.mxu0 0.0
    %2350 = vmatprep.subr.mxu0 0.0
    %2351 = vmatpush1.msra.mxu0 0.0
    %2352 = vmatprep.subr.mxu0 0.0
    %2353 = vmatpush1.msra.mxu0 0.0
    %2354 = vmatprep.subr.mxu0 0.0
    %2355 = vmatpush1.msra.mxu0 0.0
    %2356 = vmatprep.subr.mxu0 0.0
    %2357 = vmatpush1.msra.mxu0 0.0
    %2358 = vmatprep.subr.mxu0 0.0
    %2359 = vmatpush1.msra.mxu0 0.0
    %2360 = vmatprep.subr.mxu0 0.0
    %2361 = vmatpush1.msra.mxu0 0.0
    %2362 = vmatprep.subr.mxu0 0.0
    %2363 = vmatpush1.msra.mxu0 0.0
    %2364 = vmatprep.subr.mxu0 0.0
    %2365 = vmatpush1.msra.mxu0 0.0
    %2366 = vmatprep.subr.mxu0 0.0
    %2367 = vmatpush1.msra.mxu0 0.0
    %2368 = vmatprep.subr.mxu0 0.0
    %2369 = vmatpush1.msra.mxu0 0.0
    %2370 = vmatprep.subr.mxu0 0.0
    %2371 = vmatpush1.msra.mxu0 0.0
    %2372 = vmatprep.subr.mxu0 0.0
    %2373 = vmatpush1.msra.mxu0 0.0
    %2374 = vmatprep.subr.mxu0 0.0
    %2375 = vmatpush1.msra.mxu0 0.0
    %2376 = vmatprep.subr.mxu0 0.0
    %2377 = vmatpush1.msra.mxu0 0.0
    %2378 = vmatprep.subr.mxu0 0.0
    %2379 = vmatpush1.msra.mxu0 0.0
    %2380 = vmatprep.mubr.f32.mxu0 0.0
    %2381 = vmatmul.mubr.f32.gmra.mrb[0].mxu0 %v2314
    %v2382 = vpop.f32.mrb[0].mxu0
    %v2383 = vadd.f32 %v2307, %v2382
    %v2384 = vpop.f32.mrb[0].mxu0
    %2385 = vdwg.mxu0
    %v2386 = vadd.f32 %v2383, %v78
    %v2387 = vtanh.pop %v2386
    %v2388 = vxor.u32 %v2386, 2147483648
    %v2389 = vmul.f32 %v2388, 1.442695
    %v2390 = vpow.pop %v2389
    %v2391 = vadd.f32 %v2390, 1.0
    %v2392 = vrcp.pop %v2391
    %v2393 = vmul.f32 1.0, %v2392
    %v2394 = vsel %vm174, %v2387, %v2393
    %v2395 = vmul.f32 %v2394, %v2228
    %2397 = vrot.lane.b32.xlu0 %v2394, 64
    %v2398 = vpop.permute.xlu0 %2397
    %v2400 = vmul.f32 %v2394, %v2398
    %2402 = vrot.lane.b32.xlu0 %v2400, 32
    %v2403 = vpop.permute.xlu0 %2402
    %v2405 = vadd.f32 %v2395, %v2403
    %v2406 = vtanh.pop %v2405
    %2408 = vrot.lane.b32.xlu0 %v2406, 64
    %v2409 = vpop.permute.xlu0 %2408
    %v2411 = vmul.f32 %v2394, %v2409
    %v2413 = vrot.slane %v2411, 2
    %2414 = vrot.lane.b32.xlu0 %v2209, 32
    %v2415 = vpop.permute.xlu0 %2414
    %2416 = vrot.lane.b32.xlu0 %v2413, 32
    %v2417 = vpop.permute.xlu0 %2416
    %vm2420 = vcmask 261126
    %2421 = vst.msk [vmem:[#allocation4 - $0x6] sm:$0xc0] %vm2420, %v2415
    %2422 = vst.msk [vmem:[#allocation4 - $0x4] sm:$0xc0] %vm2420, %v2417
    %v2424 = vrot.slane %v2405, 2
    %2426 = vrot.lane.b32.xlu0 %v2203, 96
    %v2427 = vpop.permute.xlu0 %2426
    %2428 = vrot.lane.b32.xlu0 %v2424, 96
    %v2429 = vpop.permute.xlu0 %2428
    %2432 = vst.msk [vmem:[#allocation6 - $0x6] sm:$0xc0] %vm2420, %v2427
    %2433 = vst.msk [vmem:[#allocation6 - $0x4] sm:$0xc0] %vm2420, %v2429
    %v2434 = vcombine.high %v2209, %v2209
    %v2436 = vunpack.c.l.s4 1966171168
    %v2437 = vunpack.c.0.s8 %v2436
    %v2438 = vlaneseq
    %v2439 = vshrl.u32 %v2438, 7
    %v2440 = vsub.s32 %v2437, %v2439
    %v2441 = vrot.slane %v2434, %v2440
    %v2442 = vcombine.high %v2441, %v2441
    %v2444 = vunpack.c.l.s4 1966171168
    %v2445 = vunpack.c.0.s8 %v2444
    %v2446 = vlaneseq
    %v2447 = vshrl.u32 %v2446, 7
    %v2448 = vsub.s32 %v2445, %v2447
    %v2449 = vrot.slane %v2441, %v2448
    %v2451 = vunpack.c.l.s4 1966171168
    %v2452 = vunpack.c.0.s8 %v2451
    %v2453 = vlaneseq
    %v2454 = vshrl.u32 %v2453, 7
    %v2455 = vsub.s32 %v2452, %v2454
    %v2456 = vrot.slane %v2442, %v2455
    %v2457 = vcombine.high %v2449, %v2449
    %v2458 = vcombine.high %v2456, %v2456
    %v2462 = vunpack.c.l.s4 1966171168
    %v2463 = vunpack.c.0.s8 %v2462
    %v2464 = vlaneseq
    %v2465 = vshrl.u32 %v2464, 7
    %v2466 = vsub.s32 %v2463, %v2465
    %v2467 = vrot.slane %v2411, %v2466
    %v2468 = vcombine.high %v2467, %v2467
    %v2470 = vunpack.c.l.s4 1966171168
    %v2471 = vunpack.c.0.s8 %v2470
    %v2472 = vlaneseq
    %v2473 = vshrl.u32 %v2472, 7
    %v2474 = vsub.s32 %v2471, %v2473
    %v2475 = vrot.slane %v2467, %v2474
    %v2477 = vunpack.c.l.s4 1966171168
    %v2478 = vunpack.c.0.s8 %v2477
    %v2479 = vlaneseq
    %v2480 = vshrl.u32 %v2479, 7
    %v2481 = vsub.s32 %v2478, %v2480
    %v2482 = vrot.slane %v2468, %v2481
    %v2483 = vlaneseq
    %v2484 = vshrl.u32 %v2483, 7
    %v2485 = vsub.s32 0, %v2484
    %v2486 = vrot.slane %v2475, %v2485
    %v2487 = vlaneseq
    %v2488 = vshrl.u32 %v2487, 7
    %v2489 = vsub.s32 0, %v2488
    %v2490 = vrot.slane %v2482, %v2489
    %vm2493 = vcmask 1040384
    %v2494 = vsel %vm2493, %v2457, %v2486
    %v2495 = vsel %vm2493, %v2458, %v2490
    %v2496 = vld [vmem:[%s3] sm:$0xff]
    %v2497 = vld [vmem:[%s3 + $0x8] sm:$0xff]
    %v2498 = vld [vmem:[%s10] sm:$0xff]
    %v2499 = vld [vmem:[%s10 + $0x8] sm:$0xff]
    %v2500 = vld [vmem:[%s10 + $0x10] sm:$0xff]
    %v2501 = vld [vmem:[%s10 + $0x18] sm:$0xff]
    %v2504 = vcombine.low %v2494, %v2495
    %v2506 = vunpack.c.l.s4 1983009808
    %v2507 = vunpack.c.0.s8 %v2506
    %v2508 = vlaneseq
    %v2509 = vshrl.u32 %v2508, 7
    %v2510 = vsub.s32 %v2507, %v2509
    %v2511 = vrot.slane %v2504, %v2510
    %2512 = vrot.lane.b32.xlu0 %v2511, 32
    %v2513 = vpop.permute.xlu0 %2512
    %v2514 = vsel %vm181, %v2513, 0
    %2516 = vmatprep.subr.mxu0 0.0
    %2517 = vmatpush1.msra.mxu0 %v2498
    %2518 = vmatprep.subr.mxu0 0.0
    %2519 = vmatpush1.msra.mxu0 %v2499
    %2520 = vmatprep.subr.mxu0 0.0
    %2521 = vmatpush1.msra.mxu0 %v2500
    %2522 = vmatprep.subr.mxu0 0.0
    %2523 = vmatpush1.msra.mxu0 %v2501
    %2524 = vmatprep.subr.mxu0 0.0
    %2525 = vmatpush1.msra.mxu0 0.0
    %2526 = vmatprep.subr.mxu0 0.0
    %2527 = vmatpush1.msra.mxu0 0.0
    %2528 = vmatprep.subr.mxu0 0.0
    %2529 = vmatpush1.msra.mxu0 0.0
    %2530 = vmatprep.subr.mxu0 0.0
    %2531 = vmatpush1.msra.mxu0 0.0
    %2532 = vmatprep.subr.mxu0 0.0
    %2533 = vmatpush1.msra.mxu0 0.0
    %2534 = vmatprep.subr.mxu0 0.0
    %2535 = vmatpush1.msra.mxu0 0.0
    %2536 = vmatprep.subr.mxu0 0.0
    %2537 = vmatpush1.msra.mxu0 0.0
    %2538 = vmatprep.subr.mxu0 0.0
    %2539 = vmatpush1.msra.mxu0 0.0
    %2540 = vmatprep.subr.mxu0 0.0
    %2541 = vmatpush1.msra.mxu0 0.0
    %2542 = vmatprep.subr.mxu0 0.0
    %2543 = vmatpush1.msra.mxu0 0.0
    %2544 = vmatprep.subr.mxu0 0.0
    %2545 = vmatpush1.msra.mxu0 0.0
    %2546 = vmatprep.subr.mxu0 0.0
    %2547 = vmatpush1.msra.mxu0 0.0
    %2548 = vmatprep.subr.mxu0 0.0
    %2549 = vmatpush1.msra.mxu0 0.0
    %2550 = vmatprep.subr.mxu0 0.0
    %2551 = vmatpush1.msra.mxu0 0.0
    %2552 = vmatprep.subr.mxu0 0.0
    %2553 = vmatpush1.msra.mxu0 0.0
    %2554 = vmatprep.subr.mxu0 0.0
    %2555 = vmatpush1.msra.mxu0 0.0
    %2556 = vmatprep.subr.mxu0 0.0
    %2557 = vmatpush1.msra.mxu0 0.0
    %2558 = vmatprep.subr.mxu0 0.0
    %2559 = vmatpush1.msra.mxu0 0.0
    %2560 = vmatprep.subr.mxu0 0.0
    %2561 = vmatpush1.msra.mxu0 0.0
    %2562 = vmatprep.subr.mxu0 0.0
    %2563 = vmatpush1.msra.mxu0 0.0
    %2564 = vmatprep.subr.mxu0 0.0
    %2565 = vmatpush1.msra.mxu0 0.0
    %2566 = vmatprep.subr.mxu0 0.0
    %2567 = vmatpush1.msra.mxu0 0.0
    %2568 = vmatprep.subr.mxu0 0.0
    %2569 = vmatpush1.msra.mxu0 0.0
    %2570 = vmatprep.subr.mxu0 0.0
    %2571 = vmatpush1.msra.mxu0 0.0
    %2572 = vmatprep.subr.mxu0 0.0
    %2573 = vmatpush1.msra.mxu0 0.0
    %2574 = vmatprep.subr.mxu0 0.0
    %2575 = vmatpush1.msra.mxu0 0.0
    %2576 = vmatprep.subr.mxu0 0.0
    %2577 = vmatpush1.msra.mxu0 0.0
    %2578 = vmatprep.subr.mxu0 0.0
    %2579 = vmatpush1.msra.mxu0 0.0
    %2580 = vmatprep.mubr.f32.mxu0 0.0
    %2581 = vmatmul.mubr.f32.gmra.mrb[0].mxu0 %v2514
    %v2582 = vpop.f32.mrb[0].mxu0
    %v2583 = vadd.f32 0.0, %v2582
    %v2584 = vpop.f32.mrb[0].mxu0
    %2585 = vdwg.mxu0
    %v2588 = vunpack.c.l.s4 1983009808
    %v2589 = vunpack.c.0.s8 %v2588
    %v2590 = vlaneseq
    %v2591 = vshrl.u32 %v2590, 7
    %v2592 = vsub.s32 %v2589, %v2591
    %v2593 = vrot.slane %v2583, %v2592
    %v2594 = vcombine.high %v2593, %v2593
    %v2595 = vsel %vm181, %v2593, 0
    %v2598 = vsel %vm181, %v2496, 0
    %2600 = vmatprep.subr.mxu0 0.0
    %2601 = vmatpush1.xpose.msra.mxu0 %v2598
    %2602 = vmatprep.subr.mxu0 0.0
    %2603 = vmatpush1.xpose.msra.mxu0 0.0
    %2604 = vmatprep.subr.mxu0 0.0
    %2605 = vmatpush1.xpose.msra.mxu0 0.0
    %2606 = vmatprep.subr.mxu0 0.0
    %2607 = vmatpush1.xpose.msra.mxu0 0.0
    %2608 = vmatprep.subr.mxu0 0.0
    %2609 = vmatpush1.xpose.msra.mxu0 0.0
    %2610 = vmatprep.subr.mxu0 0.0
    %2611 = vmatpush1.xpose.msra.mxu0 0.0
    %2612 = vmatprep.subr.mxu0 0.0
    %2613 = vmatpush1.xpose.msra.mxu0 0.0
    %2614 = vmatprep.subr.mxu0 0.0
    %2615 = vmatpush1.xpose.msra.mxu0 0.0
    %2616 = vmatprep.subr.mxu0 0.0
    %2617 = vmatpush1.xpose.msra.mxu0 0.0
    %2618 = vmatprep.subr.mxu0 0.0
    %2619 = vmatpush1.xpose.msra.mxu0 0.0
    %2620 = vmatprep.subr.mxu0 0.0
    %2621 = vmatpush1.xpose.msra.mxu0 0.0
    %2622 = vmatprep.subr.mxu0 0.0
    %2623 = vmatpush1.xpose.msra.mxu0 0.0
    %2624 = vmatprep.subr.mxu0 0.0
    %2625 = vmatpush1.xpose.msra.mxu0 0.0
    %2626 = vmatprep.subr.mxu0 0.0
    %2627 = vmatpush1.xpose.msra.mxu0 0.0
    %2628 = vmatprep.subr.mxu0 0.0
    %2629 = vmatpush1.xpose.msra.mxu0 0.0
    %2630 = vmatprep.subr.mxu0 0.0
    %2631 = vmatpush1.xpose.msra.mxu0 0.0
    %2632 = vmatprep.subr.mxu0 0.0
    %2633 = vmatpush1.xpose.msra.mxu0 0.0
    %2634 = vmatprep.subr.mxu0 0.0
    %2635 = vmatpush1.xpose.msra.mxu0 0.0
    %2636 = vmatprep.subr.mxu0 0.0
    %2637 = vmatpush1.xpose.msra.mxu0 0.0
    %2638 = vmatprep.subr.mxu0 0.0
    %2639 = vmatpush1.xpose.msra.mxu0 0.0
    %2640 = vmatprep.subr.mxu0 0.0
    %2641 = vmatpush1.xpose.msra.mxu0 0.0
    %2642 = vmatprep.subr.mxu0 0.0
    %2643 = vmatpush1.xpose.msra.mxu0 0.0
    %2644 = vmatprep.subr.mxu0 0.0
    %2645 = vmatpush1.xpose.msra.mxu0 0.0
    %2646 = vmatprep.subr.mxu0 0.0
    %2647 = vmatpush1.xpose.msra.mxu0 0.0
    %2648 = vmatprep.subr.mxu0 0.0
    %2649 = vmatpush1.xpose.msra.mxu0 0.0
    %2650 = vmatprep.subr.mxu0 0.0
    %2651 = vmatpush1.xpose.msra.mxu0 0.0
    %2652 = vmatprep.subr.mxu0 0.0
    %2653 = vmatpush1.xpose.msra.mxu0 0.0
    %2654 = vmatprep.subr.mxu0 0.0
    %2655 = vmatpush1.xpose.msra.mxu0 0.0
    %2656 = vmatprep.subr.mxu0 0.0
    %2657 = vmatpush1.xpose.msra.mxu0 0.0
    %2658 = vmatprep.subr.mxu0 0.0
    %2659 = vmatpush1.xpose.msra.mxu0 0.0
    %2660 = vmatprep.subr.mxu0 0.0
    %2661 = vmatpush1.xpose.msra.mxu0 0.0
    %2662 = vmatprep.subr.mxu0 0.0
    %2663 = vmatpush1.xpose.msra.mxu0 0.0
    %2664 = vmatprep.mubr.f32.mxu0 0.0
    %2665 = vmatmul.mubr.f32.gmra.mrb[0].mxu0 %v2595
    %v2666 = vpop.f32.mrb[0].mxu0
    %v2667 = vadd.f32 0.0, %v2666
    %v2668 = vpop.f32.mrb[0].mxu0
    %2669 = vdwg.mxu0
    %v2670 = vsel %vm181, %v2594, 0
    %v2673 = vsel %vm181, %v2497, 0
    %2675 = vmatprep.subr.mxu0 0.0
    %2676 = vmatpush1.xpose.msra.mxu0 %v2673
    %2677 = vmatprep.subr.mxu0 0.0
    %2678 = vmatpush1.xpose.msra.mxu0 0.0
    %2679 = vmatprep.subr.mxu0 0.0
    %2680 = vmatpush1.xpose.msra.mxu0 0.0
    %2681 = vmatprep.subr.mxu0 0.0
    %2682 = vmatpush1.xpose.msra.mxu0 0.0
    %2683 = vmatprep.subr.mxu0 0.0
    %2684 = vmatpush1.xpose.msra.mxu0 0.0
    %2685 = vmatprep.subr.mxu0 0.0
    %2686 = vmatpush1.xpose.msra.mxu0 0.0
    %2687 = vmatprep.subr.mxu0 0.0
    %2688 = vmatpush1.xpose.msra.mxu0 0.0
    %2689 = vmatprep.subr.mxu0 0.0
    %2690 = vmatpush1.xpose.msra.mxu0 0.0
    %2691 = vmatprep.subr.mxu0 0.0
    %2692 = vmatpush1.xpose.msra.mxu0 0.0
    %2693 = vmatprep.subr.mxu0 0.0
    %2694 = vmatpush1.xpose.msra.mxu0 0.0
    %2695 = vmatprep.subr.mxu0 0.0
    %2696 = vmatpush1.xpose.msra.mxu0 0.0
    %2697 = vmatprep.subr.mxu0 0.0
    %2698 = vmatpush1.xpose.msra.mxu0 0.0
    %2699 = vmatprep.subr.mxu0 0.0
    %2700 = vmatpush1.xpose.msra.mxu0 0.0
    %2701 = vmatprep.subr.mxu0 0.0
    %2702 = vmatpush1.xpose.msra.mxu0 0.0
    %2703 = vmatprep.subr.mxu0 0.0
    %2704 = vmatpush1.xpose.msra.mxu0 0.0
    %2705 = vmatprep.subr.mxu0 0.0
    %2706 = vmatpush1.xpose.msra.mxu0 0.0
    %2707 = vmatprep.subr.mxu0 0.0
    %2708 = vmatpush1.xpose.msra.mxu0 0.0
    %2709 = vmatprep.subr.mxu0 0.0
    %2710 = vmatpush1.xpose.msra.mxu0 0.0
    %2711 = vmatprep.subr.mxu0 0.0
    %2712 = vmatpush1.xpose.msra.mxu0 0.0
    %2713 = vmatprep.subr.mxu0 0.0
    %2714 = vmatpush1.xpose.msra.mxu0 0.0
    %2715 = vmatprep.subr.mxu0 0.0
    %2716 = vmatpush1.xpose.msra.mxu0 0.0
    %2717 = vmatprep.subr.mxu0 0.0
    %2718 = vmatpush1.xpose.msra.mxu0 0.0
    %2719 = vmatprep.subr.mxu0 0.0
    %2720 = vmatpush1.xpose.msra.mxu0 0.0
    %2721 = vmatprep.subr.mxu0 0.0
    %2722 = vmatpush1.xpose.msra.mxu0 0.0
    %2723 = vmatprep.subr.mxu0 0.0
    %2724 = vmatpush1.xpose.msra.mxu0 0.0
    %2725 = vmatprep.subr.mxu0 0.0
    %2726 = vmatpush1.xpose.msra.mxu0 0.0
    %2727 = vmatprep.subr.mxu0 0.0
    %2728 = vmatpush1.xpose.msra.mxu0 0.0
    %2729 = vmatprep.subr.mxu0 0.0
    %2730 = vmatpush1.xpose.msra.mxu0 0.0
    %2731 = vmatprep.subr.mxu0 0.0
    %2732 = vmatpush1.xpose.msra.mxu0 0.0
    %2733 = vmatprep.subr.mxu0 0.0
    %2734 = vmatpush1.xpose.msra.mxu0 0.0
    %2735 = vmatprep.subr.mxu0 0.0
    %2736 = vmatpush1.xpose.msra.mxu0 0.0
    %2737 = vmatprep.subr.mxu0 0.0
    %2738 = vmatpush1.xpose.msra.mxu0 0.0
    %2739 = vmatprep.mubr.f32.mxu0 0.0
    %2740 = vmatmul.mubr.f32.gmra.mrb[0].mxu0 %v2670
    %v2741 = vpop.f32.mrb[0].mxu0
    %v2742 = vadd.f32 0.0, %v2741
    %v2743 = vpop.f32.mrb[0].mxu0
    %2744 = vdwg.mxu0
    %vm2745 = vcmask 58368
    %v2746 = vsel %vm2745, %v2667, -inf
    %2747 = vmax.xlane.f32.xlu0 %v2746
    %v2748 = vpop.xlane.xlu0 %2747
    %v2749 = vsel %vm2745, %v2742, -inf
    %2750 = vmax.xlane.f32.xlu0 %v2749
    %v2751 = vpop.xlane.xlu0 %2750
    %v2752 = vsub.f32 %v2667, %v2748
    %v2753 = vsub.f32 %v2742, %v2751
    %v2754 = vmul.f32 %v2752, 1.442695
    %v2755 = vpow.pop %v2754
    %v2756 = vmul.f32 %v2753, 1.442695
    %v2757 = vpow.pop %v2756
    %v2758 = vsel %vm2745, %v2755, 0.0
    %2759 = vadd.xlane.f32.xlu0 %v2758
    %v2760 = vpop.xlane.xlu0 %2759
    %v2761 = vsel %vm2745, %v2757, 0.0
    %2762 = vadd.xlane.f32.xlu0 %v2761
    %v2763 = vpop.xlane.xlu0 %2762
    %v2764 = vrcp.pop %v2760
    %v2765 = vrcp.pop %v2763
    %v2766 = vmul.f32 %v2755, %v2764
    %v2767 = vmul.f32 %v2757, %v2765
    %vm2768 = vcmask 64512
    %v2770 = vsel %vm2768, %v2766, 0
    %2772 = vmatprep.subr.mxu0 0.0
    %2773 = vmatpush1.msra.mxu0 %v2496
    %2774 = vmatprep.subr.mxu0 0.0
    %2775 = vmatpush1.msra.mxu0 0.0
    %2776 = vmatprep.subr.mxu0 0.0
    %2777 = vmatpush1.msra.mxu0 0.0
    %2778 = vmatprep.subr.mxu0 0.0
    %2779 = vmatpush1.msra.mxu0 0.0
    %2780 = vmatprep.subr.mxu0 0.0
    %2781 = vmatpush1.msra.mxu0 0.0
    %2782 = vmatprep.subr.mxu0 0.0
    %2783 = vmatpush1.msra.mxu0 0.0
    %2784 = vmatprep.subr.mxu0 0.0
    %2785 = vmatpush1.msra.mxu0 0.0
    %2786 = vmatprep.subr.mxu0 0.0
    %2787 = vmatpush1.msra.mxu0 0.0
    %2788 = vmatprep.subr.mxu0 0.0
    %2789 = vmatpush1.msra.mxu0 0.0
    %2790 = vmatprep.subr.mxu0 0.0
    %2791 = vmatpush1.msra.mxu0 0.0
    %2792 = vmatprep.subr.mxu0 0.0
    %2793 = vmatpush1.msra.mxu0 0.0
    %2794 = vmatprep.subr.mxu0 0.0
    %2795 = vmatpush1.msra.mxu0 0.0
    %2796 = vmatprep.subr.mxu0 0.0
    %2797 = vmatpush1.msra.mxu0 0.0
    %2798 = vmatprep.subr.mxu0 0.0
    %2799 = vmatpush1.msra.mxu0 0.0
    %2800 = vmatprep.subr.mxu0 0.0
    %2801 = vmatpush1.msra.mxu0 0.0
    %2802 = vmatprep.subr.mxu0 0.0
    %2803 = vmatpush1.msra.mxu0 0.0
    %2804 = vmatprep.subr.mxu0 0.0
    %2805 = vmatpush1.msra.mxu0 0.0
    %2806 = vmatprep.subr.mxu0 0.0
    %2807 = vmatpush1.msra.mxu0 0.0
    %2808 = vmatprep.subr.mxu0 0.0
    %2809 = vmatpush1.msra.mxu0 0.0
    %2810 = vmatprep.subr.mxu0 0.0
    %2811 = vmatpush1.msra.mxu0 0.0
    %2812 = vmatprep.subr.mxu0 0.0
    %2813 = vmatpush1.msra.mxu0 0.0
    %2814 = vmatprep.subr.mxu0 0.0
    %2815 = vmatpush1.msra.mxu0 0.0
    %2816 = vmatprep.subr.mxu0 0.0
    %2817 = vmatpush1.msra.mxu0 0.0
    %2818 = vmatprep.subr.mxu0 0.0
    %2819 = vmatpush1.msra.mxu0 0.0
    %2820 = vmatprep.subr.mxu0 0.0
    %2821 = vmatpush1.msra.mxu0 0.0
    %2822 = vmatprep.subr.mxu0 0.0
    %2823 = vmatpush1.msra.mxu0 0.0
    %2824 = vmatprep.subr.mxu0 0.0
    %2825 = vmatpush1.msra.mxu0 0.0
    %2826 = vmatprep.subr.mxu0 0.0
    %2827 = vmatpush1.msra.mxu0 0.0
    %2828 = vmatprep.subr.mxu0 0.0
    %2829 = vmatpush1.msra.mxu0 0.0
    %2830 = vmatprep.subr.mxu0 0.0
    %2831 = vmatpush1.msra.mxu0 0.0
    %2832 = vmatprep.subr.mxu0 0.0
    %2833 = vmatpush1.msra.mxu0 0.0
    %2834 = vmatprep.subr.mxu0 0.0
    %2835 = vmatpush1.msra.mxu0 0.0
    %2836 = vmatprep.mubr.f32.mxu0 0.0
    %2837 = vmatmul.mubr.f32.gmra.mrb[0].mxu0 %v2770
    %v2838 = vpop.f32.mrb[0].mxu0
    %v2839 = vadd.f32 0.0, %v2838
    %v2840 = vpop.f32.mrb[0].mxu0
    %2841 = vdwg.mxu0
    %v2843 = vsel %vm2768, %v2767, 0
    %2845 = vmatprep.subr.mxu0 0.0
    %2846 = vmatpush1.msra.mxu0 %v2497
    %2847 = vmatprep.subr.mxu0 0.0
    %2848 = vmatpush1.msra.mxu0 0.0
    %2849 = vmatprep.subr.mxu0 0.0
    %2850 = vmatpush1.msra.mxu0 0.0
    %2851 = vmatprep.subr.mxu0 0.0
    %2852 = vmatpush1.msra.mxu0 0.0
    %2853 = vmatprep.subr.mxu0 0.0
    %2854 = vmatpush1.msra.mxu0 0.0
    %2855 = vmatprep.subr.mxu0 0.0
    %2856 = vmatpush1.msra.mxu0 0.0
    %2857 = vmatprep.subr.mxu0 0.0
    %2858 = vmatpush1.msra.mxu0 0.0
    %2859 = vmatprep.subr.mxu0 0.0
    %2860 = vmatpush1.msra.mxu0 0.0
    %2861 = vmatprep.subr.mxu0 0.0
    %2862 = vmatpush1.msra.mxu0 0.0
    %2863 = vmatprep.subr.mxu0 0.0
    %2864 = vmatpush1.msra.mxu0 0.0
    %2865 = vmatprep.subr.mxu0 0.0
    %2866 = vmatpush1.msra.mxu0 0.0
    %2867 = vmatprep.subr.mxu0 0.0
    %2868 = vmatpush1.msra.mxu0 0.0
    %2869 = vmatprep.subr.mxu0 0.0
    %2870 = vmatpush1.msra.mxu0 0.0
    %2871 = vmatprep.subr.mxu0 0.0
    %2872 = vmatpush1.msra.mxu0 0.0
    %2873 = vmatprep.subr.mxu0 0.0
    %2874 = vmatpush1.msra.mxu0 0.0
    %2875 = vmatprep.subr.mxu0 0.0
    %2876 = vmatpush1.msra.mxu0 0.0
    %2877 = vmatprep.subr.mxu0 0.0
    %2878 = vmatpush1.msra.mxu0 0.0
    %2879 = vmatprep.subr.mxu0 0.0
    %2880 = vmatpush1.msra.mxu0 0.0
    %2881 = vmatprep.subr.mxu0 0.0
    %2882 = vmatpush1.msra.mxu0 0.0
    %2883 = vmatprep.subr.mxu0 0.0
    %2884 = vmatpush1.msra.mxu0 0.0
    %2885 = vmatprep.subr.mxu0 0.0
    %2886 = vmatpush1.msra.mxu0 0.0
    %2887 = vmatprep.subr.mxu0 0.0
    %2888 = vmatpush1.msra.mxu0 0.0
    %2889 = vmatprep.subr.mxu0 0.0
    %2890 = vmatpush1.msra.mxu0 0.0
    %2891 = vmatprep.subr.mxu0 0.0
    %2892 = vmatpush1.msra.mxu0 0.0
    %2893 = vmatprep.subr.mxu0 0.0
    %2894 = vmatpush1.msra.mxu0 0.0
    %2895 = vmatprep.subr.mxu0 0.0
    %2896 = vmatpush1.msra.mxu0 0.0
    %2897 = vmatprep.subr.mxu0 0.0
    %2898 = vmatpush1.msra.mxu0 0.0
    %2899 = vmatprep.subr.mxu0 0.0
    %2900 = vmatpush1.msra.mxu0 0.0
    %2901 = vmatprep.subr.mxu0 0.0
    %2902 = vmatpush1.msra.mxu0 0.0
    %2903 = vmatprep.subr.mxu0 0.0
    %2904 = vmatpush1.msra.mxu0 0.0
    %2905 = vmatprep.subr.mxu0 0.0
    %2906 = vmatpush1.msra.mxu0 0.0
    %2907 = vmatprep.subr.mxu0 0.0
    %2908 = vmatpush1.msra.mxu0 0.0
    %2909 = vmatprep.mubr.f32.mxu0 0.0
    %2910 = vmatmul.mubr.f32.gmra.mrb[0].mxu0 %v2843
    %v2911 = vpop.f32.mrb[0].mxu0
    %v2912 = vadd.f32 0.0, %v2911
    %v2913 = vpop.f32.mrb[0].mxu0
    %2914 = vdwg.mxu0
    %v2915 = vld [vmem:[%s11] sm:$0xff]
    %v2916 = vld [vmem:[%s11 + $0x8] sm:$0xff]
    %v2917 = vld [vmem:[%s11 + $0x10] sm:$0xff]
    %v2918 = vld [vmem:[%s11 + $0x18] sm:$0xff]
    %v2919 = vld [vmem:[%s12] sm:$0xff]
    %v2920 = vld [vmem:[%s12 + $0x8] sm:$0xff]
    %v2921 = vld [vmem:[%s12 + $0x10] sm:$0xff]
    %v2922 = vld [vmem:[%s12 + $0x18] sm:$0xff]
    %2923 = vmatprep.subr.mxu0 0.0
    %2924 = vmatpush1.msra.mxu0 %v2919
    %2925 = vmatprep.subr.mxu0 0.0
    %2926 = vmatpush1.msra.mxu0 %v2920
    %2927 = vmatprep.subr.mxu0 0.0
    %2928 = vmatpush1.msra.mxu0 %v2921
    %2929 = vmatprep.subr.mxu0 0.0
    %2930 = vmatpush1.msra.mxu0 %v2922
    %2931 = vmatprep.subr.mxu0 0.0
    %2932 = vmatpush1.msra.mxu0 0.0
    %2933 = vmatprep.subr.mxu0 0.0
    %2934 = vmatpush1.msra.mxu0 0.0
    %2935 = vmatprep.subr.mxu0 0.0
    %2936 = vmatpush1.msra.mxu0 0.0
    %2937 = vmatprep.subr.mxu0 0.0
    %2938 = vmatpush1.msra.mxu0 0.0
    %2939 = vmatprep.subr.mxu0 0.0
    %2940 = vmatpush1.msra.mxu0 0.0
    %2941 = vmatprep.subr.mxu0 0.0
    %2942 = vmatpush1.msra.mxu0 0.0
    %2943 = vmatprep.subr.mxu0 0.0
    %2944 = vmatpush1.msra.mxu0 0.0
    %2945 = vmatprep.subr.mxu0 0.0
    %2946 = vmatpush1.msra.mxu0 0.0
    %2947 = vmatprep.subr.mxu0 0.0
    %2948 = vmatpush1.msra.mxu0 0.0
    %2949 = vmatprep.subr.mxu0 0.0
    %2950 = vmatpush1.msra.mxu0 0.0
    %2951 = vmatprep.subr.mxu0 0.0
    %2952 = vmatpush1.msra.mxu0 0.0
    %2953 = vmatprep.subr.mxu0 0.0
    %2954 = vmatpush1.msra.mxu0 0.0
    %2955 = vmatprep.subr.mxu0 0.0
    %2956 = vmatpush1.msra.mxu0 0.0
    %2957 = vmatprep.subr.mxu0 0.0
    %2958 = vmatpush1.msra.mxu0 0.0
    %2959 = vmatprep.subr.mxu0 0.0
    %2960 = vmatpush1.msra.mxu0 0.0
    %2961 = vmatprep.subr.mxu0 0.0
    %2962 = vmatpush1.msra.mxu0 0.0
    %2963 = vmatprep.subr.mxu0 0.0
    %2964 = vmatpush1.msra.mxu0 0.0
    %2965 = vmatprep.subr.mxu0 0.0
    %2966 = vmatpush1.msra.mxu0 0.0
    %2967 = vmatprep.subr.mxu0 0.0
    %2968 = vmatpush1.msra.mxu0 0.0
    %2969 = vmatprep.subr.mxu0 0.0
    %2970 = vmatpush1.msra.mxu0 0.0
    %2971 = vmatprep.subr.mxu0 0.0
    %2972 = vmatpush1.msra.mxu0 0.0
    %2973 = vmatprep.subr.mxu0 0.0
    %2974 = vmatpush1.msra.mxu0 0.0
    %2975 = vmatprep.subr.mxu0 0.0
    %2976 = vmatpush1.msra.mxu0 0.0
    %2977 = vmatprep.subr.mxu0 0.0
    %2978 = vmatpush1.msra.mxu0 0.0
    %2979 = vmatprep.subr.mxu0 0.0
    %2980 = vmatpush1.msra.mxu0 0.0
    %2981 = vmatprep.subr.mxu0 0.0
    %2982 = vmatpush1.msra.mxu0 0.0
    %2983 = vmatprep.subr.mxu0 0.0
    %2984 = vmatpush1.msra.mxu0 0.0
    %2985 = vmatprep.subr.mxu0 0.0
    %2986 = vmatpush1.msra.mxu0 0.0
    %2987 = vmatprep.mubr.f32.mxu0 0.0
    %2988 = vmatmul.mubr.f32.gmra.mrb[0].mxu0 %v2514
    %v2989 = vpop.f32.mrb[0].mxu0
    %v2990 = vadd.f32 0.0, %v2989
    %v2991 = vpop.f32.mrb[0].mxu0
    %2992 = vdwg.mxu0
    %v2995 = vcombine.low %v2839, %v2912
    %v2997 = vunpack.c.l.s4 1983009808
    %v2998 = vunpack.c.0.s8 %v2997
    %v2999 = vlaneseq
    %v3000 = vshrl.u32 %v2999, 7
    %v3001 = vsub.s32 %v2998, %v3000
    %v3002 = vrot.slane %v2995, %v3001
    %v3003 = vsel %vm181, %v3002, 0
    %3005 = vmatprep.subr.mxu0 0.0
    %3006 = vmatpush1.msra.mxu0 %v2915
    %3007 = vmatprep.subr.mxu0 0.0
    %3008 = vmatpush1.msra.mxu0 %v2916
    %3009 = vmatprep.subr.mxu0 0.0
    %3010 = vmatpush1.msra.mxu0 %v2917
    %3011 = vmatprep.subr.mxu0 0.0
    %3012 = vmatpush1.msra.mxu0 %v2918
    %3013 = vmatprep.subr.mxu0 0.0
    %3014 = vmatpush1.msra.mxu0 0.0
    %3015 = vmatprep.subr.mxu0 0.0
    %3016 = vmatpush1.msra.mxu0 0.0
    %3017 = vmatprep.subr.mxu0 0.0
    %3018 = vmatpush1.msra.mxu0 0.0
    %3019 = vmatprep.subr.mxu0 0.0
    %3020 = vmatpush1.msra.mxu0 0.0
    %3021 = vmatprep.subr.mxu0 0.0
    %3022 = vmatpush1.msra.mxu0 0.0
    %3023 = vmatprep.subr.mxu0 0.0
    %3024 = vmatpush1.msra.mxu0 0.0
    %3025 = vmatprep.subr.mxu0 0.0
    %3026 = vmatpush1.msra.mxu0 0.0
    %3027 = vmatprep.subr.mxu0 0.0
    %3028 = vmatpush1.msra.mxu0 0.0
    %3029 = vmatprep.subr.mxu0 0.0
    %3030 = vmatpush1.msra.mxu0 0.0
    %3031 = vmatprep.subr.mxu0 0.0
    %3032 = vmatpush1.msra.mxu0 0.0
    %3033 = vmatprep.subr.mxu0 0.0
    %3034 = vmatpush1.msra.mxu0 0.0
    %3035 = vmatprep.subr.mxu0 0.0
    %3036 = vmatpush1.msra.mxu0 0.0
    %3037 = vmatprep.subr.mxu0 0.0
    %3038 = vmatpush1.msra.mxu0 0.0
    %3039 = vmatprep.subr.mxu0 0.0
    %3040 = vmatpush1.msra.mxu0 0.0
    %3041 = vmatprep.subr.mxu0 0.0
    %3042 = vmatpush1.msra.mxu0 0.0
    %3043 = vmatprep.subr.mxu0 0.0
    %3044 = vmatpush1.msra.mxu0 0.0
    %3045 = vmatprep.subr.mxu0 0.0
    %3046 = vmatpush1.msra.mxu0 0.0
    %3047 = vmatprep.subr.mxu0 0.0
    %3048 = vmatpush1.msra.mxu0 0.0
    %3049 = vmatprep.subr.mxu0 0.0
    %3050 = vmatpush1.msra.mxu0 0.0
    %3051 = vmatprep.subr.mxu0 0.0
    %3052 = vmatpush1.msra.mxu0 0.0
    %3053 = vmatprep.subr.mxu0 0.0
    %3054 = vmatpush1.msra.mxu0 0.0
    %3055 = vmatprep.subr.mxu0 0.0
    %3056 = vmatpush1.msra.mxu0 0.0
    %3057 = vmatprep.subr.mxu0 0.0
    %3058 = vmatpush1.msra.mxu0 0.0
    %3059 = vmatprep.subr.mxu0 0.0
    %3060 = vmatpush1.msra.mxu0 0.0
    %3061 = vmatprep.subr.mxu0 0.0
    %3062 = vmatpush1.msra.mxu0 0.0
    %3063 = vmatprep.subr.mxu0 0.0
    %3064 = vmatpush1.msra.mxu0 0.0
    %3065 = vmatprep.subr.mxu0 0.0
    %3066 = vmatpush1.msra.mxu0 0.0
    %3067 = vmatprep.subr.mxu0 0.0
    %3068 = vmatpush1.msra.mxu0 0.0
    %3069 = vmatprep.mubr.f32.mxu0 0.0
    %3070 = vmatmul.mubr.f32.gmra.mrb[0].mxu0 %v3003
    %v3071 = vpop.f32.mrb[0].mxu0
    %v3072 = vadd.f32 %v2990, %v3071
    %v3073 = vpop.f32.mrb[0].mxu0
    %3074 = vdwg.mxu0
    %v3075 = vld [vmem:[%s13] sm:$0x1]
    %v3077 = vlaneseq
    %v3078 = vshrl.u32 %v3077, 7
    %v3079 = vsub.s32 0, %v3078
    %v3080 = vrot.slane %v3075, %v3079
    %v3082 = vadd.f32 %v3072, %v3080
    %v3083 = vtanh.pop %v3082
    %v3084 = vld [vmem:[%s14] sm:$0xff]
    %v3085 = vld [vmem:[%s14 + $0x8] sm:$0xff]
    %v3086 = vld [vmem:[%s14 + $0x10] sm:$0xff]
    %v3087 = vld [vmem:[%s14 + $0x18] sm:$0xff]
    %v3088 = vld [vmem:[%s15] sm:$0x1]
    %v3090 = vlaneseq
    %v3091 = vshrl.u32 %v3090, 7
    %v3092 = vsub.s32 0, %v3091
    %v3093 = vrot.slane %v3088, %v3092
    %v3096 = vsel %vm181, %v3083, 0
    %3098 = vmatprep.subr.mxu0 0.0
    %3099 = vmatpush1.msra.mxu0 %v3084
    %3100 = vmatprep.subr.mxu0 0.0
    %3101 = vmatpush1.msra.mxu0 %v3085
    %3102 = vmatprep.subr.mxu0 0.0
    %3103 = vmatpush1.msra.mxu0 %v3086
    %3104 = vmatprep.subr.mxu0 0.0
    %3105 = vmatpush1.msra.mxu0 %v3087
    %3106 = vmatprep.subr.mxu0 0.0
    %3107 = vmatpush1.msra.mxu0 0.0
    %3108 = vmatprep.subr.mxu0 0.0
    %3109 = vmatpush1.msra.mxu0 0.0
    %3110 = vmatprep.subr.mxu0 0.0
    %3111 = vmatpush1.msra.mxu0 0.0
    %3112 = vmatprep.subr.mxu0 0.0
    %3113 = vmatpush1.msra.mxu0 0.0
    %3114 = vmatprep.subr.mxu0 0.0
    %3115 = vmatpush1.msra.mxu0 0.0
    %3116 = vmatprep.subr.mxu0 0.0
    %3117 = vmatpush1.msra.mxu0 0.0
    %3118 = vmatprep.subr.mxu0 0.0
    %3119 = vmatpush1.msra.mxu0 0.0
    %3120 = vmatprep.subr.mxu0 0.0
    %3121 = vmatpush1.msra.mxu0 0.0
    %3122 = vmatprep.subr.mxu0 0.0
    %3123 = vmatpush1.msra.mxu0 0.0
    %3124 = vmatprep.subr.mxu0 0.0
    %3125 = vmatpush1.msra.mxu0 0.0
    %3126 = vmatprep.subr.mxu0 0.0
    %3127 = vmatpush1.msra.mxu0 0.0
    %3128 = vmatprep.subr.mxu0 0.0
    %3129 = vmatpush1.msra.mxu0 0.0
    %3130 = vmatprep.subr.mxu0 0.0
    %3131 = vmatpush1.msra.mxu0 0.0
    %3132 = vmatprep.subr.mxu0 0.0
    %3133 = vmatpush1.msra.mxu0 0.0
    %3134 = vmatprep.subr.mxu0 0.0
    %3135 = vmatpush1.msra.mxu0 0.0
    %3136 = vmatprep.subr.mxu0 0.0
    %3137 = vmatpush1.msra.mxu0 0.0
    %3138 = vmatprep.subr.mxu0 0.0
    %3139 = vmatpush1.msra.mxu0 0.0
    %3140 = vmatprep.subr.mxu0 0.0
    %3141 = vmatpush1.msra.mxu0 0.0
    %3142 = vmatprep.subr.mxu0 0.0
    %3143 = vmatpush1.msra.mxu0 0.0
    %3144 = vmatprep.subr.mxu0 0.0
    %3145 = vmatpush1.msra.mxu0 0.0
    %3146 = vmatprep.subr.mxu0 0.0
    %3147 = vmatpush1.msra.mxu0 0.0
    %3148 = vmatprep.subr.mxu0 0.0
    %3149 = vmatpush1.msra.mxu0 0.0
    %3150 = vmatprep.subr.mxu0 0.0
    %3151 = vmatpush1.msra.mxu0 0.0
    %3152 = vmatprep.subr.mxu0 0.0
    %3153 = vmatpush1.msra.mxu0 0.0
    %3154 = vmatprep.subr.mxu0 0.0
    %3155 = vmatpush1.msra.mxu0 0.0
    %3156 = vmatprep.subr.mxu0 0.0
    %3157 = vmatpush1.msra.mxu0 0.0
    %3158 = vmatprep.subr.mxu0 0.0
    %3159 = vmatpush1.msra.mxu0 0.0
    %3160 = vmatprep.subr.mxu0 0.0
    %3161 = vmatpush1.msra.mxu0 0.0
    %3162 = vmatprep.mubr.f32.mxu0 0.0
    %3163 = vmatmul.mubr.f32.gmra.mrb[0].mxu0 %v3096
    %v3164 = vpop.f32.mrb[0].mxu0
    %v3165 = vadd.f32 %v3093, %v3164
    %v3166 = vpop.f32.mrb[0].mxu0
    %3167 = vdwg.mxu0
    %v3170 = vunpack.c.l.s4 1983009808
    %v3171 = vunpack.c.0.s8 %v3170
    %v3172 = vlaneseq
    %v3173 = vshrl.u32 %v3172, 7
    %v3174 = vsub.s32 %v3171, %v3173
    %v3175 = vrot.slane %v3165, %v3174
    %v3176 = vcombine.high %v3175, %v3175
    %vm3179 = vcmask 123904
    %3180 = vst.msk [vmem:[#allocation2] sm:$0x3] %vm3179, %v3175
    %3181 = vst.msk [vmem:[#allocation2 + $0x2] sm:$0x3] %vm3179, %v3176
    // Predicated region
    $region66: #{decoder_forward.1} parent=1 // pred_check
      _
    $region67: #{decoder_forward.1} parent=1 // pred_check_branch
      %3183 = sbr.rel (0) target = $region69
    $region68: #{decoder_forward.1} parent=1 // pred_region
      %s3185 = ssub.s32 64, 64
      %3186 = vsyncadd [#allocation3], %s3185
      %s3187 = sshll.u32 [#allocation2], 4
      %s3188 = int_to_ptr.vmem [resolvable:$true] %s3187
      %3193 = dma.vmem_to_hbm [thread:$0]  %s3188, 64, %s16, [#allocation3], 32, 32, 2
    $region69: #{decoder_forward.1} parent=1 // pred_fallthru
      _
    // Predicated region
    $region70: #{decoder_forward.1} parent=1 // pred_check
      _
    $region71: #{decoder_forward.1} parent=1 // pred_check_branch
      %3195 = sbr.rel (0) target = $region73
    $region72: #{decoder_forward.1} parent=1 // pred_region
      %s3197 = ssub.s32 64, 64
      %3198 = vsyncadd [#allocation5], %s3197
      %s3199 = sshll.u32 [#allocation4], 4
      %s3200 = int_to_ptr.vmem [resolvable:$true] %s3199
      %3205 = dma.vmem_to_hbm [thread:$0]  %s3200, 64, %s17, [#allocation5], 32, 32, 2
    $region73: #{decoder_forward.1} parent=1 // pred_fallthru
      _
    // Predicated region
    $region74: #{decoder_forward.1} parent=1 // pred_check
      _
    $region75: #{decoder_forward.1} parent=1 // pred_check_branch
      %3207 = sbr.rel (0) target = $region77
    $region76: #{decoder_forward.1} parent=1 // pred_region
      %s3209 = ssub.s32 64, 64
      %3210 = vsyncadd [#allocation5], %s3209
      %s3211 = sshll.u32 [#allocation6], 4
      %s3212 = int_to_ptr.vmem [resolvable:$true] %s3211
      %3217 = dma.vmem_to_hbm [thread:$0]  %s3212, 64, %s18, [#allocation5], 32, 32, 2
    $region77: #{decoder_forward.1} parent=1 // pred_fallthru
      _
    // Predicated region
    $region78: #{decoder_forward.1} parent=1 // pred_check
      _
    $region79: #{decoder_forward.1} parent=1 // pred_check_branch
      %3219 = sbr.rel (0) target = $region81
    $region80: #{decoder_forward.1} parent=1 // pred_region
      %3220 = dma.done [#allocation3], 64
    $region81: #{decoder_forward.1} parent=1 // pred_fallthru
      _
    // Predicated region
    $region82: #{decoder_forward.1} parent=1 // pred_check
      _
    $region83: #{decoder_forward.1} parent=1 // pred_check_branch
      %3222 = sbr.rel (0) target = $region85
    $region84: #{decoder_forward.1} parent=1 // pred_region
      %3223 = dma.done [#allocation5], 64
    $region85: #{decoder_forward.1} parent=1 // pred_fallthru
      _
    // Predicated region
    $region86: #{decoder_forward.1} parent=1 // pred_check
      _
    $region87: #{decoder_forward.1} parent=1 // pred_check_branch
      %3225 = sbr.rel (0) target = $region89
    $region88: #{decoder_forward.1} parent=1 // pred_region
      %3226 = dma.done [#allocation5], 64
    $region89: #{decoder_forward.1} parent=1 // pred_fallthru
      _
    %3227 = vsyncpa [#allocation3], 1
    %3228 = vsyncpa [#allocation5], 1

</llo_original>
